<compile_context>
chip_gen: v7x
topology: tpu7x:2x2x1
jax: 0.10.0
libtpu: 0.0.40
codegen_flags: <defaults>
</compile_context>

<pallas_src>
import jax
import jax.numpy as jnp
from jax.experimental import pallas as pl
from jax.experimental.pallas import tpu as pltpu


# -----------------------------------------------------------------------------
# Fused kernel: all LSTM layers (wavefront) + attention softmax + fc.
# -----------------------------------------------------------------------------
def _make_fused_kernel(num_layers, T, Bp, H):
    """Build the fused kernel body; all shapes / loop bounds are static."""
    L = num_layers

    def kernel(*refs):
        x_ref = refs[0]                                   # (T*Bp, D0), t-major rows
        layer_refs = refs[1:1 + 3 * L]                    # (wih, whh, b) per layer
        n = 1 + 3 * L
        w_att_ref = refs[n]                               # (T*H, T) block-diag att weight
        b_att_ref = refs[n + 1]                           # (1,) SMEM scalar
        w_fc_ref = refs[n + 2]                            # (H, O)
        b_fc_ref = refs[n + 3]                            # (1, O)
        y_ref = refs[n + 4]                               # (Bp, O) output

        wih = [layer_refs[3 * l][...] for l in range(L)]       # (D_l, 4H)
        whh = [layer_refs[3 * l + 1][...] for l in range(L)]   # (H, 4H)
        bias = [layer_refs[3 * l + 2][...] for l in range(L)]  # (1, 4H)

        # Layer-0 input projection for ALL timesteps: one MXU matmul, bias folded in.
        xproj0 = jnp.dot(x_ref[...], wih[0],
                         preferred_element_type=jnp.float32) + bias[0]   # (T*Bp, 4H)

        def cell(xp, h_prev, c_prev, l):
            gates = xp + jnp.dot(h_prev, whh[l],
                                 preferred_element_type=jnp.float32)     # (Bp, 4H)
            # Whole-vreg nonlinearities, then slice (PyTorch gate order i,f,g,o).
            sg = jax.nn.sigmoid(gates)
            tg = jnp.tanh(gates)
            i_g = sg[:, 0 * H:1 * H]
            f_g = sg[:, 1 * H:2 * H]
            g_g = tg[:, 2 * H:3 * H]
            o_g = sg[:, 3 * H:4 * H]
            c_new = f_g * c_prev + i_g * g_g
            h_new = o_g * jnp.tanh(c_new)
            return h_new, c_new

        h = [jnp.zeros((Bp, H), jnp.float32) for _ in range(L)]
        c = [jnp.zeros((Bp, H), jnp.float32) for _ in range(L)]
        hs_last = [None] * T

        # Diagonal wavefront: at step s, layer l runs timestep t = s - l.
        # All (l, t) cells within one wavefront step are data-independent.
        for s in range(T + L - 1):
            h_prev = list(h)                              # snapshot of step s-1 hiddens
            for l in range(L):
                t = s - l
                if t < 0 or t >= T:
                    continue
                if l == 0:
                    # Static, 8-sublane-aligned slice (Bp == 8 multiple).
                    xp = xproj0[t * Bp:(t + 1) * Bp, :]
                else:
                    # Per-step input projection from the previous layer's hidden
                    # (still in vregs; no VMEM round trip).
                    xp = jnp.dot(h_prev[l - 1], wih[l],
                                 preferred_element_type=jnp.float32) + bias[l]
                h[l], c[l] = cell(xp, h_prev[l], c[l], l)
                if l == L - 1:
                    hs_last[t] = h[l]

        # ---- attention: softmax over time of <h_t, w_att> + b_att ----
        seq = jnp.concatenate(hs_last, axis=1)            # (Bp, T*H), lane-major time
        scores = jnp.dot(seq, w_att_ref[...],
                         preferred_element_type=jnp.float32) + b_att_ref[0]   # (Bp, T)
        m = jnp.max(scores, axis=-1, keepdims=True)
        e = jnp.exp(scores - m)
        p = e / jnp.sum(e, axis=-1, keepdims=True)        # exact div keeps 1e-4 tight

        # Weighted sum over time: balanced add tree (short serial tail).
        terms = [hs_last[t] * p[:, t:t + 1] for t in range(T)]
        while len(terms) > 1:
            nxt = [terms[i] + terms[i + 1] for i in range(0, len(terms) - 1, 2)]
            if len(terms) % 2:
                nxt.append(terms[-1])
            terms = nxt
        att_out = terms[0]                                # (Bp, H)

        # ---- final fc ----
        y_ref[...] = (jnp.dot(att_out, w_fc_ref[...],
                              preferred_element_type=jnp.float32)
                      + b_fc_ref[...])

    return kernel


# -----------------------------------------------------------------------------
# One-time parameter preparation (transposes / bias-combine / block-diag att).
# -----------------------------------------------------------------------------
def prepare_params(params, T):
    layers = []
    for (wih, whh, bih, bhh) in params["lstm"]:
        layers.append((jnp.transpose(wih).astype(jnp.float32),        # (D_in, 4H)
                       jnp.transpose(whh).astype(jnp.float32),        # (H, 4H)
                       (bih + bhh)[None, :].astype(jnp.float32)))     # (1, 4H)
    H = params["lstm"][0][1].shape[1]
    att_w = params["att_w"].astype(jnp.float32)                       # (1, H)
    eye_T = jnp.eye(T, dtype=jnp.float32)                             # (T, T)
    # Block-diagonal (T*H, T): column t holds att_w in rows t*H:(t+1)*H.
    w_att_big = jnp.reshape(eye_T[:, None, :] * att_w[0][None, :, None], (T * H, T))
    return {
        "layers": layers,
        "w_att_big": w_att_big,
        "b_att": params["att_b"].reshape((1,)).astype(jnp.float32),
        "w_fc": jnp.transpose(params["fc_w"]).astype(jnp.float32),    # (H, O)
        "b_fc": params["fc_b"][None, :].astype(jnp.float32),          # (1, O)
    }


# -----------------------------------------------------------------------------
# Model wrapper: one pallas_call for the whole forward pass.
# -----------------------------------------------------------------------------
@jax.jit
def lstm_attention_model(x, kparams):
    """x: (B, T, input_dim) batch_first, as in the PyTorch module."""
    B, T, D = x.shape
    layers = kparams["layers"]
    L = len(layers)
    H = layers[0][1].shape[0]
    O = kparams["w_fc"].shape[1]
    Bp = max(8, ((B + 7) // 8) * 8)                       # sublane-aligned batch

    # t-major, batch-padded 2D input: row t*Bp + b == x[b, t, :] (b < B), zeros else.
    xt = jnp.transpose(x, (1, 0, 2)).astype(jnp.float32)  # (T, B, D)
    xt = jnp.pad(xt, ((0, 0), (0, Bp - B), (0, 0)))       # (T, Bp, D)
    x2d = xt.reshape(T * Bp, D)

    inputs = [x2d]
    in_specs = [pl.BlockSpec(memory_space=pltpu.MemorySpace.VMEM)]
    for (wih, whh, b) in layers:
        inputs += [wih, whh, b]
        in_specs += [pl.BlockSpec(memory_space=pltpu.MemorySpace.VMEM)] * 3
    inputs += [kparams["w_att_big"], kparams["b_att"],
               kparams["w_fc"], kparams["b_fc"]]
    in_specs += [pl.BlockSpec(memory_space=pltpu.MemorySpace.VMEM),
                 pl.BlockSpec(memory_space=pltpu.MemorySpace.SMEM),
                 pl.BlockSpec(memory_space=pltpu.MemorySpace.VMEM),
                 pl.BlockSpec(memory_space=pltpu.MemorySpace.VMEM)]

    kernel = _make_fused_kernel(L, T, Bp, H)
    y = pl.pallas_call(
        kernel,
        out_shape=jax.ShapeDtypeStruct((Bp, O), jnp.float32),
        in_specs=in_specs,
        out_specs=pl.BlockSpec(memory_space=pltpu.MemorySpace.VMEM),
    )(*inputs)
    return y[:B]                                          # drop batch padding


# -----------------------------------------------------------------------------
# Pure-JAX reference (mirrors torch semantics) for correctness check.
# -----------------------------------------------------------------------------
def reference_model(x, params):
    B, T, _ = x.shape
    inp = x.astype(jnp.float32)
    for (wih, whh, bih, bhh) in params["lstm"]:
        H = whh.shape[1]
        h = jnp.zeros((B, H), jnp.float32)
        c = jnp.zeros((B, H), jnp.float32)
        outs = []
        for t in range(T):
            g = inp[:, t, :] @ wih.T + h @ whh.T + bih + bhh
            i = jax.nn.sigmoid(g[:, :H])
            f = jax.nn.sigmoid(g[:, H:2 * H])
            gg = jnp.tanh(g[:, 2 * H:3 * H])
            o = jax.nn.sigmoid(g[:, 3 * H:4 * H])
            c = f * c + i * gg
            h = o * jnp.tanh(c)
            outs.append(h)
        inp = jnp.stack(outs, axis=1)                     # (B, T, H)
    scores = inp @ params["att_w"].T + params["att_b"]    # (B, T, 1)
    p = jax.nn.softmax(scores, axis=1)
    att_out = jnp.sum(inp * p, axis=1)                    # (B, H)
    return att_out @ params["fc_w"].T + params["fc_b"]    # (B, O)


# -----------------------------------------------------------------------------
# Deterministic parameter init (PyTorch-style uniform(-1/sqrt(H), 1/sqrt(H))).
# -----------------------------------------------------------------------------
def init_params(key, input_dim, hidden_dim, num_layers, output_dim):
    k = 1.0 / jnp.sqrt(hidden_dim)
    params = {"lstm": []}
    for layer in range(num_layers):
        d_in = input_dim if layer == 0 else hidden_dim
        key, k1, k2, k3, k4 = jax.random.split(key, 5)
        wih = jax.random.uniform(k1, (4 * hidden_dim, d_in), jnp.float32, -k, k)
        whh = jax.random.uniform(k2, (4 * hidden_dim, hidden_dim), jnp.float32, -k, k)
        bih = jax.random.uniform(k3, (4 * hidden_dim,), jnp.float32, -k, k)
        bhh = jax.random.uniform(k4, (4 * hidden_dim,), jnp.float32, -k, k)
        params["lstm"].append((wih, whh, bih, bhh))
    key, k1, k2, k3, k4 = jax.random.split(key, 5)
    params["att_w"] = jax.random.uniform(k1, (1, hidden_dim), jnp.float32, -k, k)
    params["att_b"] = jax.random.uniform(k2, (1,), jnp.float32, -k, k)
    kf = 1.0 / jnp.sqrt(hidden_dim)
    params["fc_w"] = jax.random.uniform(k3, (output_dim, hidden_dim), jnp.float32, -kf, kf)
    params["fc_b"] = jax.random.uniform(k4, (output_dim,), jnp.float32, -kf, kf)
    return params


if __name__ == "__main__":
    B, T = 2, 8
    INPUT_DIM, HIDDEN_DIM, NUM_LAYERS, OUTPUT_DIM = 16, 32, 2, 4

    key = jax.random.PRNGKey(0)
    key, pkey, xkey = jax.random.split(key, 3)
    params = init_params(pkey, INPUT_DIM, HIDDEN_DIM, NUM_LAYERS, OUTPUT_DIM)
    x = jax.random.normal(xkey, (B, T, INPUT_DIM), jnp.float32)

    kparams = prepare_params(params, T)                   # one-time weight prep
    y = jax.block_until_ready(lstm_attention_model(x, kparams))

    y_ref = jax.block_until_ready(reference_model(x, params))
    assert y.shape == (B, OUTPUT_DIM)
    max_err = float(jnp.max(jnp.abs(y - y_ref)))
    assert jnp.allclose(y, y_ref, rtol=1e-4, atol=1e-4), f"mismatch: max abs err {max_err}"

    print("KERNEL_OK")
</pallas_src>

<mosaic_0001>
module attributes {stable_mosaic.version = 11 : i64} {
  func.func @kernel(%arg0: memref<64x16xf32, #tpu.memory_space<vmem>>, %arg1: memref<16x128xf32, #tpu.memory_space<vmem>>, %arg2: memref<32x128xf32, #tpu.memory_space<vmem>>, %arg3: memref<1x128xf32, #tpu.memory_space<vmem>>, %arg4: memref<32x128xf32, #tpu.memory_space<vmem>>, %arg5: memref<32x128xf32, #tpu.memory_space<vmem>>, %arg6: memref<1x128xf32, #tpu.memory_space<vmem>>, %arg7: memref<256x8xf32, #tpu.memory_space<vmem>>, %arg8: memref<1xf32, #tpu.memory_space<smem>>, %arg9: memref<32x4xf32, #tpu.memory_space<vmem>>, %arg10: memref<1x4xf32, #tpu.memory_space<vmem>>, %arg11: memref<8x4xf32, #tpu.memory_space<vmem>>) attributes {dimension_semantics = [], scalar_prefetch = 0 : i64, scratch_operands = 0 : i64, tpu.core_type = #tpu.core_type<tc>} {
    %c0 = arith.constant 0 : index
    %c0_0 = arith.constant 0 : index
    %0 = vector.load %arg1[%c0, %c0_0] : memref<16x128xf32, #tpu.memory_space<vmem>>, vector<16x128xf32>
    %c0_1 = arith.constant 0 : index
    %c0_2 = arith.constant 0 : index
    %1 = vector.load %arg4[%c0_1, %c0_2] : memref<32x128xf32, #tpu.memory_space<vmem>>, vector<32x128xf32>
    %c0_3 = arith.constant 0 : index
    %c0_4 = arith.constant 0 : index
    %2 = vector.load %arg2[%c0_3, %c0_4] : memref<32x128xf32, #tpu.memory_space<vmem>>, vector<32x128xf32>
    %c0_5 = arith.constant 0 : index
    %c0_6 = arith.constant 0 : index
    %3 = vector.load %arg5[%c0_5, %c0_6] : memref<32x128xf32, #tpu.memory_space<vmem>>, vector<32x128xf32>
    %c0_7 = arith.constant 0 : index
    %c0_8 = arith.constant 0 : index
    %4 = vector.load %arg3[%c0_7, %c0_8] : memref<1x128xf32, #tpu.memory_space<vmem>>, vector<1x128xf32>
    %c0_9 = arith.constant 0 : index
    %c0_10 = arith.constant 0 : index
    %5 = vector.load %arg6[%c0_9, %c0_10] : memref<1x128xf32, #tpu.memory_space<vmem>>, vector<1x128xf32>
    %c0_11 = arith.constant 0 : index
    %c0_12 = arith.constant 0 : index
    %6 = vector.load %arg0[%c0_11, %c0_12] : memref<64x16xf32, #tpu.memory_space<vmem>>, vector<64x16xf32>
    %cst = arith.constant dense<0.000000e+00> : vector<64x128xf32>
    %7 = tpu.matmul %6, %0, %cst {dimension_numbers = #tpu.dot_dimension_numbers<[1], [0], [0], [1], [0, 0, 1, 1], [], []>} : vector<64x16xf32>, vector<16x128xf32>, vector<64x128xf32> -> vector<64x128xf32>
    %8 = vector.broadcast %4 : vector<1x128xf32> to vector<64x128xf32>
    %9 = arith.addf %7, %8 : vector<64x128xf32>
    %cst_13 = arith.constant 0.000000e+00 : f32
    %10 = vector.broadcast %cst_13 : f32 to vector<8x32xf32>
    %cst_14 = arith.constant 0.000000e+00 : f32
    %11 = vector.broadcast %cst_14 : f32 to vector<8x32xf32>
    %cst_15 = arith.constant 0.000000e+00 : f32
    %12 = vector.broadcast %cst_15 : f32 to vector<8x32xf32>
    %cst_16 = arith.constant 0.000000e+00 : f32
    %13 = vector.broadcast %cst_16 : f32 to vector<8x32xf32>
    %14 = vector.extract_strided_slice %9 {offsets = [0, 0], sizes = [8, 128], strides = [1, 1]} : vector<64x128xf32> to vector<8x128xf32>
    %cst_17 = arith.constant dense<0.000000e+00> : vector<8x128xf32>
    %15 = tpu.matmul %10, %2, %cst_17 {dimension_numbers = #tpu.dot_dimension_numbers<[1], [0], [0], [1], [0, 0, 1, 1], [], []>} : vector<8x32xf32>, vector<32x128xf32>, vector<8x128xf32> -> vector<8x128xf32>
    %16 = arith.addf %14, %15 : vector<8x128xf32>
    %17 = arith.negf %16 : vector<8x128xf32>
    %18 = math.exp %17 : vector<8x128xf32>
    %cst_18 = arith.constant 1.000000e+00 : f32
    %19 = vector.broadcast %cst_18 : f32 to vector<8x128xf32>
    %20 = arith.addf %19, %18 : vector<8x128xf32>
    %21 = arith.divf %19, %20 : vector<8x128xf32>
    %22 = math.tanh %16 : vector<8x128xf32>
    %23 = vector.extract_strided_slice %21 {offsets = [0, 0], sizes = [8, 32], strides = [1, 1]} : vector<8x128xf32> to vector<8x32xf32>
    %24 = vector.extract_strided_slice %21 {offsets = [0, 32], sizes = [8, 32], strides = [1, 1]} : vector<8x128xf32> to vector<8x32xf32>
    %25 = vector.extract_strided_slice %22 {offsets = [0, 64], sizes = [8, 32], strides = [1, 1]} : vector<8x128xf32> to vector<8x32xf32>
    %26 = vector.extract_strided_slice %21 {offsets = [0, 96], sizes = [8, 32], strides = [1, 1]} : vector<8x128xf32> to vector<8x32xf32>
    %27 = arith.mulf %24, %12 : vector<8x32xf32>
    %28 = arith.mulf %23, %25 : vector<8x32xf32>
    %29 = arith.addf %27, %28 : vector<8x32xf32>
    %30 = math.tanh %29 : vector<8x32xf32>
    %31 = arith.mulf %26, %30 : vector<8x32xf32>
    %32 = vector.extract_strided_slice %9 {offsets = [8, 0], sizes = [8, 128], strides = [1, 1]} : vector<64x128xf32> to vector<8x128xf32>
    %cst_19 = arith.constant dense<0.000000e+00> : vector<8x128xf32>
    %33 = tpu.matmul %31, %2, %cst_19 {dimension_numbers = #tpu.dot_dimension_numbers<[1], [0], [0], [1], [0, 0, 1, 1], [], []>} : vector<8x32xf32>, vector<32x128xf32>, vector<8x128xf32> -> vector<8x128xf32>
    %34 = arith.addf %32, %33 : vector<8x128xf32>
    %35 = arith.negf %34 : vector<8x128xf32>
    %36 = math.exp %35 : vector<8x128xf32>
    %cst_20 = arith.constant 1.000000e+00 : f32
    %37 = vector.broadcast %cst_20 : f32 to vector<8x128xf32>
    %38 = arith.addf %37, %36 : vector<8x128xf32>
    %39 = arith.divf %37, %38 : vector<8x128xf32>
    %40 = math.tanh %34 : vector<8x128xf32>
    %41 = vector.extract_strided_slice %39 {offsets = [0, 0], sizes = [8, 32], strides = [1, 1]} : vector<8x128xf32> to vector<8x32xf32>
    %42 = vector.extract_strided_slice %39 {offsets = [0, 32], sizes = [8, 32], strides = [1, 1]} : vector<8x128xf32> to vector<8x32xf32>
    %43 = vector.extract_strided_slice %40 {offsets = [0, 64], sizes = [8, 32], strides = [1, 1]} : vector<8x128xf32> to vector<8x32xf32>
    %44 = vector.extract_strided_slice %39 {offsets = [0, 96], sizes = [8, 32], strides = [1, 1]} : vector<8x128xf32> to vector<8x32xf32>
    %45 = arith.mulf %42, %29 : vector<8x32xf32>
    %46 = arith.mulf %41, %43 : vector<8x32xf32>
    %47 = arith.addf %45, %46 : vector<8x32xf32>
    %48 = math.tanh %47 : vector<8x32xf32>
    %49 = arith.mulf %44, %48 : vector<8x32xf32>
    %cst_21 = arith.constant dense<0.000000e+00> : vector<8x128xf32>
    %50 = tpu.matmul %31, %1, %cst_21 {dimension_numbers = #tpu.dot_dimension_numbers<[1], [0], [0], [1], [0, 0, 1, 1], [], []>} : vector<8x32xf32>, vector<32x128xf32>, vector<8x128xf32> -> vector<8x128xf32>
    %51 = vector.broadcast %5 : vector<1x128xf32> to vector<8x128xf32>
    %52 = arith.addf %50, %51 : vector<8x128xf32>
    %cst_22 = arith.constant dense<0.000000e+00> : vector<8x128xf32>
    %53 = tpu.matmul %11, %3, %cst_22 {dimension_numbers = #tpu.dot_dimension_numbers<[1], [0], [0], [1], [0, 0, 1, 1], [], []>} : vector<8x32xf32>, vector<32x128xf32>, vector<8x128xf32> -> vector<8x128xf32>
    %54 = arith.addf %52, %53 : vector<8x128xf32>
    %55 = arith.negf %54 : vector<8x128xf32>
    %56 = math.exp %55 : vector<8x128xf32>
    %cst_23 = arith.constant 1.000000e+00 : f32
    %57 = vector.broadcast %cst_23 : f32 to vector<8x128xf32>
    %58 = arith.addf %57, %56 : vector<8x128xf32>
    %59 = arith.divf %57, %58 : vector<8x128xf32>
    %60 = math.tanh %54 : vector<8x128xf32>
    %61 = vector.extract_strided_slice %59 {offsets = [0, 0], sizes = [8, 32], strides = [1, 1]} : vector<8x128xf32> to vector<8x32xf32>
    %62 = vector.extract_strided_slice %59 {offsets = [0, 32], sizes = [8, 32], strides = [1, 1]} : vector<8x128xf32> to vector<8x32xf32>
    %63 = vector.extract_strided_slice %60 {offsets = [0, 64], sizes = [8, 32], strides = [1, 1]} : vector<8x128xf32> to vector<8x32xf32>
    %64 = vector.extract_strided_slice %59 {offsets = [0, 96], sizes = [8, 32], strides = [1, 1]} : vector<8x128xf32> to vector<8x32xf32>
    %65 = arith.mulf %62, %13 : vector<8x32xf32>
    %66 = arith.mulf %61, %63 : vector<8x32xf32>
    %67 = arith.addf %65, %66 : vector<8x32xf32>
    %68 = math.tanh %67 : vector<8x32xf32>
    %69 = arith.mulf %64, %68 : vector<8x32xf32>
    %70 = vector.extract_strided_slice %9 {offsets = [16, 0], sizes = [8, 128], strides = [1, 1]} : vector<64x128xf32> to vector<8x128xf32>
    %cst_24 = arith.constant dense<0.000000e+00> : vector<8x128xf32>
    %71 = tpu.matmul %49, %2, %cst_24 {dimension_numbers = #tpu.dot_dimension_numbers<[1], [0], [0], [1], [0, 0, 1, 1], [], []>} : vector<8x32xf32>, vector<32x128xf32>, vector<8x128xf32> -> vector<8x128xf32>
    %72 = arith.addf %70, %71 : vector<8x128xf32>
    %73 = arith.negf %72 : vector<8x128xf32>
    %74 = math.exp %73 : vector<8x128xf32>
    %cst_25 = arith.constant 1.000000e+00 : f32
    %75 = vector.broadcast %cst_25 : f32 to vector<8x128xf32>
    %76 = arith.addf %75, %74 : vector<8x128xf32>
    %77 = arith.divf %75, %76 : vector<8x128xf32>
    %78 = math.tanh %72 : vector<8x128xf32>
    %79 = vector.extract_strided_slice %77 {offsets = [0, 0], sizes = [8, 32], strides = [1, 1]} : vector<8x128xf32> to vector<8x32xf32>
    %80 = vector.extract_strided_slice %77 {offsets = [0, 32], sizes = [8, 32], strides = [1, 1]} : vector<8x128xf32> to vector<8x32xf32>
    %81 = vector.extract_strided_slice %78 {offsets = [0, 64], sizes = [8, 32], strides = [1, 1]} : vector<8x128xf32> to vector<8x32xf32>
    %82 = vector.extract_strided_slice %77 {offsets = [0, 96], sizes = [8, 32], strides = [1, 1]} : vector<8x128xf32> to vector<8x32xf32>
    %83 = arith.mulf %80, %47 : vector<8x32xf32>
    %84 = arith.mulf %79, %81 : vector<8x32xf32>
    %85 = arith.addf %83, %84 : vector<8x32xf32>
    %86 = math.tanh %85 : vector<8x32xf32>
    %87 = arith.mulf %82, %86 : vector<8x32xf32>
    %cst_26 = arith.constant dense<0.000000e+00> : vector<8x128xf32>
    %88 = tpu.matmul %49, %1, %cst_26 {dimension_numbers = #tpu.dot_dimension_numbers<[1], [0], [0], [1], [0, 0, 1, 1], [], []>} : vector<8x32xf32>, vector<32x128xf32>, vector<8x128xf32> -> vector<8x128xf32>
    %89 = vector.broadcast %5 : vector<1x128xf32> to vector<8x128xf32>
    %90 = arith.addf %88, %89 : vector<8x128xf32>
    %cst_27 = arith.constant dense<0.000000e+00> : vector<8x128xf32>
    %91 = tpu.matmul %69, %3, %cst_27 {dimension_numbers = #tpu.dot_dimension_numbers<[1], [0], [0], [1], [0, 0, 1, 1], [], []>} : vector<8x32xf32>, vector<32x128xf32>, vector<8x128xf32> -> vector<8x128xf32>
    %92 = arith.addf %90, %91 : vector<8x128xf32>
    %93 = arith.negf %92 : vector<8x128xf32>
    %94 = math.exp %93 : vector<8x128xf32>
    %cst_28 = arith.constant 1.000000e+00 : f32
    %95 = vector.broadcast %cst_28 : f32 to vector<8x128xf32>
    %96 = arith.addf %95, %94 : vector<8x128xf32>
    %97 = arith.divf %95, %96 : vector<8x128xf32>
    %98 = math.tanh %92 : vector<8x128xf32>
    %99 = vector.extract_strided_slice %97 {offsets = [0, 0], sizes = [8, 32], strides = [1, 1]} : vector<8x128xf32> to vector<8x32xf32>
    %100 = vector.extract_strided_slice %97 {offsets = [0, 32], sizes = [8, 32], strides = [1, 1]} : vector<8x128xf32> to vector<8x32xf32>
    %101 = vector.extract_strided_slice %98 {offsets = [0, 64], sizes = [8, 32], strides = [1, 1]} : vector<8x128xf32> to vector<8x32xf32>
    %102 = vector.extract_strided_slice %97 {offsets = [0, 96], sizes = [8, 32], strides = [1, 1]} : vector<8x128xf32> to vector<8x32xf32>
    %103 = arith.mulf %100, %67 : vector<8x32xf32>
    %104 = arith.mulf %99, %101 : vector<8x32xf32>
    %105 = arith.addf %103, %104 : vector<8x32xf32>
    %106 = math.tanh %105 : vector<8x32xf32>
    %107 = arith.mulf %102, %106 : vector<8x32xf32>
    %108 = vector.extract_strided_slice %9 {offsets = [24, 0], sizes = [8, 128], strides = [1, 1]} : vector<64x128xf32> to vector<8x128xf32>
    %cst_29 = arith.constant dense<0.000000e+00> : vector<8x128xf32>
    %109 = tpu.matmul %87, %2, %cst_29 {dimension_numbers = #tpu.dot_dimension_numbers<[1], [0], [0], [1], [0, 0, 1, 1], [], []>} : vector<8x32xf32>, vector<32x128xf32>, vector<8x128xf32> -> vector<8x128xf32>
    %110 = arith.addf %108, %109 : vector<8x128xf32>
    %111 = arith.negf %110 : vector<8x128xf32>
    %112 = math.exp %111 : vector<8x128xf32>
    %cst_30 = arith.constant 1.000000e+00 : f32
    %113 = vector.broadcast %cst_30 : f32 to vector<8x128xf32>
    %114 = arith.addf %113, %112 : vector<8x128xf32>
    %115 = arith.divf %113, %114 : vector<8x128xf32>
    %116 = math.tanh %110 : vector<8x128xf32>
    %117 = vector.extract_strided_slice %115 {offsets = [0, 0], sizes = [8, 32], strides = [1, 1]} : vector<8x128xf32> to vector<8x32xf32>
    %118 = vector.extract_strided_slice %115 {offsets = [0, 32], sizes = [8, 32], strides = [1, 1]} : vector<8x128xf32> to vector<8x32xf32>
    %119 = vector.extract_strided_slice %116 {offsets = [0, 64], sizes = [8, 32], strides = [1, 1]} : vector<8x128xf32> to vector<8x32xf32>
    %120 = vector.extract_strided_slice %115 {offsets = [0, 96], sizes = [8, 32], strides = [1, 1]} : vector<8x128xf32> to vector<8x32xf32>
    %121 = arith.mulf %118, %85 : vector<8x32xf32>
    %122 = arith.mulf %117, %119 : vector<8x32xf32>
    %123 = arith.addf %121, %122 : vector<8x32xf32>
    %124 = math.tanh %123 : vector<8x32xf32>
    %125 = arith.mulf %120, %124 : vector<8x32xf32>
    %cst_31 = arith.constant dense<0.000000e+00> : vector<8x128xf32>
    %126 = tpu.matmul %87, %1, %cst_31 {dimension_numbers = #tpu.dot_dimension_numbers<[1], [0], [0], [1], [0, 0, 1, 1], [], []>} : vector<8x32xf32>, vector<32x128xf32>, vector<8x128xf32> -> vector<8x128xf32>
    %127 = vector.broadcast %5 : vector<1x128xf32> to vector<8x128xf32>
    %128 = arith.addf %126, %127 : vector<8x128xf32>
    %cst_32 = arith.constant dense<0.000000e+00> : vector<8x128xf32>
    %129 = tpu.matmul %107, %3, %cst_32 {dimension_numbers = #tpu.dot_dimension_numbers<[1], [0], [0], [1], [0, 0, 1, 1], [], []>} : vector<8x32xf32>, vector<32x128xf32>, vector<8x128xf32> -> vector<8x128xf32>
    %130 = arith.addf %128, %129 : vector<8x128xf32>
    %131 = arith.negf %130 : vector<8x128xf32>
    %132 = math.exp %131 : vector<8x128xf32>
    %cst_33 = arith.constant 1.000000e+00 : f32
    %133 = vector.broadcast %cst_33 : f32 to vector<8x128xf32>
    %134 = arith.addf %133, %132 : vector<8x128xf32>
    %135 = arith.divf %133, %134 : vector<8x128xf32>
    %136 = math.tanh %130 : vector<8x128xf32>
    %137 = vector.extract_strided_slice %135 {offsets = [0, 0], sizes = [8, 32], strides = [1, 1]} : vector<8x128xf32> to vector<8x32xf32>
    %138 = vector.extract_strided_slice %135 {offsets = [0, 32], sizes = [8, 32], strides = [1, 1]} : vector<8x128xf32> to vector<8x32xf32>
    %139 = vector.extract_strided_slice %136 {offsets = [0, 64], sizes = [8, 32], strides = [1, 1]} : vector<8x128xf32> to vector<8x32xf32>
    %140 = vector.extract_strided_slice %135 {offsets = [0, 96], sizes = [8, 32], strides = [1, 1]} : vector<8x128xf32> to vector<8x32xf32>
    %141 = arith.mulf %138, %105 : vector<8x32xf32>
    %142 = arith.mulf %137, %139 : vector<8x32xf32>
    %143 = arith.addf %141, %142 : vector<8x32xf32>
    %144 = math.tanh %143 : vector<8x32xf32>
    %145 = arith.mulf %140, %144 : vector<8x32xf32>
    %146 = vector.extract_strided_slice %9 {offsets = [32, 0], sizes = [8, 128], strides = [1, 1]} : vector<64x128xf32> to vector<8x128xf32>
    %cst_34 = arith.constant dense<0.000000e+00> : vector<8x128xf32>
    %147 = tpu.matmul %125, %2, %cst_34 {dimension_numbers = #tpu.dot_dimension_numbers<[1], [0], [0], [1], [0, 0, 1, 1], [], []>} : vector<8x32xf32>, vector<32x128xf32>, vector<8x128xf32> -> vector<8x128xf32>
    %148 = arith.addf %146, %147 : vector<8x128xf32>
    %149 = arith.negf %148 : vector<8x128xf32>
    %150 = math.exp %149 : vector<8x128xf32>
    %cst_35 = arith.constant 1.000000e+00 : f32
    %151 = vector.broadcast %cst_35 : f32 to vector<8x128xf32>
    %152 = arith.addf %151, %150 : vector<8x128xf32>
    %153 = arith.divf %151, %152 : vector<8x128xf32>
    %154 = math.tanh %148 : vector<8x128xf32>
    %155 = vector.extract_strided_slice %153 {offsets = [0, 0], sizes = [8, 32], strides = [1, 1]} : vector<8x128xf32> to vector<8x32xf32>
    %156 = vector.extract_strided_slice %153 {offsets = [0, 32], sizes = [8, 32], strides = [1, 1]} : vector<8x128xf32> to vector<8x32xf32>
    %157 = vector.extract_strided_slice %154 {offsets = [0, 64], sizes = [8, 32], strides = [1, 1]} : vector<8x128xf32> to vector<8x32xf32>
    %158 = vector.extract_strided_slice %153 {offsets = [0, 96], sizes = [8, 32], strides = [1, 1]} : vector<8x128xf32> to vector<8x32xf32>
    %159 = arith.mulf %156, %123 : vector<8x32xf32>
    %160 = arith.mulf %155, %157 : vector<8x32xf32>
    %161 = arith.addf %159, %160 : vector<8x32xf32>
    %162 = math.tanh %161 : vector<8x32xf32>
    %163 = arith.mulf %158, %162 : vector<8x32xf32>
    %cst_36 = arith.constant dense<0.000000e+00> : vector<8x128xf32>
    %164 = tpu.matmul %125, %1, %cst_36 {dimension_numbers = #tpu.dot_dimension_numbers<[1], [0], [0], [1], [0, 0, 1, 1], [], []>} : vector<8x32xf32>, vector<32x128xf32>, vector<8x128xf32> -> vector<8x128xf32>
    %165 = vector.broadcast %5 : vector<1x128xf32> to vector<8x128xf32>
    %166 = arith.addf %164, %165 : vector<8x128xf32>
    %cst_37 = arith.constant dense<0.000000e+00> : vector<8x128xf32>
    %167 = tpu.matmul %145, %3, %cst_37 {dimension_numbers = #tpu.dot_dimension_numbers<[1], [0], [0], [1], [0, 0, 1, 1], [], []>} : vector<8x32xf32>, vector<32x128xf32>, vector<8x128xf32> -> vector<8x128xf32>
    %168 = arith.addf %166, %167 : vector<8x128xf32>
    %169 = arith.negf %168 : vector<8x128xf32>
    %170 = math.exp %169 : vector<8x128xf32>
    %cst_38 = arith.constant 1.000000e+00 : f32
    %171 = vector.broadcast %cst_38 : f32 to vector<8x128xf32>
    %172 = arith.addf %171, %170 : vector<8x128xf32>
    %173 = arith.divf %171, %172 : vector<8x128xf32>
    %174 = math.tanh %168 : vector<8x128xf32>
    %175 = vector.extract_strided_slice %173 {offsets = [0, 0], sizes = [8, 32], strides = [1, 1]} : vector<8x128xf32> to vector<8x32xf32>
    %176 = vector.extract_strided_slice %173 {offsets = [0, 32], sizes = [8, 32], strides = [1, 1]} : vector<8x128xf32> to vector<8x32xf32>
    %177 = vector.extract_strided_slice %174 {offsets = [0, 64], sizes = [8, 32], strides = [1, 1]} : vector<8x128xf32> to vector<8x32xf32>
    %178 = vector.extract_strided_slice %173 {offsets = [0, 96], sizes = [8, 32], strides = [1, 1]} : vector<8x128xf32> to vector<8x32xf32>
    %179 = arith.mulf %176, %143 : vector<8x32xf32>
    %180 = arith.mulf %175, %177 : vector<8x32xf32>
    %181 = arith.addf %179, %180 : vector<8x32xf32>
    %182 = math.tanh %181 : vector<8x32xf32>
    %183 = arith.mulf %178, %182 : vector<8x32xf32>
    %184 = vector.extract_strided_slice %9 {offsets = [40, 0], sizes = [8, 128], strides = [1, 1]} : vector<64x128xf32> to vector<8x128xf32>
    %cst_39 = arith.constant dense<0.000000e+00> : vector<8x128xf32>
    %185 = tpu.matmul %163, %2, %cst_39 {dimension_numbers = #tpu.dot_dimension_numbers<[1], [0], [0], [1], [0, 0, 1, 1], [], []>} : vector<8x32xf32>, vector<32x128xf32>, vector<8x128xf32> -> vector<8x128xf32>
    %186 = arith.addf %184, %185 : vector<8x128xf32>
    %187 = arith.negf %186 : vector<8x128xf32>
    %188 = math.exp %187 : vector<8x128xf32>
    %cst_40 = arith.constant 1.000000e+00 : f32
    %189 = vector.broadcast %cst_40 : f32 to vector<8x128xf32>
    %190 = arith.addf %189, %188 : vector<8x128xf32>
    %191 = arith.divf %189, %190 : vector<8x128xf32>
    %192 = math.tanh %186 : vector<8x128xf32>
    %193 = vector.extract_strided_slice %191 {offsets = [0, 0], sizes = [8, 32], strides = [1, 1]} : vector<8x128xf32> to vector<8x32xf32>
    %194 = vector.extract_strided_slice %191 {offsets = [0, 32], sizes = [8, 32], strides = [1, 1]} : vector<8x128xf32> to vector<8x32xf32>
    %195 = vector.extract_strided_slice %192 {offsets = [0, 64], sizes = [8, 32], strides = [1, 1]} : vector<8x128xf32> to vector<8x32xf32>
    %196 = vector.extract_strided_slice %191 {offsets = [0, 96], sizes = [8, 32], strides = [1, 1]} : vector<8x128xf32> to vector<8x32xf32>
    %197 = arith.mulf %194, %161 : vector<8x32xf32>
    %198 = arith.mulf %193, %195 : vector<8x32xf32>
    %199 = arith.addf %197, %198 : vector<8x32xf32>
    %200 = math.tanh %199 : vector<8x32xf32>
    %201 = arith.mulf %196, %200 : vector<8x32xf32>
    %cst_41 = arith.constant dense<0.000000e+00> : vector<8x128xf32>
    %202 = tpu.matmul %163, %1, %cst_41 {dimension_numbers = #tpu.dot_dimension_numbers<[1], [0], [0], [1], [0, 0, 1, 1], [], []>} : vector<8x32xf32>, vector<32x128xf32>, vector<8x128xf32> -> vector<8x128xf32>
    %203 = vector.broadcast %5 : vector<1x128xf32> to vector<8x128xf32>
    %204 = arith.addf %202, %203 : vector<8x128xf32>
    %cst_42 = arith.constant dense<0.000000e+00> : vector<8x128xf32>
    %205 = tpu.matmul %183, %3, %cst_42 {dimension_numbers = #tpu.dot_dimension_numbers<[1], [0], [0], [1], [0, 0, 1, 1], [], []>} : vector<8x32xf32>, vector<32x128xf32>, vector<8x128xf32> -> vector<8x128xf32>
    %206 = arith.addf %204, %205 : vector<8x128xf32>
    %207 = arith.negf %206 : vector<8x128xf32>
    %208 = math.exp %207 : vector<8x128xf32>
    %cst_43 = arith.constant 1.000000e+00 : f32
    %209 = vector.broadcast %cst_43 : f32 to vector<8x128xf32>
    %210 = arith.addf %209, %208 : vector<8x128xf32>
    %211 = arith.divf %209, %210 : vector<8x128xf32>
    %212 = math.tanh %206 : vector<8x128xf32>
    %213 = vector.extract_strided_slice %211 {offsets = [0, 0], sizes = [8, 32], strides = [1, 1]} : vector<8x128xf32> to vector<8x32xf32>
    %214 = vector.extract_strided_slice %211 {offsets = [0, 32], sizes = [8, 32], strides = [1, 1]} : vector<8x128xf32> to vector<8x32xf32>
    %215 = vector.extract_strided_slice %212 {offsets = [0, 64], sizes = [8, 32], strides = [1, 1]} : vector<8x128xf32> to vector<8x32xf32>
    %216 = vector.extract_strided_slice %211 {offsets = [0, 96], sizes = [8, 32], strides = [1, 1]} : vector<8x128xf32> to vector<8x32xf32>
    %217 = arith.mulf %214, %181 : vector<8x32xf32>
    %218 = arith.mulf %213, %215 : vector<8x32xf32>
    %219 = arith.addf %217, %218 : vector<8x32xf32>
    %220 = math.tanh %219 : vector<8x32xf32>
    %221 = arith.mulf %216, %220 : vector<8x32xf32>
    %222 = vector.extract_strided_slice %9 {offsets = [48, 0], sizes = [8, 128], strides = [1, 1]} : vector<64x128xf32> to vector<8x128xf32>
    %cst_44 = arith.constant dense<0.000000e+00> : vector<8x128xf32>
    %223 = tpu.matmul %201, %2, %cst_44 {dimension_numbers = #tpu.dot_dimension_numbers<[1], [0], [0], [1], [0, 0, 1, 1], [], []>} : vector<8x32xf32>, vector<32x128xf32>, vector<8x128xf32> -> vector<8x128xf32>
    %224 = arith.addf %222, %223 : vector<8x128xf32>
    %225 = arith.negf %224 : vector<8x128xf32>
    %226 = math.exp %225 : vector<8x128xf32>
    %cst_45 = arith.constant 1.000000e+00 : f32
    %227 = vector.broadcast %cst_45 : f32 to vector<8x128xf32>
    %228 = arith.addf %227, %226 : vector<8x128xf32>
    %229 = arith.divf %227, %228 : vector<8x128xf32>
    %230 = math.tanh %224 : vector<8x128xf32>
    %231 = vector.extract_strided_slice %229 {offsets = [0, 0], sizes = [8, 32], strides = [1, 1]} : vector<8x128xf32> to vector<8x32xf32>
    %232 = vector.extract_strided_slice %229 {offsets = [0, 32], sizes = [8, 32], strides = [1, 1]} : vector<8x128xf32> to vector<8x32xf32>
    %233 = vector.extract_strided_slice %230 {offsets = [0, 64], sizes = [8, 32], strides = [1, 1]} : vector<8x128xf32> to vector<8x32xf32>
    %234 = vector.extract_strided_slice %229 {offsets = [0, 96], sizes = [8, 32], strides = [1, 1]} : vector<8x128xf32> to vector<8x32xf32>
    %235 = arith.mulf %232, %199 : vector<8x32xf32>
    %236 = arith.mulf %231, %233 : vector<8x32xf32>
    %237 = arith.addf %235, %236 : vector<8x32xf32>
    %238 = math.tanh %237 : vector<8x32xf32>
    %239 = arith.mulf %234, %238 : vector<8x32xf32>
    %cst_46 = arith.constant dense<0.000000e+00> : vector<8x128xf32>
    %240 = tpu.matmul %201, %1, %cst_46 {dimension_numbers = #tpu.dot_dimension_numbers<[1], [0], [0], [1], [0, 0, 1, 1], [], []>} : vector<8x32xf32>, vector<32x128xf32>, vector<8x128xf32> -> vector<8x128xf32>
    %241 = vector.broadcast %5 : vector<1x128xf32> to vector<8x128xf32>
    %242 = arith.addf %240, %241 : vector<8x128xf32>
    %cst_47 = arith.constant dense<0.000000e+00> : vector<8x128xf32>
    %243 = tpu.matmul %221, %3, %cst_47 {dimension_numbers = #tpu.dot_dimension_numbers<[1], [0], [0], [1], [0, 0, 1, 1], [], []>} : vector<8x32xf32>, vector<32x128xf32>, vector<8x128xf32> -> vector<8x128xf32>
    %244 = arith.addf %242, %243 : vector<8x128xf32>
    %245 = arith.negf %244 : vector<8x128xf32>
    %246 = math.exp %245 : vector<8x128xf32>
    %cst_48 = arith.constant 1.000000e+00 : f32
    %247 = vector.broadcast %cst_48 : f32 to vector<8x128xf32>
    %248 = arith.addf %247, %246 : vector<8x128xf32>
    %249 = arith.divf %247, %248 : vector<8x128xf32>
    %250 = math.tanh %244 : vector<8x128xf32>
    %251 = vector.extract_strided_slice %249 {offsets = [0, 0], sizes = [8, 32], strides = [1, 1]} : vector<8x128xf32> to vector<8x32xf32>
    %252 = vector.extract_strided_slice %249 {offsets = [0, 32], sizes = [8, 32], strides = [1, 1]} : vector<8x128xf32> to vector<8x32xf32>
    %253 = vector.extract_strided_slice %250 {offsets = [0, 64], sizes = [8, 32], strides = [1, 1]} : vector<8x128xf32> to vector<8x32xf32>
    %254 = vector.extract_strided_slice %249 {offsets = [0, 96], sizes = [8, 32], strides = [1, 1]} : vector<8x128xf32> to vector<8x32xf32>
    %255 = arith.mulf %252, %219 : vector<8x32xf32>
    %256 = arith.mulf %251, %253 : vector<8x32xf32>
    %257 = arith.addf %255, %256 : vector<8x32xf32>
    %258 = math.tanh %257 : vector<8x32xf32>
    %259 = arith.mulf %254, %258 : vector<8x32xf32>
    %260 = vector.extract_strided_slice %9 {offsets = [56, 0], sizes = [8, 128], strides = [1, 1]} : vector<64x128xf32> to vector<8x128xf32>
    %cst_49 = arith.constant dense<0.000000e+00> : vector<8x128xf32>
    %261 = tpu.matmul %239, %2, %cst_49 {dimension_numbers = #tpu.dot_dimension_numbers<[1], [0], [0], [1], [0, 0, 1, 1], [], []>} : vector<8x32xf32>, vector<32x128xf32>, vector<8x128xf32> -> vector<8x128xf32>
    %262 = arith.addf %260, %261 : vector<8x128xf32>
    %263 = arith.negf %262 : vector<8x128xf32>
    %264 = math.exp %263 : vector<8x128xf32>
    %cst_50 = arith.constant 1.000000e+00 : f32
    %265 = vector.broadcast %cst_50 : f32 to vector<8x128xf32>
    %266 = arith.addf %265, %264 : vector<8x128xf32>
    %267 = arith.divf %265, %266 : vector<8x128xf32>
    %268 = math.tanh %262 : vector<8x128xf32>
    %269 = vector.extract_strided_slice %267 {offsets = [0, 0], sizes = [8, 32], strides = [1, 1]} : vector<8x128xf32> to vector<8x32xf32>
    %270 = vector.extract_strided_slice %267 {offsets = [0, 32], sizes = [8, 32], strides = [1, 1]} : vector<8x128xf32> to vector<8x32xf32>
    %271 = vector.extract_strided_slice %268 {offsets = [0, 64], sizes = [8, 32], strides = [1, 1]} : vector<8x128xf32> to vector<8x32xf32>
    %272 = vector.extract_strided_slice %267 {offsets = [0, 96], sizes = [8, 32], strides = [1, 1]} : vector<8x128xf32> to vector<8x32xf32>
    %273 = arith.mulf %270, %237 : vector<8x32xf32>
    %274 = arith.mulf %269, %271 : vector<8x32xf32>
    %275 = arith.addf %273, %274 : vector<8x32xf32>
    %276 = math.tanh %275 : vector<8x32xf32>
    %277 = arith.mulf %272, %276 : vector<8x32xf32>
    %cst_51 = arith.constant dense<0.000000e+00> : vector<8x128xf32>
    %278 = tpu.matmul %239, %1, %cst_51 {dimension_numbers = #tpu.dot_dimension_numbers<[1], [0], [0], [1], [0, 0, 1, 1], [], []>} : vector<8x32xf32>, vector<32x128xf32>, vector<8x128xf32> -> vector<8x128xf32>
    %279 = vector.broadcast %5 : vector<1x128xf32> to vector<8x128xf32>
    %280 = arith.addf %278, %279 : vector<8x128xf32>
    %cst_52 = arith.constant dense<0.000000e+00> : vector<8x128xf32>
    %281 = tpu.matmul %259, %3, %cst_52 {dimension_numbers = #tpu.dot_dimension_numbers<[1], [0], [0], [1], [0, 0, 1, 1], [], []>} : vector<8x32xf32>, vector<32x128xf32>, vector<8x128xf32> -> vector<8x128xf32>
    %282 = arith.addf %280, %281 : vector<8x128xf32>
    %283 = arith.negf %282 : vector<8x128xf32>
    %284 = math.exp %283 : vector<8x128xf32>
    %cst_53 = arith.constant 1.000000e+00 : f32
    %285 = vector.broadcast %cst_53 : f32 to vector<8x128xf32>
    %286 = arith.addf %285, %284 : vector<8x128xf32>
    %287 = arith.divf %285, %286 : vector<8x128xf32>
    %288 = math.tanh %282 : vector<8x128xf32>
    %289 = vector.extract_strided_slice %287 {offsets = [0, 0], sizes = [8, 32], strides = [1, 1]} : vector<8x128xf32> to vector<8x32xf32>
    %290 = vector.extract_strided_slice %287 {offsets = [0, 32], sizes = [8, 32], strides = [1, 1]} : vector<8x128xf32> to vector<8x32xf32>
    %291 = vector.extract_strided_slice %288 {offsets = [0, 64], sizes = [8, 32], strides = [1, 1]} : vector<8x128xf32> to vector<8x32xf32>
    %292 = vector.extract_strided_slice %287 {offsets = [0, 96], sizes = [8, 32], strides = [1, 1]} : vector<8x128xf32> to vector<8x32xf32>
    %293 = arith.mulf %290, %257 : vector<8x32xf32>
    %294 = arith.mulf %289, %291 : vector<8x32xf32>
    %295 = arith.addf %293, %294 : vector<8x32xf32>
    %296 = math.tanh %295 : vector<8x32xf32>
    %297 = arith.mulf %292, %296 : vector<8x32xf32>
    %cst_54 = arith.constant dense<0.000000e+00> : vector<8x128xf32>
    %298 = tpu.matmul %277, %1, %cst_54 {dimension_numbers = #tpu.dot_dimension_numbers<[1], [0], [0], [1], [0, 0, 1, 1], [], []>} : vector<8x32xf32>, vector<32x128xf32>, vector<8x128xf32> -> vector<8x128xf32>
    %299 = vector.broadcast %5 : vector<1x128xf32> to vector<8x128xf32>
    %300 = arith.addf %298, %299 : vector<8x128xf32>
    %cst_55 = arith.constant dense<0.000000e+00> : vector<8x128xf32>
    %301 = tpu.matmul %297, %3, %cst_55 {dimension_numbers = #tpu.dot_dimension_numbers<[1], [0], [0], [1], [0, 0, 1, 1], [], []>} : vector<8x32xf32>, vector<32x128xf32>, vector<8x128xf32> -> vector<8x128xf32>
    %302 = arith.addf %300, %301 : vector<8x128xf32>
    %303 = arith.negf %302 : vector<8x128xf32>
    %304 = math.exp %303 : vector<8x128xf32>
    %cst_56 = arith.constant 1.000000e+00 : f32
    %305 = vector.broadcast %cst_56 : f32 to vector<8x128xf32>
    %306 = arith.addf %305, %304 : vector<8x128xf32>
    %307 = arith.divf %305, %306 : vector<8x128xf32>
    %308 = math.tanh %302 : vector<8x128xf32>
    %309 = vector.extract_strided_slice %307 {offsets = [0, 0], sizes = [8, 32], strides = [1, 1]} : vector<8x128xf32> to vector<8x32xf32>
    %310 = vector.extract_strided_slice %307 {offsets = [0, 32], sizes = [8, 32], strides = [1, 1]} : vector<8x128xf32> to vector<8x32xf32>
    %311 = vector.extract_strided_slice %308 {offsets = [0, 64], sizes = [8, 32], strides = [1, 1]} : vector<8x128xf32> to vector<8x32xf32>
    %312 = vector.extract_strided_slice %307 {offsets = [0, 96], sizes = [8, 32], strides = [1, 1]} : vector<8x128xf32> to vector<8x32xf32>
    %313 = arith.mulf %310, %295 : vector<8x32xf32>
    %314 = arith.mulf %309, %311 : vector<8x32xf32>
    %315 = arith.addf %313, %314 : vector<8x32xf32>
    %316 = math.tanh %315 : vector<8x32xf32>
    %317 = arith.mulf %312, %316 : vector<8x32xf32>
    %318 = tpu.concatenate %69, %107, %145, %183, %221, %259, %297, %317 in 1 : vector<8x32xf32>, vector<8x32xf32>, vector<8x32xf32>, vector<8x32xf32>, vector<8x32xf32>, vector<8x32xf32>, vector<8x32xf32>, vector<8x32xf32> -> vector<8x256xf32>
    %c0_57 = arith.constant 0 : index
    %c0_58 = arith.constant 0 : index
    %319 = vector.load %arg7[%c0_57, %c0_58] : memref<256x8xf32, #tpu.memory_space<vmem>>, vector<256x8xf32>
    %cst_59 = arith.constant dense<0.000000e+00> : vector<8x8xf32>
    %320 = tpu.matmul %318, %319, %cst_59 {dimension_numbers = #tpu.dot_dimension_numbers<[1], [0], [0], [1], [0, 0, 1, 1], [], []>} : vector<8x256xf32>, vector<256x8xf32>, vector<8x8xf32> -> vector<8x8xf32>
    %c0_60 = arith.constant 0 : index
    %321 = memref.load %arg8[%c0_60] : memref<1xf32, #tpu.memory_space<smem>>
    %322 = vector.broadcast %321 : f32 to vector<8x8xf32>
    %323 = arith.addf %320, %322 : vector<8x8xf32>
    %cst_61 = arith.constant dense<0xFF800000> : vector<8xf32>
    %324 = vector.multi_reduction <maximumf>, %323, %cst_61 [1] : vector<8x8xf32> to vector<8xf32>
    %325 = vector.shape_cast %324 : vector<8xf32> to vector<8x1xf32>
    %326 = vector.broadcast %325 : vector<8x1xf32> to vector<8x8xf32>
    %327 = arith.subf %323, %326 : vector<8x8xf32>
    %328 = math.exp %327 : vector<8x8xf32>
    %cst_62 = arith.constant dense<0.000000e+00> : vector<8xf32>
    %329 = vector.multi_reduction <add>, %328, %cst_62 [1] : vector<8x8xf32> to vector<8xf32>
    %330 = vector.shape_cast %329 : vector<8xf32> to vector<8x1xf32>
    %331 = vector.broadcast %330 : vector<8x1xf32> to vector<8x8xf32>
    %332 = arith.divf %328, %331 : vector<8x8xf32>
    %333 = vector.extract_strided_slice %332 {offsets = [0, 0], sizes = [8, 1], strides = [1, 1]} : vector<8x8xf32> to vector<8x1xf32>
    %334 = vector.broadcast %333 : vector<8x1xf32> to vector<8x32xf32>
    %335 = arith.mulf %69, %334 : vector<8x32xf32>
    %336 = vector.extract_strided_slice %332 {offsets = [0, 1], sizes = [8, 1], strides = [1, 1]} : vector<8x8xf32> to vector<8x1xf32>
    %337 = vector.broadcast %336 : vector<8x1xf32> to vector<8x32xf32>
    %338 = arith.mulf %107, %337 : vector<8x32xf32>
    %339 = vector.extract_strided_slice %332 {offsets = [0, 2], sizes = [8, 1], strides = [1, 1]} : vector<8x8xf32> to vector<8x1xf32>
    %340 = vector.broadcast %339 : vector<8x1xf32> to vector<8x32xf32>
    %341 = arith.mulf %145, %340 : vector<8x32xf32>
    %342 = vector.extract_strided_slice %332 {offsets = [0, 3], sizes = [8, 1], strides = [1, 1]} : vector<8x8xf32> to vector<8x1xf32>
    %343 = vector.broadcast %342 : vector<8x1xf32> to vector<8x32xf32>
    %344 = arith.mulf %183, %343 : vector<8x32xf32>
    %345 = vector.extract_strided_slice %332 {offsets = [0, 4], sizes = [8, 1], strides = [1, 1]} : vector<8x8xf32> to vector<8x1xf32>
    %346 = vector.broadcast %345 : vector<8x1xf32> to vector<8x32xf32>
    %347 = arith.mulf %221, %346 : vector<8x32xf32>
    %348 = vector.extract_strided_slice %332 {offsets = [0, 5], sizes = [8, 1], strides = [1, 1]} : vector<8x8xf32> to vector<8x1xf32>
    %349 = vector.broadcast %348 : vector<8x1xf32> to vector<8x32xf32>
    %350 = arith.mulf %259, %349 : vector<8x32xf32>
    %351 = vector.extract_strided_slice %332 {offsets = [0, 6], sizes = [8, 1], strides = [1, 1]} : vector<8x8xf32> to vector<8x1xf32>
    %352 = vector.broadcast %351 : vector<8x1xf32> to vector<8x32xf32>
    %353 = arith.mulf %297, %352 : vector<8x32xf32>
    %354 = vector.extract_strided_slice %332 {offsets = [0, 7], sizes = [8, 1], strides = [1, 1]} : vector<8x8xf32> to vector<8x1xf32>
    %355 = vector.broadcast %354 : vector<8x1xf32> to vector<8x32xf32>
    %356 = arith.mulf %317, %355 : vector<8x32xf32>
    %357 = arith.addf %335, %338 : vector<8x32xf32>
    %358 = arith.addf %341, %344 : vector<8x32xf32>
    %359 = arith.addf %347, %350 : vector<8x32xf32>
    %360 = arith.addf %353, %356 : vector<8x32xf32>
    %361 = arith.addf %357, %358 : vector<8x32xf32>
    %362 = arith.addf %359, %360 : vector<8x32xf32>
    %363 = arith.addf %361, %362 : vector<8x32xf32>
    %c0_63 = arith.constant 0 : index
    %c0_64 = arith.constant 0 : index
    %364 = vector.load %arg9[%c0_63, %c0_64] : memref<32x4xf32, #tpu.memory_space<vmem>>, vector<32x4xf32>
    %cst_65 = arith.constant dense<0.000000e+00> : vector<8x4xf32>
    %365 = tpu.matmul %363, %364, %cst_65 {dimension_numbers = #tpu.dot_dimension_numbers<[1], [0], [0], [1], [0, 0, 1, 1], [], []>} : vector<8x32xf32>, vector<32x4xf32>, vector<8x4xf32> -> vector<8x4xf32>
    %c0_66 = arith.constant 0 : index
    %c0_67 = arith.constant 0 : index
    %366 = vector.load %arg10[%c0_66, %c0_67] : memref<1x4xf32, #tpu.memory_space<vmem>>, vector<1x4xf32>
    %367 = vector.broadcast %366 : vector<1x4xf32> to vector<8x4xf32>
    %368 = arith.addf %365, %367 : vector<8x4xf32>
    %c0_68 = arith.constant 0 : index
    %c0_69 = arith.constant 0 : index
    %369 = vector.load %arg11[%c0_68, %c0_69] : memref<8x4xf32, #tpu.memory_space<vmem>>, vector<8x4xf32>
    tpu.vector_store %arg11[%c0_68, %c0_69], %368 {strides = array<i32>} : memref<8x4xf32, #tpu.memory_space<vmem>>, vector<8x4xf32>,
    return
  }
}

</mosaic_0001>

<llo_original>
// kernel: lstm_attention_model.1
$region0: #{lstm_attention_model.1}
  #allocation0 [shape = 'u32[]', space=smem, size = 0x4, offset = 0x4, fixed_abs, tag = 'smem constant byte address 0x4 - core index']
  #allocation1 [shape = 'u32[144,128]{1,0:T(1,128)}', space=vmem, size = 0x12000, scoped, tag = 'internal scratch']
  #allocation2 [shape = 'f32[1]{0:T(128)S(6)}', space=smem, size = 0x200, scoped, tag = 'scoped memory for lstm_attention_model.1']
  %s0 = inlined_call_operand.vmem [shape: f32[64,16], index: 0, kind: input, shape index: {}]
  %s1 = inlined_call_operand.vmem [shape: f32[16,128], index: 1, kind: input, shape index: {}]
  %s2 = inlined_call_operand.vmem [shape: f32[32,128], index: 2, kind: input, shape index: {}]
  %s3 = inlined_call_operand.vmem [shape: f32[1,128], index: 3, kind: input, shape index: {}]
  %s4 = inlined_call_operand.vmem [shape: f32[32,128], index: 4, kind: input, shape index: {}]
  %s5 = inlined_call_operand.vmem [shape: f32[32,128], index: 5, kind: input, shape index: {}]
  %s6 = inlined_call_operand.vmem [shape: f32[1,128], index: 6, kind: input, shape index: {}]
  %s7 = inlined_call_operand.vmem [shape: f32[256,8], index: 7, kind: input, shape index: {}]
  %s8 = inlined_call_operand.<no memory space> [shape: f32[1], index: 8, kind: input, shape index: {}]
  %s9 = inlined_call_operand.vmem [shape: f32[32,4], index: 9, kind: input, shape index: {}]
  %s10 = inlined_call_operand.vmem [shape: f32[1,4], index: 10, kind: input, shape index: {}]
  %s11 = inlined_call_operand.vmem [shape: f32[8,4], index: 11, kind: output, shape index: {}]
  %s12 = sld [smem:[#allocation0]]
  $region54: #{lstm_attention_model.1} parent=0
    _
  %s14 = ssub.s32 1, %s12
  %s15 = scalar_select 0, %s14, %s12
  %16 = sst [smem:[#allocation2]] %s8
  // Predicated region
  $region2: #{lstm_attention_model.1} parent=0 // pred_check
    _
  $region3: #{lstm_attention_model.1} parent=0 // pred_check_branch
    %18 = sbr.rel (0) target = $region5
  $region4: #{lstm_attention_model.1} parent=0 // pred_region
    _
  $region5: #{lstm_attention_model.1} parent=0 // pred_fallthru
    _
  // Predicated region
  $region6: #{lstm_attention_model.1} parent=0 // pred_check
    _
  $region7: #{lstm_attention_model.1} parent=0 // pred_check_branch
    %20 = sbr.rel (0) target = $region9
  $region8: #{lstm_attention_model.1} parent=0 // pred_region
    _
  $region9: #{lstm_attention_model.1} parent=0 // pred_fallthru
    _
  // Predicated region
  $region10: #{lstm_attention_model.1} parent=0 // pred_check
    _
  $region11: #{lstm_attention_model.1} parent=0 // pred_check_branch
    %22 = sbr.rel (0) target = $region13
  $region12: #{lstm_attention_model.1} parent=0 // pred_region
    _
  $region13: #{lstm_attention_model.1} parent=0 // pred_fallthru
    _
  // Predicated region
  $region14: #{lstm_attention_model.1} parent=0 // pred_check
    _
  $region15: #{lstm_attention_model.1} parent=0 // pred_check_branch
    %24 = sbr.rel (0) target = $region17
  $region16: #{lstm_attention_model.1} parent=0 // pred_region
    _
  $region17: #{lstm_attention_model.1} parent=0 // pred_fallthru
    _
  // Predicated region
  $region18: #{lstm_attention_model.1} parent=0 // pred_check
    _
  $region19: #{lstm_attention_model.1} parent=0 // pred_check_branch
    %26 = sbr.rel (0) target = $region21
  $region20: #{lstm_attention_model.1} parent=0 // pred_region
    _
  $region21: #{lstm_attention_model.1} parent=0 // pred_fallthru
    _
  // Predicated region
  $region22: #{lstm_attention_model.1} parent=0 // pred_check
    _
  $region23: #{lstm_attention_model.1} parent=0 // pred_check_branch
    %28 = sbr.rel (0) target = $region25
  $region24: #{lstm_attention_model.1} parent=0 // pred_region
    _
  $region25: #{lstm_attention_model.1} parent=0 // pred_fallthru
    _
  // Predicated region
  $region26: #{lstm_attention_model.1} parent=0 // pred_check
    _
  $region27: #{lstm_attention_model.1} parent=0 // pred_check_branch
    %30 = sbr.rel (0) target = $region29
  $region28: #{lstm_attention_model.1} parent=0 // pred_region
    _
  $region29: #{lstm_attention_model.1} parent=0 // pred_fallthru
    _
  // Predicated region
  $region30: #{lstm_attention_model.1} parent=0 // pred_check
    _
  $region31: #{lstm_attention_model.1} parent=0 // pred_check_branch
    %32 = sbr.rel (0) target = $region33
  $region32: #{lstm_attention_model.1} parent=0 // pred_region
    _
  $region33: #{lstm_attention_model.1} parent=0 // pred_fallthru
    _
  // Predicated region
  $region34: #{lstm_attention_model.1} parent=0 // pred_check
    _
  $region35: #{lstm_attention_model.1} parent=0 // pred_check_branch
    %34 = sbr.rel (0) target = $region37
  $region36: #{lstm_attention_model.1} parent=0 // pred_region
    _
  $region37: #{lstm_attention_model.1} parent=0 // pred_fallthru
    _
  // Predicated region
  $region38: #{lstm_attention_model.1} parent=0 // pred_check
    _
  $region39: #{lstm_attention_model.1} parent=0 // pred_check_branch
    %36 = sbr.rel (0) target = $region41
  $region40: #{lstm_attention_model.1} parent=0 // pred_region
    _
  $region41: #{lstm_attention_model.1} parent=0 // pred_fallthru
    _
  // Predicated region
  $region42: #{lstm_attention_model.1} parent=0 // pred_check
    _
  $region43: #{lstm_attention_model.1} parent=0 // pred_check_branch
    %38 = sbr.rel (0) target = $region45
  $region44: #{lstm_attention_model.1} parent=0 // pred_region
    _
  $region45: #{lstm_attention_model.1} parent=0 // pred_fallthru
    _
  %v39 = vld [vmem:[%s1] sm:$0xff]
  %v40 = vld [vmem:[%s1 + $0x8] sm:$0xff]
  %v41 = vld [vmem:[%s4] sm:$0xff]
  %v42 = vld [vmem:[%s4 + $0x8] sm:$0xff]
  %v43 = vld [vmem:[%s4 + $0x10] sm:$0xff]
  %v44 = vld [vmem:[%s4 + $0x18] sm:$0xff]
  %v45 = vld [vmem:[%s2] sm:$0xff]
  %v46 = vld [vmem:[%s2 + $0x8] sm:$0xff]
  %v47 = vld [vmem:[%s2 + $0x10] sm:$0xff]
  %v48 = vld [vmem:[%s2 + $0x18] sm:$0xff]
  %v49 = vld [vmem:[%s5] sm:$0xff]
  %v50 = vld [vmem:[%s5 + $0x8] sm:$0xff]
  %v51 = vld [vmem:[%s5 + $0x10] sm:$0xff]
  %v52 = vld [vmem:[%s5 + $0x18] sm:$0xff]
  %v53 = vld [vmem:[%s3] sm:$0x1]
  %v54 = vld [vmem:[%s6] sm:$0x1]
  %v55 = vld [vmem:[%s0] sm:$0xff]
  %v56 = vld [vmem:[%s0 + $0x8] sm:$0xff]
  %v57 = vld [vmem:[%s0 + $0x10] sm:$0xff]
  %v58 = vld [vmem:[%s0 + $0x18] sm:$0xff]
  %v59 = vld [vmem:[%s0 + $0x20] sm:$0xff]
  %v60 = vld [vmem:[%s0 + $0x28] sm:$0xff]
  %v61 = vld [vmem:[%s0 + $0x30] sm:$0xff]
  %v62 = vld [vmem:[%s0 + $0x38] sm:$0xff]
  %v64 = vlaneseq
  %v65 = vshrl.u32 %v64, 7
  %v66 = vsub.s32 0, %v65
  %v67 = vrot.slane %v53, %v66
  %vm69 = vcmask 130048
  %v71 = vsel %vm69, %v55, 0
  %v74 = vsel %vm69, %v56, 0
  %v77 = vsel %vm69, %v57, 0
  %v80 = vsel %vm69, %v58, 0
  %v83 = vsel %vm69, %v59, 0
  %v86 = vsel %vm69, %v60, 0
  %v89 = vsel %vm69, %v61, 0
  %v92 = vsel %vm69, %v62, 0
  %94 = vmatprep.subr.mxu0 0.0
  %95 = vmatpush1.msra.mxu0 %v39
  %96 = vmatprep.subr.mxu0 0.0
  %97 = vmatpush1.msra.mxu0 %v40
  %98 = vmatprep.subr.mxu0 0.0
  %99 = vmatpush1.msra.mxu0 0.0
  %100 = vmatprep.subr.mxu0 0.0
  %101 = vmatpush1.msra.mxu0 0.0
  %102 = vmatprep.subr.mxu0 0.0
  %103 = vmatpush1.msra.mxu0 0.0
  %104 = vmatprep.subr.mxu0 0.0
  %105 = vmatpush1.msra.mxu0 0.0
  %106 = vmatprep.subr.mxu0 0.0
  %107 = vmatpush1.msra.mxu0 0.0
  %108 = vmatprep.subr.mxu0 0.0
  %109 = vmatpush1.msra.mxu0 0.0
  %110 = vmatprep.subr.mxu0 0.0
  %111 = vmatpush1.msra.mxu0 0.0
  %112 = vmatprep.subr.mxu0 0.0
  %113 = vmatpush1.msra.mxu0 0.0
  %114 = vmatprep.subr.mxu0 0.0
  %115 = vmatpush1.msra.mxu0 0.0
  %116 = vmatprep.subr.mxu0 0.0
  %117 = vmatpush1.msra.mxu0 0.0
  %118 = vmatprep.subr.mxu0 0.0
  %119 = vmatpush1.msra.mxu0 0.0
  %120 = vmatprep.subr.mxu0 0.0
  %121 = vmatpush1.msra.mxu0 0.0
  %122 = vmatprep.subr.mxu0 0.0
  %123 = vmatpush1.msra.mxu0 0.0
  %124 = vmatprep.subr.mxu0 0.0
  %125 = vmatpush1.msra.mxu0 0.0
  %126 = vmatprep.subr.mxu0 0.0
  %127 = vmatpush1.msra.mxu0 0.0
  %128 = vmatprep.subr.mxu0 0.0
  %129 = vmatpush1.msra.mxu0 0.0
  %130 = vmatprep.subr.mxu0 0.0
  %131 = vmatpush1.msra.mxu0 0.0
  %132 = vmatprep.subr.mxu0 0.0
  %133 = vmatpush1.msra.mxu0 0.0
  %134 = vmatprep.subr.mxu0 0.0
  %135 = vmatpush1.msra.mxu0 0.0
  %136 = vmatprep.subr.mxu0 0.0
  %137 = vmatpush1.msra.mxu0 0.0
  %138 = vmatprep.subr.mxu0 0.0
  %139 = vmatpush1.msra.mxu0 0.0
  %140 = vmatprep.subr.mxu0 0.0
  %141 = vmatpush1.msra.mxu0 0.0
  %142 = vmatprep.subr.mxu0 0.0
  %143 = vmatpush1.msra.mxu0 0.0
  %144 = vmatprep.subr.mxu0 0.0
  %145 = vmatpush1.msra.mxu0 0.0
  %146 = vmatprep.subr.mxu0 0.0
  %147 = vmatpush1.msra.mxu0 0.0
  %148 = vmatprep.subr.mxu0 0.0
  %149 = vmatpush1.msra.mxu0 0.0
  %150 = vmatprep.subr.mxu0 0.0
  %151 = vmatpush1.msra.mxu0 0.0
  %152 = vmatprep.subr.mxu0 0.0
  %153 = vmatpush1.msra.mxu0 0.0
  %154 = vmatprep.subr.mxu0 0.0
  %155 = vmatpush1.msra.mxu0 0.0
  %156 = vmatprep.subr.mxu0 0.0
  %157 = vmatpush1.msra.mxu0 0.0
  %158 = vmatprep.mubr.f32.mxu0 0.0
  %159 = vmatmul.mubr.f32.gmra.mrb[0].mxu0 %v71
  %v160 = vpop.f32.mrb[0].mxu0
  %v161 = vadd.f32 %v67, %v160
  %v162 = vpop.f32.mrb[0].mxu0
  %163 = vmatprep.mubr.f32.mxu0 0.0
  %164 = vmatmul.mubr.f32.gmra.mrb[0].mxu0 %v74
  %v165 = vpop.f32.mrb[0].mxu0
  %v166 = vadd.f32 %v67, %v165
  %v167 = vpop.f32.mrb[0].mxu0
  %168 = vmatprep.mubr.f32.mxu0 0.0
  %169 = vmatmul.mubr.f32.gmra.mrb[0].mxu0 %v77
  %v170 = vpop.f32.mrb[0].mxu0
  %v171 = vadd.f32 %v67, %v170
  %v172 = vpop.f32.mrb[0].mxu0
  %173 = vmatprep.mubr.f32.mxu0 0.0
  %174 = vmatmul.mubr.f32.gmra.mrb[0].mxu0 %v80
  %v175 = vpop.f32.mrb[0].mxu0
  %v176 = vadd.f32 %v67, %v175
  %v177 = vpop.f32.mrb[0].mxu0
  %178 = vmatprep.mubr.f32.mxu0 0.0
  %179 = vmatmul.mubr.f32.gmra.mrb[0].mxu0 %v83
  %v180 = vpop.f32.mrb[0].mxu0
  %v181 = vadd.f32 %v67, %v180
  %v182 = vpop.f32.mrb[0].mxu0
  %183 = vmatprep.mubr.f32.mxu0 0.0
  %184 = vmatmul.mubr.f32.gmra.mrb[0].mxu0 %v86
  %v185 = vpop.f32.mrb[0].mxu0
  %v186 = vadd.f32 %v67, %v185
  %v187 = vpop.f32.mrb[0].mxu0
  %188 = vmatprep.mubr.f32.mxu0 0.0
  %189 = vmatmul.mubr.f32.gmra.mrb[0].mxu0 %v89
  %v190 = vpop.f32.mrb[0].mxu0
  %v191 = vadd.f32 %v67, %v190
  %v192 = vpop.f32.mrb[0].mxu0
  %193 = vmatprep.mubr.f32.mxu0 0.0
  %194 = vmatmul.mubr.f32.gmra.mrb[0].mxu0 %v92
  %v195 = vpop.f32.mrb[0].mxu0
  %v196 = vadd.f32 %v67, %v195
  %v197 = vpop.f32.mrb[0].mxu0
  %198 = vdwg.mxu0
  %vm199 = vcmask 261120
  %v201 = vsel %vm199, 0.0, 0
  %203 = vmatprep.subr.mxu0 0.0
  %204 = vmatpush1.msra.mxu0 %v45
  %205 = vmatprep.subr.mxu0 0.0
  %206 = vmatpush1.msra.mxu0 %v46
  %207 = vmatprep.subr.mxu0 0.0
  %208 = vmatpush1.msra.mxu0 %v47
  %209 = vmatprep.subr.mxu0 0.0
  %210 = vmatpush1.msra.mxu0 %v48
  %211 = vmatprep.subr.mxu0 0.0
  %212 = vmatpush1.msra.mxu0 0.0
  %213 = vmatprep.subr.mxu0 0.0
  %214 = vmatpush1.msra.mxu0 0.0
  %215 = vmatprep.subr.mxu0 0.0
  %216 = vmatpush1.msra.mxu0 0.0
  %217 = vmatprep.subr.mxu0 0.0
  %218 = vmatpush1.msra.mxu0 0.0
  %219 = vmatprep.subr.mxu0 0.0
  %220 = vmatpush1.msra.mxu0 0.0
  %221 = vmatprep.subr.mxu0 0.0
  %222 = vmatpush1.msra.mxu0 0.0
  %223 = vmatprep.subr.mxu0 0.0
  %224 = vmatpush1.msra.mxu0 0.0
  %225 = vmatprep.subr.mxu0 0.0
  %226 = vmatpush1.msra.mxu0 0.0
  %227 = vmatprep.subr.mxu0 0.0
  %228 = vmatpush1.msra.mxu0 0.0
  %229 = vmatprep.subr.mxu0 0.0
  %230 = vmatpush1.msra.mxu0 0.0
  %231 = vmatprep.subr.mxu0 0.0
  %232 = vmatpush1.msra.mxu0 0.0
  %233 = vmatprep.subr.mxu0 0.0
  %234 = vmatpush1.msra.mxu0 0.0
  %235 = vmatprep.subr.mxu0 0.0
  %236 = vmatpush1.msra.mxu0 0.0
  %237 = vmatprep.subr.mxu0 0.0
  %238 = vmatpush1.msra.mxu0 0.0
  %239 = vmatprep.subr.mxu0 0.0
  %240 = vmatpush1.msra.mxu0 0.0
  %241 = vmatprep.subr.mxu0 0.0
  %242 = vmatpush1.msra.mxu0 0.0
  %243 = vmatprep.subr.mxu0 0.0
  %244 = vmatpush1.msra.mxu0 0.0
  %245 = vmatprep.subr.mxu0 0.0
  %246 = vmatpush1.msra.mxu0 0.0
  %247 = vmatprep.subr.mxu0 0.0
  %248 = vmatpush1.msra.mxu0 0.0
  %249 = vmatprep.subr.mxu0 0.0
  %250 = vmatpush1.msra.mxu0 0.0
  %251 = vmatprep.subr.mxu0 0.0
  %252 = vmatpush1.msra.mxu0 0.0
  %253 = vmatprep.subr.mxu0 0.0
  %254 = vmatpush1.msra.mxu0 0.0
  %255 = vmatprep.subr.mxu0 0.0
  %256 = vmatpush1.msra.mxu0 0.0
  %257 = vmatprep.subr.mxu0 0.0
  %258 = vmatpush1.msra.mxu0 0.0
  %259 = vmatprep.subr.mxu0 0.0
  %260 = vmatpush1.msra.mxu0 0.0
  %261 = vmatprep.subr.mxu0 0.0
  %262 = vmatpush1.msra.mxu0 0.0
  %263 = vmatprep.subr.mxu0 0.0
  %264 = vmatpush1.msra.mxu0 0.0
  %265 = vmatprep.subr.mxu0 0.0
  %266 = vmatpush1.msra.mxu0 0.0
  %267 = vmatprep.mubr.f32.mxu0 0.0
  %268 = vmatmul.mubr.f32.gmra.mrb[0].mxu0 %v201
  %v269 = vpop.f32.mrb[0].mxu0
  %v270 = vadd.f32 0.0, %v269
  %v271 = vpop.f32.mrb[0].mxu0
  %272 = vdwg.mxu0
  %v273 = vadd.f32 %v161, %v270
  %v274 = vxor.u32 %v273, 2147483648
  %v275 = vmul.f32 %v274, 1.442695
  %v276 = vpow.pop %v275
  %v277 = vadd.f32 %v276, 1.0
  %v278 = vrcp.pop %v277
  %v279 = vmul.f32 1.0, %v278
  %v280 = vtanh.pop %v273
  %v281 = vmul.f32 %v279, 0.0
  %283 = vrot.lane.b32.xlu0 %v280, 64
  %v284 = vpop.permute.xlu0 %283
  %v286 = vmul.f32 %v279, %v284
  %288 = vrot.lane.b32.xlu0 %v286, 32
  %v289 = vpop.permute.xlu0 %288
  %v291 = vadd.f32 %v281, %v289
  %v292 = vtanh.pop %v291
  %294 = vrot.lane.b32.xlu0 %v292, 64
  %v295 = vpop.permute.xlu0 %294
  %v297 = vmul.f32 %v279, %v295
  %299 = vrot.lane.b32.xlu0 %v297, 32
  %v300 = vpop.permute.xlu0 %299
  %v301 = vsel %vm199, %v300, 0
  %303 = vmatprep.subr.mxu0 0.0
  %304 = vmatpush1.msra.mxu0 %v45
  %305 = vmatprep.subr.mxu0 0.0
  %306 = vmatpush1.msra.mxu0 %v46
  %307 = vmatprep.subr.mxu0 0.0
  %308 = vmatpush1.msra.mxu0 %v47
  %309 = vmatprep.subr.mxu0 0.0
  %310 = vmatpush1.msra.mxu0 %v48
  %311 = vmatprep.subr.mxu0 0.0
  %312 = vmatpush1.msra.mxu0 0.0
  %313 = vmatprep.subr.mxu0 0.0
  %314 = vmatpush1.msra.mxu0 0.0
  %315 = vmatprep.subr.mxu0 0.0
  %316 = vmatpush1.msra.mxu0 0.0
  %317 = vmatprep.subr.mxu0 0.0
  %318 = vmatpush1.msra.mxu0 0.0
  %319 = vmatprep.subr.mxu0 0.0
  %320 = vmatpush1.msra.mxu0 0.0
  %321 = vmatprep.subr.mxu0 0.0
  %322 = vmatpush1.msra.mxu0 0.0
  %323 = vmatprep.subr.mxu0 0.0
  %324 = vmatpush1.msra.mxu0 0.0
  %325 = vmatprep.subr.mxu0 0.0
  %326 = vmatpush1.msra.mxu0 0.0
  %327 = vmatprep.subr.mxu0 0.0
  %328 = vmatpush1.msra.mxu0 0.0
  %329 = vmatprep.subr.mxu0 0.0
  %330 = vmatpush1.msra.mxu0 0.0
  %331 = vmatprep.subr.mxu0 0.0
  %332 = vmatpush1.msra.mxu0 0.0
  %333 = vmatprep.subr.mxu0 0.0
  %334 = vmatpush1.msra.mxu0 0.0
  %335 = vmatprep.subr.mxu0 0.0
  %336 = vmatpush1.msra.mxu0 0.0
  %337 = vmatprep.subr.mxu0 0.0
  %338 = vmatpush1.msra.mxu0 0.0
  %339 = vmatprep.subr.mxu0 0.0
  %340 = vmatpush1.msra.mxu0 0.0
  %341 = vmatprep.subr.mxu0 0.0
  %342 = vmatpush1.msra.mxu0 0.0
  %343 = vmatprep.subr.mxu0 0.0
  %344 = vmatpush1.msra.mxu0 0.0
  %345 = vmatprep.subr.mxu0 0.0
  %346 = vmatpush1.msra.mxu0 0.0
  %347 = vmatprep.subr.mxu0 0.0
  %348 = vmatpush1.msra.mxu0 0.0
  %349 = vmatprep.subr.mxu0 0.0
  %350 = vmatpush1.msra.mxu0 0.0
  %351 = vmatprep.subr.mxu0 0.0
  %352 = vmatpush1.msra.mxu0 0.0
  %353 = vmatprep.subr.mxu0 0.0
  %354 = vmatpush1.msra.mxu0 0.0
  %355 = vmatprep.subr.mxu0 0.0
  %356 = vmatpush1.msra.mxu0 0.0
  %357 = vmatprep.subr.mxu0 0.0
  %358 = vmatpush1.msra.mxu0 0.0
  %359 = vmatprep.subr.mxu0 0.0
  %360 = vmatpush1.msra.mxu0 0.0
  %361 = vmatprep.subr.mxu0 0.0
  %362 = vmatpush1.msra.mxu0 0.0
  %363 = vmatprep.subr.mxu0 0.0
  %364 = vmatpush1.msra.mxu0 0.0
  %365 = vmatprep.subr.mxu0 0.0
  %366 = vmatpush1.msra.mxu0 0.0
  %367 = vmatprep.mubr.f32.mxu0 0.0
  %368 = vmatmul.mubr.f32.gmra.mrb[0].mxu0 %v301
  %v369 = vpop.f32.mrb[0].mxu0
  %v370 = vadd.f32 0.0, %v369
  %v371 = vpop.f32.mrb[0].mxu0
  %372 = vdwg.mxu0
  %v373 = vadd.f32 %v166, %v370
  %v374 = vxor.u32 %v373, 2147483648
  %v375 = vmul.f32 %v374, 1.442695
  %v376 = vpow.pop %v375
  %v377 = vadd.f32 %v376, 1.0
  %v378 = vrcp.pop %v377
  %v379 = vmul.f32 1.0, %v378
  %v380 = vtanh.pop %v373
  %v381 = vmul.f32 %v379, %v291
  %383 = vrot.lane.b32.xlu0 %v380, 64
  %v384 = vpop.permute.xlu0 %383
  %v386 = vmul.f32 %v379, %v384
  %388 = vrot.lane.b32.xlu0 %v386, 32
  %v389 = vpop.permute.xlu0 %388
  %v391 = vadd.f32 %v381, %v389
  %v392 = vtanh.pop %v391
  %394 = vrot.lane.b32.xlu0 %v392, 64
  %v395 = vpop.permute.xlu0 %394
  %v397 = vmul.f32 %v379, %v395
  %v399 = vlaneseq
  %v400 = vshrl.u32 %v399, 7
  %v401 = vsub.s32 0, %v400
  %v402 = vrot.slane %v54, %v401
  %404 = vmatprep.subr.mxu0 0.0
  %405 = vmatpush1.msra.mxu0 %v41
  %406 = vmatprep.subr.mxu0 0.0
  %407 = vmatpush1.msra.mxu0 %v42
  %408 = vmatprep.subr.mxu0 0.0
  %409 = vmatpush1.msra.mxu0 %v43
  %410 = vmatprep.subr.mxu0 0.0
  %411 = vmatpush1.msra.mxu0 %v44
  %412 = vmatprep.subr.mxu0 0.0
  %413 = vmatpush1.msra.mxu0 0.0
  %414 = vmatprep.subr.mxu0 0.0
  %415 = vmatpush1.msra.mxu0 0.0
  %416 = vmatprep.subr.mxu0 0.0
  %417 = vmatpush1.msra.mxu0 0.0
  %418 = vmatprep.subr.mxu0 0.0
  %419 = vmatpush1.msra.mxu0 0.0
  %420 = vmatprep.subr.mxu0 0.0
  %421 = vmatpush1.msra.mxu0 0.0
  %422 = vmatprep.subr.mxu0 0.0
  %423 = vmatpush1.msra.mxu0 0.0
  %424 = vmatprep.subr.mxu0 0.0
  %425 = vmatpush1.msra.mxu0 0.0
  %426 = vmatprep.subr.mxu0 0.0
  %427 = vmatpush1.msra.mxu0 0.0
  %428 = vmatprep.subr.mxu0 0.0
  %429 = vmatpush1.msra.mxu0 0.0
  %430 = vmatprep.subr.mxu0 0.0
  %431 = vmatpush1.msra.mxu0 0.0
  %432 = vmatprep.subr.mxu0 0.0
  %433 = vmatpush1.msra.mxu0 0.0
  %434 = vmatprep.subr.mxu0 0.0
  %435 = vmatpush1.msra.mxu0 0.0
  %436 = vmatprep.subr.mxu0 0.0
  %437 = vmatpush1.msra.mxu0 0.0
  %438 = vmatprep.subr.mxu0 0.0
  %439 = vmatpush1.msra.mxu0 0.0
  %440 = vmatprep.subr.mxu0 0.0
  %441 = vmatpush1.msra.mxu0 0.0
  %442 = vmatprep.subr.mxu0 0.0
  %443 = vmatpush1.msra.mxu0 0.0
  %444 = vmatprep.subr.mxu0 0.0
  %445 = vmatpush1.msra.mxu0 0.0
  %446 = vmatprep.subr.mxu0 0.0
  %447 = vmatpush1.msra.mxu0 0.0
  %448 = vmatprep.subr.mxu0 0.0
  %449 = vmatpush1.msra.mxu0 0.0
  %450 = vmatprep.subr.mxu0 0.0
  %451 = vmatpush1.msra.mxu0 0.0
  %452 = vmatprep.subr.mxu0 0.0
  %453 = vmatpush1.msra.mxu0 0.0
  %454 = vmatprep.subr.mxu0 0.0
  %455 = vmatpush1.msra.mxu0 0.0
  %456 = vmatprep.subr.mxu0 0.0
  %457 = vmatpush1.msra.mxu0 0.0
  %458 = vmatprep.subr.mxu0 0.0
  %459 = vmatpush1.msra.mxu0 0.0
  %460 = vmatprep.subr.mxu0 0.0
  %461 = vmatpush1.msra.mxu0 0.0
  %462 = vmatprep.subr.mxu0 0.0
  %463 = vmatpush1.msra.mxu0 0.0
  %464 = vmatprep.subr.mxu0 0.0
  %465 = vmatpush1.msra.mxu0 0.0
  %466 = vmatprep.subr.mxu0 0.0
  %467 = vmatpush1.msra.mxu0 0.0
  %468 = vmatprep.mubr.f32.mxu0 0.0
  %469 = vmatmul.mubr.f32.gmra.mrb[0].mxu0 %v301
  %v470 = vpop.f32.mrb[0].mxu0
  %v471 = vadd.f32 %v402, %v470
  %v472 = vpop.f32.mrb[0].mxu0
  %473 = vdwg.mxu0
  %474 = vmatprep.subr.mxu0 0.0
  %475 = vmatpush1.msra.mxu0 %v49
  %476 = vmatprep.subr.mxu0 0.0
  %477 = vmatpush1.msra.mxu0 %v50
  %478 = vmatprep.subr.mxu0 0.0
  %479 = vmatpush1.msra.mxu0 %v51
  %480 = vmatprep.subr.mxu0 0.0
  %481 = vmatpush1.msra.mxu0 %v52
  %482 = vmatprep.subr.mxu0 0.0
  %483 = vmatpush1.msra.mxu0 0.0
  %484 = vmatprep.subr.mxu0 0.0
  %485 = vmatpush1.msra.mxu0 0.0
  %486 = vmatprep.subr.mxu0 0.0
  %487 = vmatpush1.msra.mxu0 0.0
  %488 = vmatprep.subr.mxu0 0.0
  %489 = vmatpush1.msra.mxu0 0.0
  %490 = vmatprep.subr.mxu0 0.0
  %491 = vmatpush1.msra.mxu0 0.0
  %492 = vmatprep.subr.mxu0 0.0
  %493 = vmatpush1.msra.mxu0 0.0
  %494 = vmatprep.subr.mxu0 0.0
  %495 = vmatpush1.msra.mxu0 0.0
  %496 = vmatprep.subr.mxu0 0.0
  %497 = vmatpush1.msra.mxu0 0.0
  %498 = vmatprep.subr.mxu0 0.0
  %499 = vmatpush1.msra.mxu0 0.0
  %500 = vmatprep.subr.mxu0 0.0
  %501 = vmatpush1.msra.mxu0 0.0
  %502 = vmatprep.subr.mxu0 0.0
  %503 = vmatpush1.msra.mxu0 0.0
  %504 = vmatprep.subr.mxu0 0.0
  %505 = vmatpush1.msra.mxu0 0.0
  %506 = vmatprep.subr.mxu0 0.0
  %507 = vmatpush1.msra.mxu0 0.0
  %508 = vmatprep.subr.mxu0 0.0
  %509 = vmatpush1.msra.mxu0 0.0
  %510 = vmatprep.subr.mxu0 0.0
  %511 = vmatpush1.msra.mxu0 0.0
  %512 = vmatprep.subr.mxu0 0.0
  %513 = vmatpush1.msra.mxu0 0.0
  %514 = vmatprep.subr.mxu0 0.0
  %515 = vmatpush1.msra.mxu0 0.0
  %516 = vmatprep.subr.mxu0 0.0
  %517 = vmatpush1.msra.mxu0 0.0
  %518 = vmatprep.subr.mxu0 0.0
  %519 = vmatpush1.msra.mxu0 0.0
  %520 = vmatprep.subr.mxu0 0.0
  %521 = vmatpush1.msra.mxu0 0.0
  %522 = vmatprep.subr.mxu0 0.0
  %523 = vmatpush1.msra.mxu0 0.0
  %524 = vmatprep.subr.mxu0 0.0
  %525 = vmatpush1.msra.mxu0 0.0
  %526 = vmatprep.subr.mxu0 0.0
  %527 = vmatpush1.msra.mxu0 0.0
  %528 = vmatprep.subr.mxu0 0.0
  %529 = vmatpush1.msra.mxu0 0.0
  %530 = vmatprep.subr.mxu0 0.0
  %531 = vmatpush1.msra.mxu0 0.0
  %532 = vmatprep.subr.mxu0 0.0
  %533 = vmatpush1.msra.mxu0 0.0
  %534 = vmatprep.subr.mxu0 0.0
  %535 = vmatpush1.msra.mxu0 0.0
  %536 = vmatprep.subr.mxu0 0.0
  %537 = vmatpush1.msra.mxu0 0.0
  %538 = vmatprep.mubr.f32.mxu0 0.0
  %539 = vmatmul.mubr.f32.gmra.mrb[0].mxu0 %v201
  %v540 = vpop.f32.mrb[0].mxu0
  %v541 = vadd.f32 0.0, %v540
  %v542 = vpop.f32.mrb[0].mxu0
  %543 = vdwg.mxu0
  %v544 = vadd.f32 %v471, %v541
  %v545 = vxor.u32 %v544, 2147483648
  %v546 = vmul.f32 %v545, 1.442695
  %v547 = vpow.pop %v546
  %v548 = vadd.f32 %v547, 1.0
  %v549 = vrcp.pop %v548
  %v550 = vmul.f32 1.0, %v549
  %v551 = vtanh.pop %v544
  %v552 = vmul.f32 %v550, 0.0
  %554 = vrot.lane.b32.xlu0 %v551, 64
  %v555 = vpop.permute.xlu0 %554
  %v557 = vmul.f32 %v550, %v555
  %559 = vrot.lane.b32.xlu0 %v557, 32
  %v560 = vpop.permute.xlu0 %559
  %v562 = vadd.f32 %v552, %v560
  %v563 = vtanh.pop %v562
  %565 = vrot.lane.b32.xlu0 %v563, 64
  %v566 = vpop.permute.xlu0 %565
  %v568 = vmul.f32 %v550, %v566
  %570 = vrot.lane.b32.xlu0 %v397, 32
  %v571 = vpop.permute.xlu0 %570
  %v572 = vsel %vm199, %v571, 0
  %574 = vmatprep.subr.mxu0 0.0
  %575 = vmatpush1.msra.mxu0 %v45
  %576 = vmatprep.subr.mxu0 0.0
  %577 = vmatpush1.msra.mxu0 %v46
  %578 = vmatprep.subr.mxu0 0.0
  %579 = vmatpush1.msra.mxu0 %v47
  %580 = vmatprep.subr.mxu0 0.0
  %581 = vmatpush1.msra.mxu0 %v48
  %582 = vmatprep.subr.mxu0 0.0
  %583 = vmatpush1.msra.mxu0 0.0
  %584 = vmatprep.subr.mxu0 0.0
  %585 = vmatpush1.msra.mxu0 0.0
  %586 = vmatprep.subr.mxu0 0.0
  %587 = vmatpush1.msra.mxu0 0.0
  %588 = vmatprep.subr.mxu0 0.0
  %589 = vmatpush1.msra.mxu0 0.0
  %590 = vmatprep.subr.mxu0 0.0
  %591 = vmatpush1.msra.mxu0 0.0
  %592 = vmatprep.subr.mxu0 0.0
  %593 = vmatpush1.msra.mxu0 0.0
  %594 = vmatprep.subr.mxu0 0.0
  %595 = vmatpush1.msra.mxu0 0.0
  %596 = vmatprep.subr.mxu0 0.0
  %597 = vmatpush1.msra.mxu0 0.0
  %598 = vmatprep.subr.mxu0 0.0
  %599 = vmatpush1.msra.mxu0 0.0
  %600 = vmatprep.subr.mxu0 0.0
  %601 = vmatpush1.msra.mxu0 0.0
  %602 = vmatprep.subr.mxu0 0.0
  %603 = vmatpush1.msra.mxu0 0.0
  %604 = vmatprep.subr.mxu0 0.0
  %605 = vmatpush1.msra.mxu0 0.0
  %606 = vmatprep.subr.mxu0 0.0
  %607 = vmatpush1.msra.mxu0 0.0
  %608 = vmatprep.subr.mxu0 0.0
  %609 = vmatpush1.msra.mxu0 0.0
  %610 = vmatprep.subr.mxu0 0.0
  %611 = vmatpush1.msra.mxu0 0.0
  %612 = vmatprep.subr.mxu0 0.0
  %613 = vmatpush1.msra.mxu0 0.0
  %614 = vmatprep.subr.mxu0 0.0
  %615 = vmatpush1.msra.mxu0 0.0
  %616 = vmatprep.subr.mxu0 0.0
  %617 = vmatpush1.msra.mxu0 0.0
  %618 = vmatprep.subr.mxu0 0.0
  %619 = vmatpush1.msra.mxu0 0.0
  %620 = vmatprep.subr.mxu0 0.0
  %621 = vmatpush1.msra.mxu0 0.0
  %622 = vmatprep.subr.mxu0 0.0
  %623 = vmatpush1.msra.mxu0 0.0
  %624 = vmatprep.subr.mxu0 0.0
  %625 = vmatpush1.msra.mxu0 0.0
  %626 = vmatprep.subr.mxu0 0.0
  %627 = vmatpush1.msra.mxu0 0.0
  %628 = vmatprep.subr.mxu0 0.0
  %629 = vmatpush1.msra.mxu0 0.0
  %630 = vmatprep.subr.mxu0 0.0
  %631 = vmatpush1.msra.mxu0 0.0
  %632 = vmatprep.subr.mxu0 0.0
  %633 = vmatpush1.msra.mxu0 0.0
  %634 = vmatprep.subr.mxu0 0.0
  %635 = vmatpush1.msra.mxu0 0.0
  %636 = vmatprep.subr.mxu0 0.0
  %637 = vmatpush1.msra.mxu0 0.0
  %638 = vmatprep.mubr.f32.mxu0 0.0
  %639 = vmatmul.mubr.f32.gmra.mrb[0].mxu0 %v572
  %v640 = vpop.f32.mrb[0].mxu0
  %v641 = vadd.f32 0.0, %v640
  %v642 = vpop.f32.mrb[0].mxu0
  %643 = vdwg.mxu0
  %v644 = vadd.f32 %v171, %v641
  %v645 = vxor.u32 %v644, 2147483648
  %v646 = vmul.f32 %v645, 1.442695
  %v647 = vpow.pop %v646
  %v648 = vadd.f32 %v647, 1.0
  %v649 = vrcp.pop %v648
  %v650 = vmul.f32 1.0, %v649
  %v651 = vtanh.pop %v644
  %v652 = vmul.f32 %v650, %v391
  %654 = vrot.lane.b32.xlu0 %v651, 64
  %v655 = vpop.permute.xlu0 %654
  %v657 = vmul.f32 %v650, %v655
  %659 = vrot.lane.b32.xlu0 %v657, 32
  %v660 = vpop.permute.xlu0 %659
  %v662 = vadd.f32 %v652, %v660
  %v663 = vtanh.pop %v662
  %665 = vrot.lane.b32.xlu0 %v663, 64
  %v666 = vpop.permute.xlu0 %665
  %v668 = vmul.f32 %v650, %v666
  %669 = vmatprep.subr.mxu0 0.0
  %670 = vmatpush1.msra.mxu0 %v41
  %671 = vmatprep.subr.mxu0 0.0
  %672 = vmatpush1.msra.mxu0 %v42
  %673 = vmatprep.subr.mxu0 0.0
  %674 = vmatpush1.msra.mxu0 %v43
  %675 = vmatprep.subr.mxu0 0.0
  %676 = vmatpush1.msra.mxu0 %v44
  %677 = vmatprep.subr.mxu0 0.0
  %678 = vmatpush1.msra.mxu0 0.0
  %679 = vmatprep.subr.mxu0 0.0
  %680 = vmatpush1.msra.mxu0 0.0
  %681 = vmatprep.subr.mxu0 0.0
  %682 = vmatpush1.msra.mxu0 0.0
  %683 = vmatprep.subr.mxu0 0.0
  %684 = vmatpush1.msra.mxu0 0.0
  %685 = vmatprep.subr.mxu0 0.0
  %686 = vmatpush1.msra.mxu0 0.0
  %687 = vmatprep.subr.mxu0 0.0
  %688 = vmatpush1.msra.mxu0 0.0
  %689 = vmatprep.subr.mxu0 0.0
  %690 = vmatpush1.msra.mxu0 0.0
  %691 = vmatprep.subr.mxu0 0.0
  %692 = vmatpush1.msra.mxu0 0.0
  %693 = vmatprep.subr.mxu0 0.0
  %694 = vmatpush1.msra.mxu0 0.0
  %695 = vmatprep.subr.mxu0 0.0
  %696 = vmatpush1.msra.mxu0 0.0
  %697 = vmatprep.subr.mxu0 0.0
  %698 = vmatpush1.msra.mxu0 0.0
  %699 = vmatprep.subr.mxu0 0.0
  %700 = vmatpush1.msra.mxu0 0.0
  %701 = vmatprep.subr.mxu0 0.0
  %702 = vmatpush1.msra.mxu0 0.0
  %703 = vmatprep.subr.mxu0 0.0
  %704 = vmatpush1.msra.mxu0 0.0
  %705 = vmatprep.subr.mxu0 0.0
  %706 = vmatpush1.msra.mxu0 0.0
  %707 = vmatprep.subr.mxu0 0.0
  %708 = vmatpush1.msra.mxu0 0.0
  %709 = vmatprep.subr.mxu0 0.0
  %710 = vmatpush1.msra.mxu0 0.0
  %711 = vmatprep.subr.mxu0 0.0
  %712 = vmatpush1.msra.mxu0 0.0
  %713 = vmatprep.subr.mxu0 0.0
  %714 = vmatpush1.msra.mxu0 0.0
  %715 = vmatprep.subr.mxu0 0.0
  %716 = vmatpush1.msra.mxu0 0.0
  %717 = vmatprep.subr.mxu0 0.0
  %718 = vmatpush1.msra.mxu0 0.0
  %719 = vmatprep.subr.mxu0 0.0
  %720 = vmatpush1.msra.mxu0 0.0
  %721 = vmatprep.subr.mxu0 0.0
  %722 = vmatpush1.msra.mxu0 0.0
  %723 = vmatprep.subr.mxu0 0.0
  %724 = vmatpush1.msra.mxu0 0.0
  %725 = vmatprep.subr.mxu0 0.0
  %726 = vmatpush1.msra.mxu0 0.0
  %727 = vmatprep.subr.mxu0 0.0
  %728 = vmatpush1.msra.mxu0 0.0
  %729 = vmatprep.subr.mxu0 0.0
  %730 = vmatpush1.msra.mxu0 0.0
  %731 = vmatprep.subr.mxu0 0.0
  %732 = vmatpush1.msra.mxu0 0.0
  %733 = vmatprep.mubr.f32.mxu0 0.0
  %734 = vmatmul.mubr.f32.gmra.mrb[0].mxu0 %v572
  %v735 = vpop.f32.mrb[0].mxu0
  %v736 = vadd.f32 %v402, %v735
  %v737 = vpop.f32.mrb[0].mxu0
  %738 = vdwg.mxu0
  %740 = vrot.lane.b32.xlu0 %v568, 32
  %v741 = vpop.permute.xlu0 %740
  %v742 = vsel %vm199, %v741, 0
  %744 = vmatprep.subr.mxu0 0.0
  %745 = vmatpush1.msra.mxu0 %v49
  %746 = vmatprep.subr.mxu0 0.0
  %747 = vmatpush1.msra.mxu0 %v50
  %748 = vmatprep.subr.mxu0 0.0
  %749 = vmatpush1.msra.mxu0 %v51
  %750 = vmatprep.subr.mxu0 0.0
  %751 = vmatpush1.msra.mxu0 %v52
  %752 = vmatprep.subr.mxu0 0.0
  %753 = vmatpush1.msra.mxu0 0.0
  %754 = vmatprep.subr.mxu0 0.0
  %755 = vmatpush1.msra.mxu0 0.0
  %756 = vmatprep.subr.mxu0 0.0
  %757 = vmatpush1.msra.mxu0 0.0
  %758 = vmatprep.subr.mxu0 0.0
  %759 = vmatpush1.msra.mxu0 0.0
  %760 = vmatprep.subr.mxu0 0.0
  %761 = vmatpush1.msra.mxu0 0.0
  %762 = vmatprep.subr.mxu0 0.0
  %763 = vmatpush1.msra.mxu0 0.0
  %764 = vmatprep.subr.mxu0 0.0
  %765 = vmatpush1.msra.mxu0 0.0
  %766 = vmatprep.subr.mxu0 0.0
  %767 = vmatpush1.msra.mxu0 0.0
  %768 = vmatprep.subr.mxu0 0.0
  %769 = vmatpush1.msra.mxu0 0.0
  %770 = vmatprep.subr.mxu0 0.0
  %771 = vmatpush1.msra.mxu0 0.0
  %772 = vmatprep.subr.mxu0 0.0
  %773 = vmatpush1.msra.mxu0 0.0
  %774 = vmatprep.subr.mxu0 0.0
  %775 = vmatpush1.msra.mxu0 0.0
  %776 = vmatprep.subr.mxu0 0.0
  %777 = vmatpush1.msra.mxu0 0.0
  %778 = vmatprep.subr.mxu0 0.0
  %779 = vmatpush1.msra.mxu0 0.0
  %780 = vmatprep.subr.mxu0 0.0
  %781 = vmatpush1.msra.mxu0 0.0
  %782 = vmatprep.subr.mxu0 0.0
  %783 = vmatpush1.msra.mxu0 0.0
  %784 = vmatprep.subr.mxu0 0.0
  %785 = vmatpush1.msra.mxu0 0.0
  %786 = vmatprep.subr.mxu0 0.0
  %787 = vmatpush1.msra.mxu0 0.0
  %788 = vmatprep.subr.mxu0 0.0
  %789 = vmatpush1.msra.mxu0 0.0
  %790 = vmatprep.subr.mxu0 0.0
  %791 = vmatpush1.msra.mxu0 0.0
  %792 = vmatprep.subr.mxu0 0.0
  %793 = vmatpush1.msra.mxu0 0.0
  %794 = vmatprep.subr.mxu0 0.0
  %795 = vmatpush1.msra.mxu0 0.0
  %796 = vmatprep.subr.mxu0 0.0
  %797 = vmatpush1.msra.mxu0 0.0
  %798 = vmatprep.subr.mxu0 0.0
  %799 = vmatpush1.msra.mxu0 0.0
  %800 = vmatprep.subr.mxu0 0.0
  %801 = vmatpush1.msra.mxu0 0.0
  %802 = vmatprep.subr.mxu0 0.0
  %803 = vmatpush1.msra.mxu0 0.0
  %804 = vmatprep.subr.mxu0 0.0
  %805 = vmatpush1.msra.mxu0 0.0
  %806 = vmatprep.subr.mxu0 0.0
  %807 = vmatpush1.msra.mxu0 0.0
  %808 = vmatprep.mubr.f32.mxu0 0.0
  %809 = vmatmul.mubr.f32.gmra.mrb[0].mxu0 %v742
  %v810 = vpop.f32.mrb[0].mxu0
  %v811 = vadd.f32 0.0, %v810
  %v812 = vpop.f32.mrb[0].mxu0
  %813 = vdwg.mxu0
  %v814 = vadd.f32 %v736, %v811
  %v815 = vxor.u32 %v814, 2147483648
  %v816 = vmul.f32 %v815, 1.442695
  %v817 = vpow.pop %v816
  %v818 = vadd.f32 %v817, 1.0
  %v819 = vrcp.pop %v818
  %v820 = vmul.f32 1.0, %v819
  %v821 = vtanh.pop %v814
  %v822 = vmul.f32 %v820, %v562
  %824 = vrot.lane.b32.xlu0 %v821, 64
  %v825 = vpop.permute.xlu0 %824
  %v827 = vmul.f32 %v820, %v825
  %829 = vrot.lane.b32.xlu0 %v827, 32
  %v830 = vpop.permute.xlu0 %829
  %v832 = vadd.f32 %v822, %v830
  %v833 = vtanh.pop %v832
  %835 = vrot.lane.b32.xlu0 %v833, 64
  %v836 = vpop.permute.xlu0 %835
  %v838 = vmul.f32 %v820, %v836
  %840 = vrot.lane.b32.xlu0 %v668, 32
  %v841 = vpop.permute.xlu0 %840
  %v842 = vsel %vm199, %v841, 0
  %844 = vmatprep.subr.mxu0 0.0
  %845 = vmatpush1.msra.mxu0 %v45
  %846 = vmatprep.subr.mxu0 0.0
  %847 = vmatpush1.msra.mxu0 %v46
  %848 = vmatprep.subr.mxu0 0.0
  %849 = vmatpush1.msra.mxu0 %v47
  %850 = vmatprep.subr.mxu0 0.0
  %851 = vmatpush1.msra.mxu0 %v48
  %852 = vmatprep.subr.mxu0 0.0
  %853 = vmatpush1.msra.mxu0 0.0
  %854 = vmatprep.subr.mxu0 0.0
  %855 = vmatpush1.msra.mxu0 0.0
  %856 = vmatprep.subr.mxu0 0.0
  %857 = vmatpush1.msra.mxu0 0.0
  %858 = vmatprep.subr.mxu0 0.0
  %859 = vmatpush1.msra.mxu0 0.0
  %860 = vmatprep.subr.mxu0 0.0
  %861 = vmatpush1.msra.mxu0 0.0
  %862 = vmatprep.subr.mxu0 0.0
  %863 = vmatpush1.msra.mxu0 0.0
  %864 = vmatprep.subr.mxu0 0.0
  %865 = vmatpush1.msra.mxu0 0.0
  %866 = vmatprep.subr.mxu0 0.0
  %867 = vmatpush1.msra.mxu0 0.0
  %868 = vmatprep.subr.mxu0 0.0
  %869 = vmatpush1.msra.mxu0 0.0
  %870 = vmatprep.subr.mxu0 0.0
  %871 = vmatpush1.msra.mxu0 0.0
  %872 = vmatprep.subr.mxu0 0.0
  %873 = vmatpush1.msra.mxu0 0.0
  %874 = vmatprep.subr.mxu0 0.0
  %875 = vmatpush1.msra.mxu0 0.0
  %876 = vmatprep.subr.mxu0 0.0
  %877 = vmatpush1.msra.mxu0 0.0
  %878 = vmatprep.subr.mxu0 0.0
  %879 = vmatpush1.msra.mxu0 0.0
  %880 = vmatprep.subr.mxu0 0.0
  %881 = vmatpush1.msra.mxu0 0.0
  %882 = vmatprep.subr.mxu0 0.0
  %883 = vmatpush1.msra.mxu0 0.0
  %884 = vmatprep.subr.mxu0 0.0
  %885 = vmatpush1.msra.mxu0 0.0
  %886 = vmatprep.subr.mxu0 0.0
  %887 = vmatpush1.msra.mxu0 0.0
  %888 = vmatprep.subr.mxu0 0.0
  %889 = vmatpush1.msra.mxu0 0.0
  %890 = vmatprep.subr.mxu0 0.0
  %891 = vmatpush1.msra.mxu0 0.0
  %892 = vmatprep.subr.mxu0 0.0
  %893 = vmatpush1.msra.mxu0 0.0
  %894 = vmatprep.subr.mxu0 0.0
  %895 = vmatpush1.msra.mxu0 0.0
  %896 = vmatprep.subr.mxu0 0.0
  %897 = vmatpush1.msra.mxu0 0.0
  %898 = vmatprep.subr.mxu0 0.0
  %899 = vmatpush1.msra.mxu0 0.0
  %900 = vmatprep.subr.mxu0 0.0
  %901 = vmatpush1.msra.mxu0 0.0
  %902 = vmatprep.subr.mxu0 0.0
  %903 = vmatpush1.msra.mxu0 0.0
  %904 = vmatprep.subr.mxu0 0.0
  %905 = vmatpush1.msra.mxu0 0.0
  %906 = vmatprep.subr.mxu0 0.0
  %907 = vmatpush1.msra.mxu0 0.0
  %908 = vmatprep.mubr.f32.mxu0 0.0
  %909 = vmatmul.mubr.f32.gmra.mrb[0].mxu0 %v842
  %v910 = vpop.f32.mrb[0].mxu0
  %v911 = vadd.f32 0.0, %v910
  %v912 = vpop.f32.mrb[0].mxu0
  %913 = vdwg.mxu0
  %v914 = vadd.f32 %v176, %v911
  %v915 = vxor.u32 %v914, 2147483648
  %v916 = vmul.f32 %v915, 1.442695
  %v917 = vpow.pop %v916
  %v918 = vadd.f32 %v917, 1.0
  %v919 = vrcp.pop %v918
  %v920 = vmul.f32 1.0, %v919
  %v921 = vtanh.pop %v914
  %v922 = vmul.f32 %v920, %v662
  %924 = vrot.lane.b32.xlu0 %v921, 64
  %v925 = vpop.permute.xlu0 %924
  %v927 = vmul.f32 %v920, %v925
  %929 = vrot.lane.b32.xlu0 %v927, 32
  %v930 = vpop.permute.xlu0 %929
  %v932 = vadd.f32 %v922, %v930
  %v933 = vtanh.pop %v932
  %935 = vrot.lane.b32.xlu0 %v933, 64
  %v936 = vpop.permute.xlu0 %935
  %v938 = vmul.f32 %v920, %v936
  %939 = vmatprep.subr.mxu0 0.0
  %940 = vmatpush1.msra.mxu0 %v41
  %941 = vmatprep.subr.mxu0 0.0
  %942 = vmatpush1.msra.mxu0 %v42
  %943 = vmatprep.subr.mxu0 0.0
  %944 = vmatpush1.msra.mxu0 %v43
  %945 = vmatprep.subr.mxu0 0.0
  %946 = vmatpush1.msra.mxu0 %v44
  %947 = vmatprep.subr.mxu0 0.0
  %948 = vmatpush1.msra.mxu0 0.0
  %949 = vmatprep.subr.mxu0 0.0
  %950 = vmatpush1.msra.mxu0 0.0
  %951 = vmatprep.subr.mxu0 0.0
  %952 = vmatpush1.msra.mxu0 0.0
  %953 = vmatprep.subr.mxu0 0.0
  %954 = vmatpush1.msra.mxu0 0.0
  %955 = vmatprep.subr.mxu0 0.0
  %956 = vmatpush1.msra.mxu0 0.0
  %957 = vmatprep.subr.mxu0 0.0
  %958 = vmatpush1.msra.mxu0 0.0
  %959 = vmatprep.subr.mxu0 0.0
  %960 = vmatpush1.msra.mxu0 0.0
  %961 = vmatprep.subr.mxu0 0.0
  %962 = vmatpush1.msra.mxu0 0.0
  %963 = vmatprep.subr.mxu0 0.0
  %964 = vmatpush1.msra.mxu0 0.0
  %965 = vmatprep.subr.mxu0 0.0
  %966 = vmatpush1.msra.mxu0 0.0
  %967 = vmatprep.subr.mxu0 0.0
  %968 = vmatpush1.msra.mxu0 0.0
  %969 = vmatprep.subr.mxu0 0.0
  %970 = vmatpush1.msra.mxu0 0.0
  %971 = vmatprep.subr.mxu0 0.0
  %972 = vmatpush1.msra.mxu0 0.0
  %973 = vmatprep.subr.mxu0 0.0
  %974 = vmatpush1.msra.mxu0 0.0
  %975 = vmatprep.subr.mxu0 0.0
  %976 = vmatpush1.msra.mxu0 0.0
  %977 = vmatprep.subr.mxu0 0.0
  %978 = vmatpush1.msra.mxu0 0.0
  %979 = vmatprep.subr.mxu0 0.0
  %980 = vmatpush1.msra.mxu0 0.0
  %981 = vmatprep.subr.mxu0 0.0
  %982 = vmatpush1.msra.mxu0 0.0
  %983 = vmatprep.subr.mxu0 0.0
  %984 = vmatpush1.msra.mxu0 0.0
  %985 = vmatprep.subr.mxu0 0.0
  %986 = vmatpush1.msra.mxu0 0.0
  %987 = vmatprep.subr.mxu0 0.0
  %988 = vmatpush1.msra.mxu0 0.0
  %989 = vmatprep.subr.mxu0 0.0
  %990 = vmatpush1.msra.mxu0 0.0
  %991 = vmatprep.subr.mxu0 0.0
  %992 = vmatpush1.msra.mxu0 0.0
  %993 = vmatprep.subr.mxu0 0.0
  %994 = vmatpush1.msra.mxu0 0.0
  %995 = vmatprep.subr.mxu0 0.0
  %996 = vmatpush1.msra.mxu0 0.0
  %997 = vmatprep.subr.mxu0 0.0
  %998 = vmatpush1.msra.mxu0 0.0
  %999 = vmatprep.subr.mxu0 0.0
  %1000 = vmatpush1.msra.mxu0 0.0
  %1001 = vmatprep.subr.mxu0 0.0
  %1002 = vmatpush1.msra.mxu0 0.0
  %1003 = vmatprep.mubr.f32.mxu0 0.0
  %1004 = vmatmul.mubr.f32.gmra.mrb[0].mxu0 %v842
  %v1005 = vpop.f32.mrb[0].mxu0
  %v1006 = vadd.f32 %v402, %v1005
  %v1007 = vpop.f32.mrb[0].mxu0
  %1008 = vdwg.mxu0
  %1010 = vrot.lane.b32.xlu0 %v838, 32
  %v1011 = vpop.permute.xlu0 %1010
  %v1012 = vsel %vm199, %v1011, 0
  %1014 = vmatprep.subr.mxu0 0.0
  %1015 = vmatpush1.msra.mxu0 %v49
  %1016 = vmatprep.subr.mxu0 0.0
  %1017 = vmatpush1.msra.mxu0 %v50
  %1018 = vmatprep.subr.mxu0 0.0
  %1019 = vmatpush1.msra.mxu0 %v51
  %1020 = vmatprep.subr.mxu0 0.0
  %1021 = vmatpush1.msra.mxu0 %v52
  %1022 = vmatprep.subr.mxu0 0.0
  %1023 = vmatpush1.msra.mxu0 0.0
  %1024 = vmatprep.subr.mxu0 0.0
  %1025 = vmatpush1.msra.mxu0 0.0
  %1026 = vmatprep.subr.mxu0 0.0
  %1027 = vmatpush1.msra.mxu0 0.0
  %1028 = vmatprep.subr.mxu0 0.0
  %1029 = vmatpush1.msra.mxu0 0.0
  %1030 = vmatprep.subr.mxu0 0.0
  %1031 = vmatpush1.msra.mxu0 0.0
  %1032 = vmatprep.subr.mxu0 0.0
  %1033 = vmatpush1.msra.mxu0 0.0
  %1034 = vmatprep.subr.mxu0 0.0
  %1035 = vmatpush1.msra.mxu0 0.0
  %1036 = vmatprep.subr.mxu0 0.0
  %1037 = vmatpush1.msra.mxu0 0.0
  %1038 = vmatprep.subr.mxu0 0.0
  %1039 = vmatpush1.msra.mxu0 0.0
  %1040 = vmatprep.subr.mxu0 0.0
  %1041 = vmatpush1.msra.mxu0 0.0
  %1042 = vmatprep.subr.mxu0 0.0
  %1043 = vmatpush1.msra.mxu0 0.0
  %1044 = vmatprep.subr.mxu0 0.0
  %1045 = vmatpush1.msra.mxu0 0.0
  %1046 = vmatprep.subr.mxu0 0.0
  %1047 = vmatpush1.msra.mxu0 0.0
  %1048 = vmatprep.subr.mxu0 0.0
  %1049 = vmatpush1.msra.mxu0 0.0
  %1050 = vmatprep.subr.mxu0 0.0
  %1051 = vmatpush1.msra.mxu0 0.0
  %1052 = vmatprep.subr.mxu0 0.0
  %1053 = vmatpush1.msra.mxu0 0.0
  %1054 = vmatprep.subr.mxu0 0.0
  %1055 = vmatpush1.msra.mxu0 0.0
  %1056 = vmatprep.subr.mxu0 0.0
  %1057 = vmatpush1.msra.mxu0 0.0
  %1058 = vmatprep.subr.mxu0 0.0
  %1059 = vmatpush1.msra.mxu0 0.0
  %1060 = vmatprep.subr.mxu0 0.0
  %1061 = vmatpush1.msra.mxu0 0.0
  %1062 = vmatprep.subr.mxu0 0.0
  %1063 = vmatpush1.msra.mxu0 0.0
  %1064 = vmatprep.subr.mxu0 0.0
  %1065 = vmatpush1.msra.mxu0 0.0
  %1066 = vmatprep.subr.mxu0 0.0
  %1067 = vmatpush1.msra.mxu0 0.0
  %1068 = vmatprep.subr.mxu0 0.0
  %1069 = vmatpush1.msra.mxu0 0.0
  %1070 = vmatprep.subr.mxu0 0.0
  %1071 = vmatpush1.msra.mxu0 0.0
  %1072 = vmatprep.subr.mxu0 0.0
  %1073 = vmatpush1.msra.mxu0 0.0
  %1074 = vmatprep.subr.mxu0 0.0
  %1075 = vmatpush1.msra.mxu0 0.0
  %1076 = vmatprep.subr.mxu0 0.0
  %1077 = vmatpush1.msra.mxu0 0.0
  %1078 = vmatprep.mubr.f32.mxu0 0.0
  %1079 = vmatmul.mubr.f32.gmra.mrb[0].mxu0 %v1012
  %v1080 = vpop.f32.mrb[0].mxu0
  %v1081 = vadd.f32 0.0, %v1080
  %v1082 = vpop.f32.mrb[0].mxu0
  %1083 = vdwg.mxu0
  %v1084 = vadd.f32 %v1006, %v1081
  %v1085 = vxor.u32 %v1084, 2147483648
  %v1086 = vmul.f32 %v1085, 1.442695
  %v1087 = vpow.pop %v1086
  %v1088 = vadd.f32 %v1087, 1.0
  %v1089 = vrcp.pop %v1088
  %v1090 = vmul.f32 1.0, %v1089
  %v1091 = vtanh.pop %v1084
  %v1092 = vmul.f32 %v1090, %v832
  %1094 = vrot.lane.b32.xlu0 %v1091, 64
  %v1095 = vpop.permute.xlu0 %1094
  %v1097 = vmul.f32 %v1090, %v1095
  %1099 = vrot.lane.b32.xlu0 %v1097, 32
  %v1100 = vpop.permute.xlu0 %1099
  %v1102 = vadd.f32 %v1092, %v1100
  %v1103 = vtanh.pop %v1102
  %1105 = vrot.lane.b32.xlu0 %v1103, 64
  %v1106 = vpop.permute.xlu0 %1105
  %v1108 = vmul.f32 %v1090, %v1106
  %1110 = vrot.lane.b32.xlu0 %v938, 32
  %v1111 = vpop.permute.xlu0 %1110
  %v1112 = vsel %vm199, %v1111, 0
  %1114 = vmatprep.subr.mxu0 0.0
  %1115 = vmatpush1.msra.mxu0 %v45
  %1116 = vmatprep.subr.mxu0 0.0
  %1117 = vmatpush1.msra.mxu0 %v46
  %1118 = vmatprep.subr.mxu0 0.0
  %1119 = vmatpush1.msra.mxu0 %v47
  %1120 = vmatprep.subr.mxu0 0.0
  %1121 = vmatpush1.msra.mxu0 %v48
  %1122 = vmatprep.subr.mxu0 0.0
  %1123 = vmatpush1.msra.mxu0 0.0
  %1124 = vmatprep.subr.mxu0 0.0
  %1125 = vmatpush1.msra.mxu0 0.0
  %1126 = vmatprep.subr.mxu0 0.0
  %1127 = vmatpush1.msra.mxu0 0.0
  %1128 = vmatprep.subr.mxu0 0.0
  %1129 = vmatpush1.msra.mxu0 0.0
  %1130 = vmatprep.subr.mxu0 0.0
  %1131 = vmatpush1.msra.mxu0 0.0
  %1132 = vmatprep.subr.mxu0 0.0
  %1133 = vmatpush1.msra.mxu0 0.0
  %1134 = vmatprep.subr.mxu0 0.0
  %1135 = vmatpush1.msra.mxu0 0.0
  %1136 = vmatprep.subr.mxu0 0.0
  %1137 = vmatpush1.msra.mxu0 0.0
  %1138 = vmatprep.subr.mxu0 0.0
  %1139 = vmatpush1.msra.mxu0 0.0
  %1140 = vmatprep.subr.mxu0 0.0
  %1141 = vmatpush1.msra.mxu0 0.0
  %1142 = vmatprep.subr.mxu0 0.0
  %1143 = vmatpush1.msra.mxu0 0.0
  %1144 = vmatprep.subr.mxu0 0.0
  %1145 = vmatpush1.msra.mxu0 0.0
  %1146 = vmatprep.subr.mxu0 0.0
  %1147 = vmatpush1.msra.mxu0 0.0
  %1148 = vmatprep.subr.mxu0 0.0
  %1149 = vmatpush1.msra.mxu0 0.0
  %1150 = vmatprep.subr.mxu0 0.0
  %1151 = vmatpush1.msra.mxu0 0.0
  %1152 = vmatprep.subr.mxu0 0.0
  %1153 = vmatpush1.msra.mxu0 0.0
  %1154 = vmatprep.subr.mxu0 0.0
  %1155 = vmatpush1.msra.mxu0 0.0
  %1156 = vmatprep.subr.mxu0 0.0
  %1157 = vmatpush1.msra.mxu0 0.0
  %1158 = vmatprep.subr.mxu0 0.0
  %1159 = vmatpush1.msra.mxu0 0.0
  %1160 = vmatprep.subr.mxu0 0.0
  %1161 = vmatpush1.msra.mxu0 0.0
  %1162 = vmatprep.subr.mxu0 0.0
  %1163 = vmatpush1.msra.mxu0 0.0
  %1164 = vmatprep.subr.mxu0 0.0
  %1165 = vmatpush1.msra.mxu0 0.0
  %1166 = vmatprep.subr.mxu0 0.0
  %1167 = vmatpush1.msra.mxu0 0.0
  %1168 = vmatprep.subr.mxu0 0.0
  %1169 = vmatpush1.msra.mxu0 0.0
  %1170 = vmatprep.subr.mxu0 0.0
  %1171 = vmatpush1.msra.mxu0 0.0
  %1172 = vmatprep.subr.mxu0 0.0
  %1173 = vmatpush1.msra.mxu0 0.0
  %1174 = vmatprep.subr.mxu0 0.0
  %1175 = vmatpush1.msra.mxu0 0.0
  %1176 = vmatprep.subr.mxu0 0.0
  %1177 = vmatpush1.msra.mxu0 0.0
  %1178 = vmatprep.mubr.f32.mxu0 0.0
  %1179 = vmatmul.mubr.f32.gmra.mrb[0].mxu0 %v1112
  %v1180 = vpop.f32.mrb[0].mxu0
  %v1181 = vadd.f32 0.0, %v1180
  %v1182 = vpop.f32.mrb[0].mxu0
  %1183 = vdwg.mxu0
  %v1184 = vadd.f32 %v181, %v1181
  %v1185 = vxor.u32 %v1184, 2147483648
  %v1186 = vmul.f32 %v1185, 1.442695
  %v1187 = vpow.pop %v1186
  %v1188 = vadd.f32 %v1187, 1.0
  %v1189 = vrcp.pop %v1188
  %v1190 = vmul.f32 1.0, %v1189
  %v1191 = vtanh.pop %v1184
  %v1192 = vmul.f32 %v1190, %v932
  %1194 = vrot.lane.b32.xlu0 %v1191, 64
  %v1195 = vpop.permute.xlu0 %1194
  %v1197 = vmul.f32 %v1190, %v1195
  %1199 = vrot.lane.b32.xlu0 %v1197, 32
  %v1200 = vpop.permute.xlu0 %1199
  %v1202 = vadd.f32 %v1192, %v1200
  %v1203 = vtanh.pop %v1202
  %1205 = vrot.lane.b32.xlu0 %v1203, 64
  %v1206 = vpop.permute.xlu0 %1205
  %v1208 = vmul.f32 %v1190, %v1206
  %1209 = vmatprep.subr.mxu0 0.0
  %1210 = vmatpush1.msra.mxu0 %v41
  %1211 = vmatprep.subr.mxu0 0.0
  %1212 = vmatpush1.msra.mxu0 %v42
  %1213 = vmatprep.subr.mxu0 0.0
  %1214 = vmatpush1.msra.mxu0 %v43
  %1215 = vmatprep.subr.mxu0 0.0
  %1216 = vmatpush1.msra.mxu0 %v44
  %1217 = vmatprep.subr.mxu0 0.0
  %1218 = vmatpush1.msra.mxu0 0.0
  %1219 = vmatprep.subr.mxu0 0.0
  %1220 = vmatpush1.msra.mxu0 0.0
  %1221 = vmatprep.subr.mxu0 0.0
  %1222 = vmatpush1.msra.mxu0 0.0
  %1223 = vmatprep.subr.mxu0 0.0
  %1224 = vmatpush1.msra.mxu0 0.0
  %1225 = vmatprep.subr.mxu0 0.0
  %1226 = vmatpush1.msra.mxu0 0.0
  %1227 = vmatprep.subr.mxu0 0.0
  %1228 = vmatpush1.msra.mxu0 0.0
  %1229 = vmatprep.subr.mxu0 0.0
  %1230 = vmatpush1.msra.mxu0 0.0
  %1231 = vmatprep.subr.mxu0 0.0
  %1232 = vmatpush1.msra.mxu0 0.0
  %1233 = vmatprep.subr.mxu0 0.0
  %1234 = vmatpush1.msra.mxu0 0.0
  %1235 = vmatprep.subr.mxu0 0.0
  %1236 = vmatpush1.msra.mxu0 0.0
  %1237 = vmatprep.subr.mxu0 0.0
  %1238 = vmatpush1.msra.mxu0 0.0
  %1239 = vmatprep.subr.mxu0 0.0
  %1240 = vmatpush1.msra.mxu0 0.0
  %1241 = vmatprep.subr.mxu0 0.0
  %1242 = vmatpush1.msra.mxu0 0.0
  %1243 = vmatprep.subr.mxu0 0.0
  %1244 = vmatpush1.msra.mxu0 0.0
  %1245 = vmatprep.subr.mxu0 0.0
  %1246 = vmatpush1.msra.mxu0 0.0
  %1247 = vmatprep.subr.mxu0 0.0
  %1248 = vmatpush1.msra.mxu0 0.0
  %1249 = vmatprep.subr.mxu0 0.0
  %1250 = vmatpush1.msra.mxu0 0.0
  %1251 = vmatprep.subr.mxu0 0.0
  %1252 = vmatpush1.msra.mxu0 0.0
  %1253 = vmatprep.subr.mxu0 0.0
  %1254 = vmatpush1.msra.mxu0 0.0
  %1255 = vmatprep.subr.mxu0 0.0
  %1256 = vmatpush1.msra.mxu0 0.0
  %1257 = vmatprep.subr.mxu0 0.0
  %1258 = vmatpush1.msra.mxu0 0.0
  %1259 = vmatprep.subr.mxu0 0.0
  %1260 = vmatpush1.msra.mxu0 0.0
  %1261 = vmatprep.subr.mxu0 0.0
  %1262 = vmatpush1.msra.mxu0 0.0
  %1263 = vmatprep.subr.mxu0 0.0
  %1264 = vmatpush1.msra.mxu0 0.0
  %1265 = vmatprep.subr.mxu0 0.0
  %1266 = vmatpush1.msra.mxu0 0.0
  %1267 = vmatprep.subr.mxu0 0.0
  %1268 = vmatpush1.msra.mxu0 0.0
  %1269 = vmatprep.subr.mxu0 0.0
  %1270 = vmatpush1.msra.mxu0 0.0
  %1271 = vmatprep.subr.mxu0 0.0
  %1272 = vmatpush1.msra.mxu0 0.0
  %1273 = vmatprep.mubr.f32.mxu0 0.0
  %1274 = vmatmul.mubr.f32.gmra.mrb[0].mxu0 %v1112
  %v1275 = vpop.f32.mrb[0].mxu0
  %v1276 = vadd.f32 %v402, %v1275
  %v1277 = vpop.f32.mrb[0].mxu0
  %1278 = vdwg.mxu0
  %1280 = vrot.lane.b32.xlu0 %v1108, 32
  %v1281 = vpop.permute.xlu0 %1280
  %v1282 = vsel %vm199, %v1281, 0
  %1284 = vmatprep.subr.mxu0 0.0
  %1285 = vmatpush1.msra.mxu0 %v49
  %1286 = vmatprep.subr.mxu0 0.0
  %1287 = vmatpush1.msra.mxu0 %v50
  %1288 = vmatprep.subr.mxu0 0.0
  %1289 = vmatpush1.msra.mxu0 %v51
  %1290 = vmatprep.subr.mxu0 0.0
  %1291 = vmatpush1.msra.mxu0 %v52
  %1292 = vmatprep.subr.mxu0 0.0
  %1293 = vmatpush1.msra.mxu0 0.0
  %1294 = vmatprep.subr.mxu0 0.0
  %1295 = vmatpush1.msra.mxu0 0.0
  %1296 = vmatprep.subr.mxu0 0.0
  %1297 = vmatpush1.msra.mxu0 0.0
  %1298 = vmatprep.subr.mxu0 0.0
  %1299 = vmatpush1.msra.mxu0 0.0
  %1300 = vmatprep.subr.mxu0 0.0
  %1301 = vmatpush1.msra.mxu0 0.0
  %1302 = vmatprep.subr.mxu0 0.0
  %1303 = vmatpush1.msra.mxu0 0.0
  %1304 = vmatprep.subr.mxu0 0.0
  %1305 = vmatpush1.msra.mxu0 0.0
  %1306 = vmatprep.subr.mxu0 0.0
  %1307 = vmatpush1.msra.mxu0 0.0
  %1308 = vmatprep.subr.mxu0 0.0
  %1309 = vmatpush1.msra.mxu0 0.0
  %1310 = vmatprep.subr.mxu0 0.0
  %1311 = vmatpush1.msra.mxu0 0.0
  %1312 = vmatprep.subr.mxu0 0.0
  %1313 = vmatpush1.msra.mxu0 0.0
  %1314 = vmatprep.subr.mxu0 0.0
  %1315 = vmatpush1.msra.mxu0 0.0
  %1316 = vmatprep.subr.mxu0 0.0
  %1317 = vmatpush1.msra.mxu0 0.0
  %1318 = vmatprep.subr.mxu0 0.0
  %1319 = vmatpush1.msra.mxu0 0.0
  %1320 = vmatprep.subr.mxu0 0.0
  %1321 = vmatpush1.msra.mxu0 0.0
  %1322 = vmatprep.subr.mxu0 0.0
  %1323 = vmatpush1.msra.mxu0 0.0
  %1324 = vmatprep.subr.mxu0 0.0
  %1325 = vmatpush1.msra.mxu0 0.0
  %1326 = vmatprep.subr.mxu0 0.0
  %1327 = vmatpush1.msra.mxu0 0.0
  %1328 = vmatprep.subr.mxu0 0.0
  %1329 = vmatpush1.msra.mxu0 0.0
  %1330 = vmatprep.subr.mxu0 0.0
  %1331 = vmatpush1.msra.mxu0 0.0
  %1332 = vmatprep.subr.mxu0 0.0
  %1333 = vmatpush1.msra.mxu0 0.0
  %1334 = vmatprep.subr.mxu0 0.0
  %1335 = vmatpush1.msra.mxu0 0.0
  %1336 = vmatprep.subr.mxu0 0.0
  %1337 = vmatpush1.msra.mxu0 0.0
  %1338 = vmatprep.subr.mxu0 0.0
  %1339 = vmatpush1.msra.mxu0 0.0
  %1340 = vmatprep.subr.mxu0 0.0
  %1341 = vmatpush1.msra.mxu0 0.0
  %1342 = vmatprep.subr.mxu0 0.0
  %1343 = vmatpush1.msra.mxu0 0.0
  %1344 = vmatprep.subr.mxu0 0.0
  %1345 = vmatpush1.msra.mxu0 0.0
  %1346 = vmatprep.subr.mxu0 0.0
  %1347 = vmatpush1.msra.mxu0 0.0
  %1348 = vmatprep.mubr.f32.mxu0 0.0
  %1349 = vmatmul.mubr.f32.gmra.mrb[0].mxu0 %v1282
  %v1350 = vpop.f32.mrb[0].mxu0
  %v1351 = vadd.f32 0.0, %v1350
  %v1352 = vpop.f32.mrb[0].mxu0
  %1353 = vdwg.mxu0
  %v1354 = vadd.f32 %v1276, %v1351
  %v1355 = vxor.u32 %v1354, 2147483648
  %v1356 = vmul.f32 %v1355, 1.442695
  %v1357 = vpow.pop %v1356
  %v1358 = vadd.f32 %v1357, 1.0
  %v1359 = vrcp.pop %v1358
  %v1360 = vmul.f32 1.0, %v1359
  %v1361 = vtanh.pop %v1354
  %v1362 = vmul.f32 %v1360, %v1102
  %1364 = vrot.lane.b32.xlu0 %v1361, 64
  %v1365 = vpop.permute.xlu0 %1364
  %v1367 = vmul.f32 %v1360, %v1365
  %1369 = vrot.lane.b32.xlu0 %v1367, 32
  %v1370 = vpop.permute.xlu0 %1369
  %v1372 = vadd.f32 %v1362, %v1370
  %v1373 = vtanh.pop %v1372
  %1375 = vrot.lane.b32.xlu0 %v1373, 64
  %v1376 = vpop.permute.xlu0 %1375
  %v1378 = vmul.f32 %v1360, %v1376
  %1380 = vrot.lane.b32.xlu0 %v1208, 32
  %v1381 = vpop.permute.xlu0 %1380
  %v1382 = vsel %vm199, %v1381, 0
  %1384 = vmatprep.subr.mxu0 0.0
  %1385 = vmatpush1.msra.mxu0 %v45
  %1386 = vmatprep.subr.mxu0 0.0
  %1387 = vmatpush1.msra.mxu0 %v46
  %1388 = vmatprep.subr.mxu0 0.0
  %1389 = vmatpush1.msra.mxu0 %v47
  %1390 = vmatprep.subr.mxu0 0.0
  %1391 = vmatpush1.msra.mxu0 %v48
  %1392 = vmatprep.subr.mxu0 0.0
  %1393 = vmatpush1.msra.mxu0 0.0
  %1394 = vmatprep.subr.mxu0 0.0
  %1395 = vmatpush1.msra.mxu0 0.0
  %1396 = vmatprep.subr.mxu0 0.0
  %1397 = vmatpush1.msra.mxu0 0.0
  %1398 = vmatprep.subr.mxu0 0.0
  %1399 = vmatpush1.msra.mxu0 0.0
  %1400 = vmatprep.subr.mxu0 0.0
  %1401 = vmatpush1.msra.mxu0 0.0
  %1402 = vmatprep.subr.mxu0 0.0
  %1403 = vmatpush1.msra.mxu0 0.0
  %1404 = vmatprep.subr.mxu0 0.0
  %1405 = vmatpush1.msra.mxu0 0.0
  %1406 = vmatprep.subr.mxu0 0.0
  %1407 = vmatpush1.msra.mxu0 0.0
  %1408 = vmatprep.subr.mxu0 0.0
  %1409 = vmatpush1.msra.mxu0 0.0
  %1410 = vmatprep.subr.mxu0 0.0
  %1411 = vmatpush1.msra.mxu0 0.0
  %1412 = vmatprep.subr.mxu0 0.0
  %1413 = vmatpush1.msra.mxu0 0.0
  %1414 = vmatprep.subr.mxu0 0.0
  %1415 = vmatpush1.msra.mxu0 0.0
  %1416 = vmatprep.subr.mxu0 0.0
  %1417 = vmatpush1.msra.mxu0 0.0
  %1418 = vmatprep.subr.mxu0 0.0
  %1419 = vmatpush1.msra.mxu0 0.0
  %1420 = vmatprep.subr.mxu0 0.0
  %1421 = vmatpush1.msra.mxu0 0.0
  %1422 = vmatprep.subr.mxu0 0.0
  %1423 = vmatpush1.msra.mxu0 0.0
  %1424 = vmatprep.subr.mxu0 0.0
  %1425 = vmatpush1.msra.mxu0 0.0
  %1426 = vmatprep.subr.mxu0 0.0
  %1427 = vmatpush1.msra.mxu0 0.0
  %1428 = vmatprep.subr.mxu0 0.0
  %1429 = vmatpush1.msra.mxu0 0.0
  %1430 = vmatprep.subr.mxu0 0.0
  %1431 = vmatpush1.msra.mxu0 0.0
  %1432 = vmatprep.subr.mxu0 0.0
  %1433 = vmatpush1.msra.mxu0 0.0
  %1434 = vmatprep.subr.mxu0 0.0
  %1435 = vmatpush1.msra.mxu0 0.0
  %1436 = vmatprep.subr.mxu0 0.0
  %1437 = vmatpush1.msra.mxu0 0.0
  %1438 = vmatprep.subr.mxu0 0.0
  %1439 = vmatpush1.msra.mxu0 0.0
  %1440 = vmatprep.subr.mxu0 0.0
  %1441 = vmatpush1.msra.mxu0 0.0
  %1442 = vmatprep.subr.mxu0 0.0
  %1443 = vmatpush1.msra.mxu0 0.0
  %1444 = vmatprep.subr.mxu0 0.0
  %1445 = vmatpush1.msra.mxu0 0.0
  %1446 = vmatprep.subr.mxu0 0.0
  %1447 = vmatpush1.msra.mxu0 0.0
  %1448 = vmatprep.mubr.f32.mxu0 0.0
  %1449 = vmatmul.mubr.f32.gmra.mrb[0].mxu0 %v1382
  %v1450 = vpop.f32.mrb[0].mxu0
  %v1451 = vadd.f32 0.0, %v1450
  %v1452 = vpop.f32.mrb[0].mxu0
  %1453 = vdwg.mxu0
  %v1454 = vadd.f32 %v186, %v1451
  %v1455 = vxor.u32 %v1454, 2147483648
  %v1456 = vmul.f32 %v1455, 1.442695
  %v1457 = vpow.pop %v1456
  %v1458 = vadd.f32 %v1457, 1.0
  %v1459 = vrcp.pop %v1458
  %v1460 = vmul.f32 1.0, %v1459
  %v1461 = vtanh.pop %v1454
  %v1462 = vmul.f32 %v1460, %v1202
  %1464 = vrot.lane.b32.xlu0 %v1461, 64
  %v1465 = vpop.permute.xlu0 %1464
  %v1467 = vmul.f32 %v1460, %v1465
  %1469 = vrot.lane.b32.xlu0 %v1467, 32
  %v1470 = vpop.permute.xlu0 %1469
  %v1472 = vadd.f32 %v1462, %v1470
  %v1473 = vtanh.pop %v1472
  %1475 = vrot.lane.b32.xlu0 %v1473, 64
  %v1476 = vpop.permute.xlu0 %1475
  %v1478 = vmul.f32 %v1460, %v1476
  %1479 = vmatprep.subr.mxu0 0.0
  %1480 = vmatpush1.msra.mxu0 %v41
  %1481 = vmatprep.subr.mxu0 0.0
  %1482 = vmatpush1.msra.mxu0 %v42
  %1483 = vmatprep.subr.mxu0 0.0
  %1484 = vmatpush1.msra.mxu0 %v43
  %1485 = vmatprep.subr.mxu0 0.0
  %1486 = vmatpush1.msra.mxu0 %v44
  %1487 = vmatprep.subr.mxu0 0.0
  %1488 = vmatpush1.msra.mxu0 0.0
  %1489 = vmatprep.subr.mxu0 0.0
  %1490 = vmatpush1.msra.mxu0 0.0
  %1491 = vmatprep.subr.mxu0 0.0
  %1492 = vmatpush1.msra.mxu0 0.0
  %1493 = vmatprep.subr.mxu0 0.0
  %1494 = vmatpush1.msra.mxu0 0.0
  %1495 = vmatprep.subr.mxu0 0.0
  %1496 = vmatpush1.msra.mxu0 0.0
  %1497 = vmatprep.subr.mxu0 0.0
  %1498 = vmatpush1.msra.mxu0 0.0
  %1499 = vmatprep.subr.mxu0 0.0
  %1500 = vmatpush1.msra.mxu0 0.0
  %1501 = vmatprep.subr.mxu0 0.0
  %1502 = vmatpush1.msra.mxu0 0.0
  %1503 = vmatprep.subr.mxu0 0.0
  %1504 = vmatpush1.msra.mxu0 0.0
  %1505 = vmatprep.subr.mxu0 0.0
  %1506 = vmatpush1.msra.mxu0 0.0
  %1507 = vmatprep.subr.mxu0 0.0
  %1508 = vmatpush1.msra.mxu0 0.0
  %1509 = vmatprep.subr.mxu0 0.0
  %1510 = vmatpush1.msra.mxu0 0.0
  %1511 = vmatprep.subr.mxu0 0.0
  %1512 = vmatpush1.msra.mxu0 0.0
  %1513 = vmatprep.subr.mxu0 0.0
  %1514 = vmatpush1.msra.mxu0 0.0
  %1515 = vmatprep.subr.mxu0 0.0
  %1516 = vmatpush1.msra.mxu0 0.0
  %1517 = vmatprep.subr.mxu0 0.0
  %1518 = vmatpush1.msra.mxu0 0.0
  %1519 = vmatprep.subr.mxu0 0.0
  %1520 = vmatpush1.msra.mxu0 0.0
  %1521 = vmatprep.subr.mxu0 0.0
  %1522 = vmatpush1.msra.mxu0 0.0
  %1523 = vmatprep.subr.mxu0 0.0
  %1524 = vmatpush1.msra.mxu0 0.0
  %1525 = vmatprep.subr.mxu0 0.0
  %1526 = vmatpush1.msra.mxu0 0.0
  %1527 = vmatprep.subr.mxu0 0.0
  %1528 = vmatpush1.msra.mxu0 0.0
  %1529 = vmatprep.subr.mxu0 0.0
  %1530 = vmatpush1.msra.mxu0 0.0
  %1531 = vmatprep.subr.mxu0 0.0
  %1532 = vmatpush1.msra.mxu0 0.0
  %1533 = vmatprep.subr.mxu0 0.0
  %1534 = vmatpush1.msra.mxu0 0.0
  %1535 = vmatprep.subr.mxu0 0.0
  %1536 = vmatpush1.msra.mxu0 0.0
  %1537 = vmatprep.subr.mxu0 0.0
  %1538 = vmatpush1.msra.mxu0 0.0
  %1539 = vmatprep.subr.mxu0 0.0
  %1540 = vmatpush1.msra.mxu0 0.0
  %1541 = vmatprep.subr.mxu0 0.0
  %1542 = vmatpush1.msra.mxu0 0.0
  %1543 = vmatprep.mubr.f32.mxu0 0.0
  %1544 = vmatmul.mubr.f32.gmra.mrb[0].mxu0 %v1382
  %v1545 = vpop.f32.mrb[0].mxu0
  %v1546 = vadd.f32 %v402, %v1545
  %v1547 = vpop.f32.mrb[0].mxu0
  %1548 = vdwg.mxu0
  %1550 = vrot.lane.b32.xlu0 %v1378, 32
  %v1551 = vpop.permute.xlu0 %1550
  %v1552 = vsel %vm199, %v1551, 0
  %1554 = vmatprep.subr.mxu0 0.0
  %1555 = vmatpush1.msra.mxu0 %v49
  %1556 = vmatprep.subr.mxu0 0.0
  %1557 = vmatpush1.msra.mxu0 %v50
  %1558 = vmatprep.subr.mxu0 0.0
  %1559 = vmatpush1.msra.mxu0 %v51
  %1560 = vmatprep.subr.mxu0 0.0
  %1561 = vmatpush1.msra.mxu0 %v52
  %1562 = vmatprep.subr.mxu0 0.0
  %1563 = vmatpush1.msra.mxu0 0.0
  %1564 = vmatprep.subr.mxu0 0.0
  %1565 = vmatpush1.msra.mxu0 0.0
  %1566 = vmatprep.subr.mxu0 0.0
  %1567 = vmatpush1.msra.mxu0 0.0
  %1568 = vmatprep.subr.mxu0 0.0
  %1569 = vmatpush1.msra.mxu0 0.0
  %1570 = vmatprep.subr.mxu0 0.0
  %1571 = vmatpush1.msra.mxu0 0.0
  %1572 = vmatprep.subr.mxu0 0.0
  %1573 = vmatpush1.msra.mxu0 0.0
  %1574 = vmatprep.subr.mxu0 0.0
  %1575 = vmatpush1.msra.mxu0 0.0
  %1576 = vmatprep.subr.mxu0 0.0
  %1577 = vmatpush1.msra.mxu0 0.0
  %1578 = vmatprep.subr.mxu0 0.0
  %1579 = vmatpush1.msra.mxu0 0.0
  %1580 = vmatprep.subr.mxu0 0.0
  %1581 = vmatpush1.msra.mxu0 0.0
  %1582 = vmatprep.subr.mxu0 0.0
  %1583 = vmatpush1.msra.mxu0 0.0
  %1584 = vmatprep.subr.mxu0 0.0
  %1585 = vmatpush1.msra.mxu0 0.0
  %1586 = vmatprep.subr.mxu0 0.0
  %1587 = vmatpush1.msra.mxu0 0.0
  %1588 = vmatprep.subr.mxu0 0.0
  %1589 = vmatpush1.msra.mxu0 0.0
  %1590 = vmatprep.subr.mxu0 0.0
  %1591 = vmatpush1.msra.mxu0 0.0
  %1592 = vmatprep.subr.mxu0 0.0
  %1593 = vmatpush1.msra.mxu0 0.0
  %1594 = vmatprep.subr.mxu0 0.0
  %1595 = vmatpush1.msra.mxu0 0.0
  %1596 = vmatprep.subr.mxu0 0.0
  %1597 = vmatpush1.msra.mxu0 0.0
  %1598 = vmatprep.subr.mxu0 0.0
  %1599 = vmatpush1.msra.mxu0 0.0
  %1600 = vmatprep.subr.mxu0 0.0
  %1601 = vmatpush1.msra.mxu0 0.0
  %1602 = vmatprep.subr.mxu0 0.0
  %1603 = vmatpush1.msra.mxu0 0.0
  %1604 = vmatprep.subr.mxu0 0.0
  %1605 = vmatpush1.msra.mxu0 0.0
  %1606 = vmatprep.subr.mxu0 0.0
  %1607 = vmatpush1.msra.mxu0 0.0
  %1608 = vmatprep.subr.mxu0 0.0
  %1609 = vmatpush1.msra.mxu0 0.0
  %1610 = vmatprep.subr.mxu0 0.0
  %1611 = vmatpush1.msra.mxu0 0.0
  %1612 = vmatprep.subr.mxu0 0.0
  %1613 = vmatpush1.msra.mxu0 0.0
  %1614 = vmatprep.subr.mxu0 0.0
  %1615 = vmatpush1.msra.mxu0 0.0
  %1616 = vmatprep.subr.mxu0 0.0
  %1617 = vmatpush1.msra.mxu0 0.0
  %1618 = vmatprep.mubr.f32.mxu0 0.0
  %1619 = vmatmul.mubr.f32.gmra.mrb[0].mxu0 %v1552
  %v1620 = vpop.f32.mrb[0].mxu0
  %v1621 = vadd.f32 0.0, %v1620
  %v1622 = vpop.f32.mrb[0].mxu0
  %1623 = vdwg.mxu0
  %v1624 = vadd.f32 %v1546, %v1621
  %v1625 = vxor.u32 %v1624, 2147483648
  %v1626 = vmul.f32 %v1625, 1.442695
  %v1627 = vpow.pop %v1626
  %v1628 = vadd.f32 %v1627, 1.0
  %v1629 = vrcp.pop %v1628
  %v1630 = vmul.f32 1.0, %v1629
  %v1631 = vtanh.pop %v1624
  %v1632 = vmul.f32 %v1630, %v1372
  %1634 = vrot.lane.b32.xlu0 %v1631, 64
  %v1635 = vpop.permute.xlu0 %1634
  %v1637 = vmul.f32 %v1630, %v1635
  %1639 = vrot.lane.b32.xlu0 %v1637, 32
  %v1640 = vpop.permute.xlu0 %1639
  %v1642 = vadd.f32 %v1632, %v1640
  %v1643 = vtanh.pop %v1642
  %1645 = vrot.lane.b32.xlu0 %v1643, 64
  %v1646 = vpop.permute.xlu0 %1645
  %v1648 = vmul.f32 %v1630, %v1646
  %1650 = vrot.lane.b32.xlu0 %v1478, 32
  %v1651 = vpop.permute.xlu0 %1650
  %v1652 = vsel %vm199, %v1651, 0
  %1654 = vmatprep.subr.mxu0 0.0
  %1655 = vmatpush1.msra.mxu0 %v45
  %1656 = vmatprep.subr.mxu0 0.0
  %1657 = vmatpush1.msra.mxu0 %v46
  %1658 = vmatprep.subr.mxu0 0.0
  %1659 = vmatpush1.msra.mxu0 %v47
  %1660 = vmatprep.subr.mxu0 0.0
  %1661 = vmatpush1.msra.mxu0 %v48
  %1662 = vmatprep.subr.mxu0 0.0
  %1663 = vmatpush1.msra.mxu0 0.0
  %1664 = vmatprep.subr.mxu0 0.0
  %1665 = vmatpush1.msra.mxu0 0.0
  %1666 = vmatprep.subr.mxu0 0.0
  %1667 = vmatpush1.msra.mxu0 0.0
  %1668 = vmatprep.subr.mxu0 0.0
  %1669 = vmatpush1.msra.mxu0 0.0
  %1670 = vmatprep.subr.mxu0 0.0
  %1671 = vmatpush1.msra.mxu0 0.0
  %1672 = vmatprep.subr.mxu0 0.0
  %1673 = vmatpush1.msra.mxu0 0.0
  %1674 = vmatprep.subr.mxu0 0.0
  %1675 = vmatpush1.msra.mxu0 0.0
  %1676 = vmatprep.subr.mxu0 0.0
  %1677 = vmatpush1.msra.mxu0 0.0
  %1678 = vmatprep.subr.mxu0 0.0
  %1679 = vmatpush1.msra.mxu0 0.0
  %1680 = vmatprep.subr.mxu0 0.0
  %1681 = vmatpush1.msra.mxu0 0.0
  %1682 = vmatprep.subr.mxu0 0.0
  %1683 = vmatpush1.msra.mxu0 0.0
  %1684 = vmatprep.subr.mxu0 0.0
  %1685 = vmatpush1.msra.mxu0 0.0
  %1686 = vmatprep.subr.mxu0 0.0
  %1687 = vmatpush1.msra.mxu0 0.0
  %1688 = vmatprep.subr.mxu0 0.0
  %1689 = vmatpush1.msra.mxu0 0.0
  %1690 = vmatprep.subr.mxu0 0.0
  %1691 = vmatpush1.msra.mxu0 0.0
  %1692 = vmatprep.subr.mxu0 0.0
  %1693 = vmatpush1.msra.mxu0 0.0
  %1694 = vmatprep.subr.mxu0 0.0
  %1695 = vmatpush1.msra.mxu0 0.0
  %1696 = vmatprep.subr.mxu0 0.0
  %1697 = vmatpush1.msra.mxu0 0.0
  %1698 = vmatprep.subr.mxu0 0.0
  %1699 = vmatpush1.msra.mxu0 0.0
  %1700 = vmatprep.subr.mxu0 0.0
  %1701 = vmatpush1.msra.mxu0 0.0
  %1702 = vmatprep.subr.mxu0 0.0
  %1703 = vmatpush1.msra.mxu0 0.0
  %1704 = vmatprep.subr.mxu0 0.0
  %1705 = vmatpush1.msra.mxu0 0.0
  %1706 = vmatprep.subr.mxu0 0.0
  %1707 = vmatpush1.msra.mxu0 0.0
  %1708 = vmatprep.subr.mxu0 0.0
  %1709 = vmatpush1.msra.mxu0 0.0
  %1710 = vmatprep.subr.mxu0 0.0
  %1711 = vmatpush1.msra.mxu0 0.0
  %1712 = vmatprep.subr.mxu0 0.0
  %1713 = vmatpush1.msra.mxu0 0.0
  %1714 = vmatprep.subr.mxu0 0.0
  %1715 = vmatpush1.msra.mxu0 0.0
  %1716 = vmatprep.subr.mxu0 0.0
  %1717 = vmatpush1.msra.mxu0 0.0
  %1718 = vmatprep.mubr.f32.mxu0 0.0
  %1719 = vmatmul.mubr.f32.gmra.mrb[0].mxu0 %v1652
  %v1720 = vpop.f32.mrb[0].mxu0
  %v1721 = vadd.f32 0.0, %v1720
  %v1722 = vpop.f32.mrb[0].mxu0
  %1723 = vdwg.mxu0
  %v1724 = vadd.f32 %v191, %v1721
  %v1725 = vxor.u32 %v1724, 2147483648
  %v1726 = vmul.f32 %v1725, 1.442695
  %v1727 = vpow.pop %v1726
  %v1728 = vadd.f32 %v1727, 1.0
  %v1729 = vrcp.pop %v1728
  %v1730 = vmul.f32 1.0, %v1729
  %v1731 = vtanh.pop %v1724
  %v1732 = vmul.f32 %v1730, %v1472
  %1734 = vrot.lane.b32.xlu0 %v1731, 64
  %v1735 = vpop.permute.xlu0 %1734
  %v1737 = vmul.f32 %v1730, %v1735
  %1739 = vrot.lane.b32.xlu0 %v1737, 32
  %v1740 = vpop.permute.xlu0 %1739
  %v1742 = vadd.f32 %v1732, %v1740
  %v1743 = vtanh.pop %v1742
  %1745 = vrot.lane.b32.xlu0 %v1743, 64
  %v1746 = vpop.permute.xlu0 %1745
  %v1748 = vmul.f32 %v1730, %v1746
  %1749 = vmatprep.subr.mxu0 0.0
  %1750 = vmatpush1.msra.mxu0 %v41
  %1751 = vmatprep.subr.mxu0 0.0
  %1752 = vmatpush1.msra.mxu0 %v42
  %1753 = vmatprep.subr.mxu0 0.0
  %1754 = vmatpush1.msra.mxu0 %v43
  %1755 = vmatprep.subr.mxu0 0.0
  %1756 = vmatpush1.msra.mxu0 %v44
  %1757 = vmatprep.subr.mxu0 0.0
  %1758 = vmatpush1.msra.mxu0 0.0
  %1759 = vmatprep.subr.mxu0 0.0
  %1760 = vmatpush1.msra.mxu0 0.0
  %1761 = vmatprep.subr.mxu0 0.0
  %1762 = vmatpush1.msra.mxu0 0.0
  %1763 = vmatprep.subr.mxu0 0.0
  %1764 = vmatpush1.msra.mxu0 0.0
  %1765 = vmatprep.subr.mxu0 0.0
  %1766 = vmatpush1.msra.mxu0 0.0
  %1767 = vmatprep.subr.mxu0 0.0
  %1768 = vmatpush1.msra.mxu0 0.0
  %1769 = vmatprep.subr.mxu0 0.0
  %1770 = vmatpush1.msra.mxu0 0.0
  %1771 = vmatprep.subr.mxu0 0.0
  %1772 = vmatpush1.msra.mxu0 0.0
  %1773 = vmatprep.subr.mxu0 0.0
  %1774 = vmatpush1.msra.mxu0 0.0
  %1775 = vmatprep.subr.mxu0 0.0
  %1776 = vmatpush1.msra.mxu0 0.0
  %1777 = vmatprep.subr.mxu0 0.0
  %1778 = vmatpush1.msra.mxu0 0.0
  %1779 = vmatprep.subr.mxu0 0.0
  %1780 = vmatpush1.msra.mxu0 0.0
  %1781 = vmatprep.subr.mxu0 0.0
  %1782 = vmatpush1.msra.mxu0 0.0
  %1783 = vmatprep.subr.mxu0 0.0
  %1784 = vmatpush1.msra.mxu0 0.0
  %1785 = vmatprep.subr.mxu0 0.0
  %1786 = vmatpush1.msra.mxu0 0.0
  %1787 = vmatprep.subr.mxu0 0.0
  %1788 = vmatpush1.msra.mxu0 0.0
  %1789 = vmatprep.subr.mxu0 0.0
  %1790 = vmatpush1.msra.mxu0 0.0
  %1791 = vmatprep.subr.mxu0 0.0
  %1792 = vmatpush1.msra.mxu0 0.0
  %1793 = vmatprep.subr.mxu0 0.0
  %1794 = vmatpush1.msra.mxu0 0.0
  %1795 = vmatprep.subr.mxu0 0.0
  %1796 = vmatpush1.msra.mxu0 0.0
  %1797 = vmatprep.subr.mxu0 0.0
  %1798 = vmatpush1.msra.mxu0 0.0
  %1799 = vmatprep.subr.mxu0 0.0
  %1800 = vmatpush1.msra.mxu0 0.0
  %1801 = vmatprep.subr.mxu0 0.0
  %1802 = vmatpush1.msra.mxu0 0.0
  %1803 = vmatprep.subr.mxu0 0.0
  %1804 = vmatpush1.msra.mxu0 0.0
  %1805 = vmatprep.subr.mxu0 0.0
  %1806 = vmatpush1.msra.mxu0 0.0
  %1807 = vmatprep.subr.mxu0 0.0
  %1808 = vmatpush1.msra.mxu0 0.0
  %1809 = vmatprep.subr.mxu0 0.0
  %1810 = vmatpush1.msra.mxu0 0.0
  %1811 = vmatprep.subr.mxu0 0.0
  %1812 = vmatpush1.msra.mxu0 0.0
  %1813 = vmatprep.mubr.f32.mxu0 0.0
  %1814 = vmatmul.mubr.f32.gmra.mrb[0].mxu0 %v1652
  %v1815 = vpop.f32.mrb[0].mxu0
  %v1816 = vadd.f32 %v402, %v1815
  %v1817 = vpop.f32.mrb[0].mxu0
  %1818 = vdwg.mxu0
  %1820 = vrot.lane.b32.xlu0 %v1648, 32
  %v1821 = vpop.permute.xlu0 %1820
  %v1822 = vsel %vm199, %v1821, 0
  %1824 = vmatprep.subr.mxu0 0.0
  %1825 = vmatpush1.msra.mxu0 %v49
  %1826 = vmatprep.subr.mxu0 0.0
  %1827 = vmatpush1.msra.mxu0 %v50
  %1828 = vmatprep.subr.mxu0 0.0
  %1829 = vmatpush1.msra.mxu0 %v51
  %1830 = vmatprep.subr.mxu0 0.0
  %1831 = vmatpush1.msra.mxu0 %v52
  %1832 = vmatprep.subr.mxu0 0.0
  %1833 = vmatpush1.msra.mxu0 0.0
  %1834 = vmatprep.subr.mxu0 0.0
  %1835 = vmatpush1.msra.mxu0 0.0
  %1836 = vmatprep.subr.mxu0 0.0
  %1837 = vmatpush1.msra.mxu0 0.0
  %1838 = vmatprep.subr.mxu0 0.0
  %1839 = vmatpush1.msra.mxu0 0.0
  %1840 = vmatprep.subr.mxu0 0.0
  %1841 = vmatpush1.msra.mxu0 0.0
  %1842 = vmatprep.subr.mxu0 0.0
  %1843 = vmatpush1.msra.mxu0 0.0
  %1844 = vmatprep.subr.mxu0 0.0
  %1845 = vmatpush1.msra.mxu0 0.0
  %1846 = vmatprep.subr.mxu0 0.0
  %1847 = vmatpush1.msra.mxu0 0.0
  %1848 = vmatprep.subr.mxu0 0.0
  %1849 = vmatpush1.msra.mxu0 0.0
  %1850 = vmatprep.subr.mxu0 0.0
  %1851 = vmatpush1.msra.mxu0 0.0
  %1852 = vmatprep.subr.mxu0 0.0
  %1853 = vmatpush1.msra.mxu0 0.0
  %1854 = vmatprep.subr.mxu0 0.0
  %1855 = vmatpush1.msra.mxu0 0.0
  %1856 = vmatprep.subr.mxu0 0.0
  %1857 = vmatpush1.msra.mxu0 0.0
  %1858 = vmatprep.subr.mxu0 0.0
  %1859 = vmatpush1.msra.mxu0 0.0
  %1860 = vmatprep.subr.mxu0 0.0
  %1861 = vmatpush1.msra.mxu0 0.0
  %1862 = vmatprep.subr.mxu0 0.0
  %1863 = vmatpush1.msra.mxu0 0.0
  %1864 = vmatprep.subr.mxu0 0.0
  %1865 = vmatpush1.msra.mxu0 0.0
  %1866 = vmatprep.subr.mxu0 0.0
  %1867 = vmatpush1.msra.mxu0 0.0
  %1868 = vmatprep.subr.mxu0 0.0
  %1869 = vmatpush1.msra.mxu0 0.0
  %1870 = vmatprep.subr.mxu0 0.0
  %1871 = vmatpush1.msra.mxu0 0.0
  %1872 = vmatprep.subr.mxu0 0.0
  %1873 = vmatpush1.msra.mxu0 0.0
  %1874 = vmatprep.subr.mxu0 0.0
  %1875 = vmatpush1.msra.mxu0 0.0
  %1876 = vmatprep.subr.mxu0 0.0
  %1877 = vmatpush1.msra.mxu0 0.0
  %1878 = vmatprep.subr.mxu0 0.0
  %1879 = vmatpush1.msra.mxu0 0.0
  %1880 = vmatprep.subr.mxu0 0.0
  %1881 = vmatpush1.msra.mxu0 0.0
  %1882 = vmatprep.subr.mxu0 0.0
  %1883 = vmatpush1.msra.mxu0 0.0
  %1884 = vmatprep.subr.mxu0 0.0
  %1885 = vmatpush1.msra.mxu0 0.0
  %1886 = vmatprep.subr.mxu0 0.0
  %1887 = vmatpush1.msra.mxu0 0.0
  %1888 = vmatprep.mubr.f32.mxu0 0.0
  %1889 = vmatmul.mubr.f32.gmra.mrb[0].mxu0 %v1822
  %v1890 = vpop.f32.mrb[0].mxu0
  %v1891 = vadd.f32 0.0, %v1890
  %v1892 = vpop.f32.mrb[0].mxu0
  %1893 = vdwg.mxu0
  %v1894 = vadd.f32 %v1816, %v1891
  %v1895 = vxor.u32 %v1894, 2147483648
  %v1896 = vmul.f32 %v1895, 1.442695
  %v1897 = vpow.pop %v1896
  %v1898 = vadd.f32 %v1897, 1.0
  %v1899 = vrcp.pop %v1898
  %v1900 = vmul.f32 1.0, %v1899
  %v1901 = vtanh.pop %v1894
  %v1902 = vmul.f32 %v1900, %v1642
  %1904 = vrot.lane.b32.xlu0 %v1901, 64
  %v1905 = vpop.permute.xlu0 %1904
  %v1907 = vmul.f32 %v1900, %v1905
  %1909 = vrot.lane.b32.xlu0 %v1907, 32
  %v1910 = vpop.permute.xlu0 %1909
  %v1912 = vadd.f32 %v1902, %v1910
  %v1913 = vtanh.pop %v1912
  %1915 = vrot.lane.b32.xlu0 %v1913, 64
  %v1916 = vpop.permute.xlu0 %1915
  %v1918 = vmul.f32 %v1900, %v1916
  %1920 = vrot.lane.b32.xlu0 %v1748, 32
  %v1921 = vpop.permute.xlu0 %1920
  %v1922 = vsel %vm199, %v1921, 0
  %1924 = vmatprep.subr.mxu0 0.0
  %1925 = vmatpush1.msra.mxu0 %v45
  %1926 = vmatprep.subr.mxu0 0.0
  %1927 = vmatpush1.msra.mxu0 %v46
  %1928 = vmatprep.subr.mxu0 0.0
  %1929 = vmatpush1.msra.mxu0 %v47
  %1930 = vmatprep.subr.mxu0 0.0
  %1931 = vmatpush1.msra.mxu0 %v48
  %1932 = vmatprep.subr.mxu0 0.0
  %1933 = vmatpush1.msra.mxu0 0.0
  %1934 = vmatprep.subr.mxu0 0.0
  %1935 = vmatpush1.msra.mxu0 0.0
  %1936 = vmatprep.subr.mxu0 0.0
  %1937 = vmatpush1.msra.mxu0 0.0
  %1938 = vmatprep.subr.mxu0 0.0
  %1939 = vmatpush1.msra.mxu0 0.0
  %1940 = vmatprep.subr.mxu0 0.0
  %1941 = vmatpush1.msra.mxu0 0.0
  %1942 = vmatprep.subr.mxu0 0.0
  %1943 = vmatpush1.msra.mxu0 0.0
  %1944 = vmatprep.subr.mxu0 0.0
  %1945 = vmatpush1.msra.mxu0 0.0
  %1946 = vmatprep.subr.mxu0 0.0
  %1947 = vmatpush1.msra.mxu0 0.0
  %1948 = vmatprep.subr.mxu0 0.0
  %1949 = vmatpush1.msra.mxu0 0.0
  %1950 = vmatprep.subr.mxu0 0.0
  %1951 = vmatpush1.msra.mxu0 0.0
  %1952 = vmatprep.subr.mxu0 0.0
  %1953 = vmatpush1.msra.mxu0 0.0
  %1954 = vmatprep.subr.mxu0 0.0
  %1955 = vmatpush1.msra.mxu0 0.0
  %1956 = vmatprep.subr.mxu0 0.0
  %1957 = vmatpush1.msra.mxu0 0.0
  %1958 = vmatprep.subr.mxu0 0.0
  %1959 = vmatpush1.msra.mxu0 0.0
  %1960 = vmatprep.subr.mxu0 0.0
  %1961 = vmatpush1.msra.mxu0 0.0
  %1962 = vmatprep.subr.mxu0 0.0
  %1963 = vmatpush1.msra.mxu0 0.0
  %1964 = vmatprep.subr.mxu0 0.0
  %1965 = vmatpush1.msra.mxu0 0.0
  %1966 = vmatprep.subr.mxu0 0.0
  %1967 = vmatpush1.msra.mxu0 0.0
  %1968 = vmatprep.subr.mxu0 0.0
  %1969 = vmatpush1.msra.mxu0 0.0
  %1970 = vmatprep.subr.mxu0 0.0
  %1971 = vmatpush1.msra.mxu0 0.0
  %1972 = vmatprep.subr.mxu0 0.0
  %1973 = vmatpush1.msra.mxu0 0.0
  %1974 = vmatprep.subr.mxu0 0.0
  %1975 = vmatpush1.msra.mxu0 0.0
  %1976 = vmatprep.subr.mxu0 0.0
  %1977 = vmatpush1.msra.mxu0 0.0
  %1978 = vmatprep.subr.mxu0 0.0
  %1979 = vmatpush1.msra.mxu0 0.0
  %1980 = vmatprep.subr.mxu0 0.0
  %1981 = vmatpush1.msra.mxu0 0.0
  %1982 = vmatprep.subr.mxu0 0.0
  %1983 = vmatpush1.msra.mxu0 0.0
  %1984 = vmatprep.subr.mxu0 0.0
  %1985 = vmatpush1.msra.mxu0 0.0
  %1986 = vmatprep.subr.mxu0 0.0
  %1987 = vmatpush1.msra.mxu0 0.0
  %1988 = vmatprep.mubr.f32.mxu0 0.0
  %1989 = vmatmul.mubr.f32.gmra.mrb[0].mxu0 %v1922
  %v1990 = vpop.f32.mrb[0].mxu0
  %v1991 = vadd.f32 0.0, %v1990
  %v1992 = vpop.f32.mrb[0].mxu0
  %1993 = vdwg.mxu0
  %v1994 = vadd.f32 %v196, %v1991
  %v1995 = vxor.u32 %v1994, 2147483648
  %v1996 = vmul.f32 %v1995, 1.442695
  %v1997 = vpow.pop %v1996
  %v1998 = vadd.f32 %v1997, 1.0
  %v1999 = vrcp.pop %v1998
  %v2000 = vmul.f32 1.0, %v1999
  %v2001 = vtanh.pop %v1994
  %v2002 = vmul.f32 %v2000, %v1742
  %2004 = vrot.lane.b32.xlu0 %v2001, 64
  %v2005 = vpop.permute.xlu0 %2004
  %v2007 = vmul.f32 %v2000, %v2005
  %2009 = vrot.lane.b32.xlu0 %v2007, 32
  %v2010 = vpop.permute.xlu0 %2009
  %v2012 = vadd.f32 %v2002, %v2010
  %v2013 = vtanh.pop %v2012
  %2015 = vrot.lane.b32.xlu0 %v2013, 64
  %v2016 = vpop.permute.xlu0 %2015
  %v2018 = vmul.f32 %v2000, %v2016
  %2019 = vmatprep.subr.mxu0 0.0
  %2020 = vmatpush1.msra.mxu0 %v41
  %2021 = vmatprep.subr.mxu0 0.0
  %2022 = vmatpush1.msra.mxu0 %v42
  %2023 = vmatprep.subr.mxu0 0.0
  %2024 = vmatpush1.msra.mxu0 %v43
  %2025 = vmatprep.subr.mxu0 0.0
  %2026 = vmatpush1.msra.mxu0 %v44
  %2027 = vmatprep.subr.mxu0 0.0
  %2028 = vmatpush1.msra.mxu0 0.0
  %2029 = vmatprep.subr.mxu0 0.0
  %2030 = vmatpush1.msra.mxu0 0.0
  %2031 = vmatprep.subr.mxu0 0.0
  %2032 = vmatpush1.msra.mxu0 0.0
  %2033 = vmatprep.subr.mxu0 0.0
  %2034 = vmatpush1.msra.mxu0 0.0
  %2035 = vmatprep.subr.mxu0 0.0
  %2036 = vmatpush1.msra.mxu0 0.0
  %2037 = vmatprep.subr.mxu0 0.0
  %2038 = vmatpush1.msra.mxu0 0.0
  %2039 = vmatprep.subr.mxu0 0.0
  %2040 = vmatpush1.msra.mxu0 0.0
  %2041 = vmatprep.subr.mxu0 0.0
  %2042 = vmatpush1.msra.mxu0 0.0
  %2043 = vmatprep.subr.mxu0 0.0
  %2044 = vmatpush1.msra.mxu0 0.0
  %2045 = vmatprep.subr.mxu0 0.0
  %2046 = vmatpush1.msra.mxu0 0.0
  %2047 = vmatprep.subr.mxu0 0.0
  %2048 = vmatpush1.msra.mxu0 0.0
  %2049 = vmatprep.subr.mxu0 0.0
  %2050 = vmatpush1.msra.mxu0 0.0
  %2051 = vmatprep.subr.mxu0 0.0
  %2052 = vmatpush1.msra.mxu0 0.0
  %2053 = vmatprep.subr.mxu0 0.0
  %2054 = vmatpush1.msra.mxu0 0.0
  %2055 = vmatprep.subr.mxu0 0.0
  %2056 = vmatpush1.msra.mxu0 0.0
  %2057 = vmatprep.subr.mxu0 0.0
  %2058 = vmatpush1.msra.mxu0 0.0
  %2059 = vmatprep.subr.mxu0 0.0
  %2060 = vmatpush1.msra.mxu0 0.0
  %2061 = vmatprep.subr.mxu0 0.0
  %2062 = vmatpush1.msra.mxu0 0.0
  %2063 = vmatprep.subr.mxu0 0.0
  %2064 = vmatpush1.msra.mxu0 0.0
  %2065 = vmatprep.subr.mxu0 0.0
  %2066 = vmatpush1.msra.mxu0 0.0
  %2067 = vmatprep.subr.mxu0 0.0
  %2068 = vmatpush1.msra.mxu0 0.0
  %2069 = vmatprep.subr.mxu0 0.0
  %2070 = vmatpush1.msra.mxu0 0.0
  %2071 = vmatprep.subr.mxu0 0.0
  %2072 = vmatpush1.msra.mxu0 0.0
  %2073 = vmatprep.subr.mxu0 0.0
  %2074 = vmatpush1.msra.mxu0 0.0
  %2075 = vmatprep.subr.mxu0 0.0
  %2076 = vmatpush1.msra.mxu0 0.0
  %2077 = vmatprep.subr.mxu0 0.0
  %2078 = vmatpush1.msra.mxu0 0.0
  %2079 = vmatprep.subr.mxu0 0.0
  %2080 = vmatpush1.msra.mxu0 0.0
  %2081 = vmatprep.subr.mxu0 0.0
  %2082 = vmatpush1.msra.mxu0 0.0
  %2083 = vmatprep.mubr.f32.mxu0 0.0
  %2084 = vmatmul.mubr.f32.gmra.mrb[0].mxu0 %v1922
  %v2085 = vpop.f32.mrb[0].mxu0
  %v2086 = vadd.f32 %v402, %v2085
  %v2087 = vpop.f32.mrb[0].mxu0
  %2088 = vdwg.mxu0
  %2090 = vrot.lane.b32.xlu0 %v1918, 32
  %v2091 = vpop.permute.xlu0 %2090
  %v2092 = vsel %vm199, %v2091, 0
  %2094 = vmatprep.subr.mxu0 0.0
  %2095 = vmatpush1.msra.mxu0 %v49
  %2096 = vmatprep.subr.mxu0 0.0
  %2097 = vmatpush1.msra.mxu0 %v50
  %2098 = vmatprep.subr.mxu0 0.0
  %2099 = vmatpush1.msra.mxu0 %v51
  %2100 = vmatprep.subr.mxu0 0.0
  %2101 = vmatpush1.msra.mxu0 %v52
  %2102 = vmatprep.subr.mxu0 0.0
  %2103 = vmatpush1.msra.mxu0 0.0
  %2104 = vmatprep.subr.mxu0 0.0
  %2105 = vmatpush1.msra.mxu0 0.0
  %2106 = vmatprep.subr.mxu0 0.0
  %2107 = vmatpush1.msra.mxu0 0.0
  %2108 = vmatprep.subr.mxu0 0.0
  %2109 = vmatpush1.msra.mxu0 0.0
  %2110 = vmatprep.subr.mxu0 0.0
  %2111 = vmatpush1.msra.mxu0 0.0
  %2112 = vmatprep.subr.mxu0 0.0
  %2113 = vmatpush1.msra.mxu0 0.0
  %2114 = vmatprep.subr.mxu0 0.0
  %2115 = vmatpush1.msra.mxu0 0.0
  %2116 = vmatprep.subr.mxu0 0.0
  %2117 = vmatpush1.msra.mxu0 0.0
  %2118 = vmatprep.subr.mxu0 0.0
  %2119 = vmatpush1.msra.mxu0 0.0
  %2120 = vmatprep.subr.mxu0 0.0
  %2121 = vmatpush1.msra.mxu0 0.0
  %2122 = vmatprep.subr.mxu0 0.0
  %2123 = vmatpush1.msra.mxu0 0.0
  %2124 = vmatprep.subr.mxu0 0.0
  %2125 = vmatpush1.msra.mxu0 0.0
  %2126 = vmatprep.subr.mxu0 0.0
  %2127 = vmatpush1.msra.mxu0 0.0
  %2128 = vmatprep.subr.mxu0 0.0
  %2129 = vmatpush1.msra.mxu0 0.0
  %2130 = vmatprep.subr.mxu0 0.0
  %2131 = vmatpush1.msra.mxu0 0.0
  %2132 = vmatprep.subr.mxu0 0.0
  %2133 = vmatpush1.msra.mxu0 0.0
  %2134 = vmatprep.subr.mxu0 0.0
  %2135 = vmatpush1.msra.mxu0 0.0
  %2136 = vmatprep.subr.mxu0 0.0
  %2137 = vmatpush1.msra.mxu0 0.0
  %2138 = vmatprep.subr.mxu0 0.0
  %2139 = vmatpush1.msra.mxu0 0.0
  %2140 = vmatprep.subr.mxu0 0.0
  %2141 = vmatpush1.msra.mxu0 0.0
  %2142 = vmatprep.subr.mxu0 0.0
  %2143 = vmatpush1.msra.mxu0 0.0
  %2144 = vmatprep.subr.mxu0 0.0
  %2145 = vmatpush1.msra.mxu0 0.0
  %2146 = vmatprep.subr.mxu0 0.0
  %2147 = vmatpush1.msra.mxu0 0.0
  %2148 = vmatprep.subr.mxu0 0.0
  %2149 = vmatpush1.msra.mxu0 0.0
  %2150 = vmatprep.subr.mxu0 0.0
  %2151 = vmatpush1.msra.mxu0 0.0
  %2152 = vmatprep.subr.mxu0 0.0
  %2153 = vmatpush1.msra.mxu0 0.0
  %2154 = vmatprep.subr.mxu0 0.0
  %2155 = vmatpush1.msra.mxu0 0.0
  %2156 = vmatprep.subr.mxu0 0.0
  %2157 = vmatpush1.msra.mxu0 0.0
  %2158 = vmatprep.mubr.f32.mxu0 0.0
  %2159 = vmatmul.mubr.f32.gmra.mrb[0].mxu0 %v2092
  %v2160 = vpop.f32.mrb[0].mxu0
  %v2161 = vadd.f32 0.0, %v2160
  %v2162 = vpop.f32.mrb[0].mxu0
  %2163 = vdwg.mxu0
  %v2164 = vadd.f32 %v2086, %v2161
  %v2165 = vxor.u32 %v2164, 2147483648
  %v2166 = vmul.f32 %v2165, 1.442695
  %v2167 = vpow.pop %v2166
  %v2168 = vadd.f32 %v2167, 1.0
  %v2169 = vrcp.pop %v2168
  %v2170 = vmul.f32 1.0, %v2169
  %v2171 = vtanh.pop %v2164
  %v2172 = vmul.f32 %v2170, %v1912
  %2174 = vrot.lane.b32.xlu0 %v2171, 64
  %v2175 = vpop.permute.xlu0 %2174
  %v2177 = vmul.f32 %v2170, %v2175
  %2179 = vrot.lane.b32.xlu0 %v2177, 32
  %v2180 = vpop.permute.xlu0 %2179
  %v2182 = vadd.f32 %v2172, %v2180
  %v2183 = vtanh.pop %v2182
  %2185 = vrot.lane.b32.xlu0 %v2183, 64
  %v2186 = vpop.permute.xlu0 %2185
  %v2188 = vmul.f32 %v2170, %v2186
  %2190 = vrot.lane.b32.xlu0 %v2018, 32
  %v2191 = vpop.permute.xlu0 %2190
  %v2192 = vsel %vm199, %v2191, 0
  %2194 = vmatprep.subr.mxu0 0.0
  %2195 = vmatpush1.msra.mxu0 %v41
  %2196 = vmatprep.subr.mxu0 0.0
  %2197 = vmatpush1.msra.mxu0 %v42
  %2198 = vmatprep.subr.mxu0 0.0
  %2199 = vmatpush1.msra.mxu0 %v43
  %2200 = vmatprep.subr.mxu0 0.0
  %2201 = vmatpush1.msra.mxu0 %v44
  %2202 = vmatprep.subr.mxu0 0.0
  %2203 = vmatpush1.msra.mxu0 0.0
  %2204 = vmatprep.subr.mxu0 0.0
  %2205 = vmatpush1.msra.mxu0 0.0
  %2206 = vmatprep.subr.mxu0 0.0
  %2207 = vmatpush1.msra.mxu0 0.0
  %2208 = vmatprep.subr.mxu0 0.0
  %2209 = vmatpush1.msra.mxu0 0.0
  %2210 = vmatprep.subr.mxu0 0.0
  %2211 = vmatpush1.msra.mxu0 0.0
  %2212 = vmatprep.subr.mxu0 0.0
  %2213 = vmatpush1.msra.mxu0 0.0
  %2214 = vmatprep.subr.mxu0 0.0
  %2215 = vmatpush1.msra.mxu0 0.0
  %2216 = vmatprep.subr.mxu0 0.0
  %2217 = vmatpush1.msra.mxu0 0.0
  %2218 = vmatprep.subr.mxu0 0.0
  %2219 = vmatpush1.msra.mxu0 0.0
  %2220 = vmatprep.subr.mxu0 0.0
  %2221 = vmatpush1.msra.mxu0 0.0
  %2222 = vmatprep.subr.mxu0 0.0
  %2223 = vmatpush1.msra.mxu0 0.0
  %2224 = vmatprep.subr.mxu0 0.0
  %2225 = vmatpush1.msra.mxu0 0.0
  %2226 = vmatprep.subr.mxu0 0.0
  %2227 = vmatpush1.msra.mxu0 0.0
  %2228 = vmatprep.subr.mxu0 0.0
  %2229 = vmatpush1.msra.mxu0 0.0
  %2230 = vmatprep.subr.mxu0 0.0
  %2231 = vmatpush1.msra.mxu0 0.0
  %2232 = vmatprep.subr.mxu0 0.0
  %2233 = vmatpush1.msra.mxu0 0.0
  %2234 = vmatprep.subr.mxu0 0.0
  %2235 = vmatpush1.msra.mxu0 0.0
  %2236 = vmatprep.subr.mxu0 0.0
  %2237 = vmatpush1.msra.mxu0 0.0
  %2238 = vmatprep.subr.mxu0 0.0
  %2239 = vmatpush1.msra.mxu0 0.0
  %2240 = vmatprep.subr.mxu0 0.0
  %2241 = vmatpush1.msra.mxu0 0.0
  %2242 = vmatprep.subr.mxu0 0.0
  %2243 = vmatpush1.msra.mxu0 0.0
  %2244 = vmatprep.subr.mxu0 0.0
  %2245 = vmatpush1.msra.mxu0 0.0
  %2246 = vmatprep.subr.mxu0 0.0
  %2247 = vmatpush1.msra.mxu0 0.0
  %2248 = vmatprep.subr.mxu0 0.0
  %2249 = vmatpush1.msra.mxu0 0.0
  %2250 = vmatprep.subr.mxu0 0.0
  %2251 = vmatpush1.msra.mxu0 0.0
  %2252 = vmatprep.subr.mxu0 0.0
  %2253 = vmatpush1.msra.mxu0 0.0
  %2254 = vmatprep.subr.mxu0 0.0
  %2255 = vmatpush1.msra.mxu0 0.0
  %2256 = vmatprep.subr.mxu0 0.0
  %2257 = vmatpush1.msra.mxu0 0.0
  %2258 = vmatprep.mubr.f32.mxu0 0.0
  %2259 = vmatmul.mubr.f32.gmra.mrb[0].mxu0 %v2192
  %v2260 = vpop.f32.mrb[0].mxu0
  %v2261 = vadd.f32 %v402, %v2260
  %v2262 = vpop.f32.mrb[0].mxu0
  %2263 = vdwg.mxu0
  %2265 = vrot.lane.b32.xlu0 %v2188, 32
  %v2266 = vpop.permute.xlu0 %2265
  %v2267 = vsel %vm199, %v2266, 0
  %2269 = vmatprep.subr.mxu0 0.0
  %2270 = vmatpush1.msra.mxu0 %v49
  %2271 = vmatprep.subr.mxu0 0.0
  %2272 = vmatpush1.msra.mxu0 %v50
  %2273 = vmatprep.subr.mxu0 0.0
  %2274 = vmatpush1.msra.mxu0 %v51
  %2275 = vmatprep.subr.mxu0 0.0
  %2276 = vmatpush1.msra.mxu0 %v52
  %2277 = vmatprep.subr.mxu0 0.0
  %2278 = vmatpush1.msra.mxu0 0.0
  %2279 = vmatprep.subr.mxu0 0.0
  %2280 = vmatpush1.msra.mxu0 0.0
  %2281 = vmatprep.subr.mxu0 0.0
  %2282 = vmatpush1.msra.mxu0 0.0
  %2283 = vmatprep.subr.mxu0 0.0
  %2284 = vmatpush1.msra.mxu0 0.0
  %2285 = vmatprep.subr.mxu0 0.0
  %2286 = vmatpush1.msra.mxu0 0.0
  %2287 = vmatprep.subr.mxu0 0.0
  %2288 = vmatpush1.msra.mxu0 0.0
  %2289 = vmatprep.subr.mxu0 0.0
  %2290 = vmatpush1.msra.mxu0 0.0
  %2291 = vmatprep.subr.mxu0 0.0
  %2292 = vmatpush1.msra.mxu0 0.0
  %2293 = vmatprep.subr.mxu0 0.0
  %2294 = vmatpush1.msra.mxu0 0.0
  %2295 = vmatprep.subr.mxu0 0.0
  %2296 = vmatpush1.msra.mxu0 0.0
  %2297 = vmatprep.subr.mxu0 0.0
  %2298 = vmatpush1.msra.mxu0 0.0
  %2299 = vmatprep.subr.mxu0 0.0
  %2300 = vmatpush1.msra.mxu0 0.0
  %2301 = vmatprep.subr.mxu0 0.0
  %2302 = vmatpush1.msra.mxu0 0.0
  %2303 = vmatprep.subr.mxu0 0.0
  %2304 = vmatpush1.msra.mxu0 0.0
  %2305 = vmatprep.subr.mxu0 0.0
  %2306 = vmatpush1.msra.mxu0 0.0
  %2307 = vmatprep.subr.mxu0 0.0
  %2308 = vmatpush1.msra.mxu0 0.0
  %2309 = vmatprep.subr.mxu0 0.0
  %2310 = vmatpush1.msra.mxu0 0.0
  %2311 = vmatprep.subr.mxu0 0.0
  %2312 = vmatpush1.msra.mxu0 0.0
  %2313 = vmatprep.subr.mxu0 0.0
  %2314 = vmatpush1.msra.mxu0 0.0
  %2315 = vmatprep.subr.mxu0 0.0
  %2316 = vmatpush1.msra.mxu0 0.0
  %2317 = vmatprep.subr.mxu0 0.0
  %2318 = vmatpush1.msra.mxu0 0.0
  %2319 = vmatprep.subr.mxu0 0.0
  %2320 = vmatpush1.msra.mxu0 0.0
  %2321 = vmatprep.subr.mxu0 0.0
  %2322 = vmatpush1.msra.mxu0 0.0
  %2323 = vmatprep.subr.mxu0 0.0
  %2324 = vmatpush1.msra.mxu0 0.0
  %2325 = vmatprep.subr.mxu0 0.0
  %2326 = vmatpush1.msra.mxu0 0.0
  %2327 = vmatprep.subr.mxu0 0.0
  %2328 = vmatpush1.msra.mxu0 0.0
  %2329 = vmatprep.subr.mxu0 0.0
  %2330 = vmatpush1.msra.mxu0 0.0
  %2331 = vmatprep.subr.mxu0 0.0
  %2332 = vmatpush1.msra.mxu0 0.0
  %2333 = vmatprep.mubr.f32.mxu0 0.0
  %2334 = vmatmul.mubr.f32.gmra.mrb[0].mxu0 %v2267
  %v2335 = vpop.f32.mrb[0].mxu0
  %v2336 = vadd.f32 0.0, %v2335
  %v2337 = vpop.f32.mrb[0].mxu0
  %2338 = vdwg.mxu0
  %v2339 = vadd.f32 %v2261, %v2336
  %v2340 = vxor.u32 %v2339, 2147483648
  %v2341 = vmul.f32 %v2340, 1.442695
  %v2342 = vpow.pop %v2341
  %v2343 = vadd.f32 %v2342, 1.0
  %v2344 = vrcp.pop %v2343
  %v2345 = vmul.f32 1.0, %v2344
  %v2346 = vtanh.pop %v2339
  %v2347 = vmul.f32 %v2345, %v2182
  %2349 = vrot.lane.b32.xlu0 %v2346, 64
  %v2350 = vpop.permute.xlu0 %2349
  %v2352 = vmul.f32 %v2345, %v2350
  %2354 = vrot.lane.b32.xlu0 %v2352, 32
  %v2355 = vpop.permute.xlu0 %2354
  %v2357 = vadd.f32 %v2347, %v2355
  %v2358 = vtanh.pop %v2357
  %2360 = vrot.lane.b32.xlu0 %v2358, 64
  %v2361 = vpop.permute.xlu0 %2360
  %v2363 = vmul.f32 %v2345, %v2361
  %2365 = vrot.lane.b32.xlu0 %v838, 64
  %v2366 = vpop.permute.xlu0 %2365
  %2368 = vrot.lane.b32.xlu0 %v1108, 96
  %v2369 = vpop.permute.xlu0 %2368
  %2372 = vrot.lane.b32.xlu0 %v1918, 64
  %v2373 = vpop.permute.xlu0 %2372
  %2375 = vrot.lane.b32.xlu0 %v2188, 96
  %v2376 = vpop.permute.xlu0 %2375
  %v2378 = vsel %vm199, %v741, %v2366
  %vm2379 = vcmask 523264
  %v2380 = vsel %vm2379, %v2378, %v2369
  %vm2381 = vcmask 785408
  %v2382 = vsel %vm2381, %v2380, %v1378
  %v2383 = vsel %vm199, %v1821, %v2373
  %v2384 = vsel %vm2379, %v2383, %v2376
  %v2385 = vsel %vm2381, %v2384, %v2363
  %v2386 = vld [vmem:[%s7] sm:$0xff]
  %v2387 = vld [vmem:[%s7 + $0x8] sm:$0xff]
  %v2388 = vld [vmem:[%s7 + $0x10] sm:$0xff]
  %v2389 = vld [vmem:[%s7 + $0x18] sm:$0xff]
  %v2390 = vld [vmem:[%s7 + $0x20] sm:$0xff]
  %v2391 = vld [vmem:[%s7 + $0x28] sm:$0xff]
  %v2392 = vld [vmem:[%s7 + $0x30] sm:$0xff]
  %v2393 = vld [vmem:[%s7 + $0x38] sm:$0xff]
  %v2394 = vld [vmem:[%s7 + $0x40] sm:$0xff]
  %v2395 = vld [vmem:[%s7 + $0x48] sm:$0xff]
  %v2396 = vld [vmem:[%s7 + $0x50] sm:$0xff]
  %v2397 = vld [vmem:[%s7 + $0x58] sm:$0xff]
  %v2398 = vld [vmem:[%s7 + $0x60] sm:$0xff]
  %v2399 = vld [vmem:[%s7 + $0x68] sm:$0xff]
  %v2400 = vld [vmem:[%s7 + $0x70] sm:$0xff]
  %v2401 = vld [vmem:[%s7 + $0x78] sm:$0xff]
  %v2402 = vld [vmem:[%s7 + $0x80] sm:$0xff]
  %v2403 = vld [vmem:[%s7 + $0x88] sm:$0xff]
  %v2404 = vld [vmem:[%s7 + $0x90] sm:$0xff]
  %v2405 = vld [vmem:[%s7 + $0x98] sm:$0xff]
  %v2406 = vld [vmem:[%s7 + $0xa0] sm:$0xff]
  %v2407 = vld [vmem:[%s7 + $0xa8] sm:$0xff]
  %v2408 = vld [vmem:[%s7 + $0xb0] sm:$0xff]
  %v2409 = vld [vmem:[%s7 + $0xb8] sm:$0xff]
  %v2410 = vld [vmem:[%s7 + $0xc0] sm:$0xff]
  %v2411 = vld [vmem:[%s7 + $0xc8] sm:$0xff]
  %v2412 = vld [vmem:[%s7 + $0xd0] sm:$0xff]
  %v2413 = vld [vmem:[%s7 + $0xd8] sm:$0xff]
  %v2414 = vld [vmem:[%s7 + $0xe0] sm:$0xff]
  %v2415 = vld [vmem:[%s7 + $0xe8] sm:$0xff]
  %v2416 = vld [vmem:[%s7 + $0xf0] sm:$0xff]
  %v2417 = vld [vmem:[%s7 + $0xf8] sm:$0xff]
  %s2418 = sld [smem:[#allocation2]]
  %v2419 = vstv %s2418
  %2420 = vmatprep.subr.mxu0 0.0
  %2421 = vmatpush1.msra.mxu0 %v2386
  %2422 = vmatprep.subr.mxu0 0.0
  %2423 = vmatpush1.msra.mxu0 %v2387
  %2424 = vmatprep.subr.mxu0 0.0
  %2425 = vmatpush1.msra.mxu0 %v2388
  %2426 = vmatprep.subr.mxu0 0.0
  %2427 = vmatpush1.msra.mxu0 %v2389
  %2428 = vmatprep.subr.mxu0 0.0
  %2429 = vmatpush1.msra.mxu0 %v2390
  %2430 = vmatprep.subr.mxu0 0.0
  %2431 = vmatpush1.msra.mxu0 %v2391
  %2432 = vmatprep.subr.mxu0 0.0
  %2433 = vmatpush1.msra.mxu0 %v2392
  %2434 = vmatprep.subr.mxu0 0.0
  %2435 = vmatpush1.msra.mxu0 %v2393
  %2436 = vmatprep.subr.mxu0 0.0
  %2437 = vmatpush1.msra.mxu0 %v2394
  %2438 = vmatprep.subr.mxu0 0.0
  %2439 = vmatpush1.msra.mxu0 %v2395
  %2440 = vmatprep.subr.mxu0 0.0
  %2441 = vmatpush1.msra.mxu0 %v2396
  %2442 = vmatprep.subr.mxu0 0.0
  %2443 = vmatpush1.msra.mxu0 %v2397
  %2444 = vmatprep.subr.mxu0 0.0
  %2445 = vmatpush1.msra.mxu0 %v2398
  %2446 = vmatprep.subr.mxu0 0.0
  %2447 = vmatpush1.msra.mxu0 %v2399
  %2448 = vmatprep.subr.mxu0 0.0
  %2449 = vmatpush1.msra.mxu0 %v2400
  %2450 = vmatprep.subr.mxu0 0.0
  %2451 = vmatpush1.msra.mxu0 %v2401
  %2452 = vmatprep.subr.mxu0 0.0
  %2453 = vmatpush1.msra.mxu0 %v2402
  %2454 = vmatprep.subr.mxu0 0.0
  %2455 = vmatpush1.msra.mxu0 %v2403
  %2456 = vmatprep.subr.mxu0 0.0
  %2457 = vmatpush1.msra.mxu0 %v2404
  %2458 = vmatprep.subr.mxu0 0.0
  %2459 = vmatpush1.msra.mxu0 %v2405
  %2460 = vmatprep.subr.mxu0 0.0
  %2461 = vmatpush1.msra.mxu0 %v2406
  %2462 = vmatprep.subr.mxu0 0.0
  %2463 = vmatpush1.msra.mxu0 %v2407
  %2464 = vmatprep.subr.mxu0 0.0
  %2465 = vmatpush1.msra.mxu0 %v2408
  %2466 = vmatprep.subr.mxu0 0.0
  %2467 = vmatpush1.msra.mxu0 %v2409
  %2468 = vmatprep.subr.mxu0 0.0
  %2469 = vmatpush1.msra.mxu0 %v2410
  %2470 = vmatprep.subr.mxu0 0.0
  %2471 = vmatpush1.msra.mxu0 %v2411
  %2472 = vmatprep.subr.mxu0 0.0
  %2473 = vmatpush1.msra.mxu0 %v2412
  %2474 = vmatprep.subr.mxu0 0.0
  %2475 = vmatpush1.msra.mxu0 %v2413
  %2476 = vmatprep.subr.mxu0 0.0
  %2477 = vmatpush1.msra.mxu0 %v2414
  %2478 = vmatprep.subr.mxu0 0.0
  %2479 = vmatpush1.msra.mxu0 %v2415
  %2480 = vmatprep.subr.mxu0 0.0
  %2481 = vmatpush1.msra.mxu0 %v2416
  %2482 = vmatprep.subr.mxu0 0.0
  %2483 = vmatpush1.msra.mxu0 %v2417
  %2484 = vmatprep.mubr.f32.mxu0 %v2385
  %2485 = vmatmul.mubr.f32.gmra.mrb[0].mxu0 %v2382
  %v2486 = vpop.f32.mrb[0].mxu0
  %v2487 = vadd.f32 %v2419, %v2486
  %v2488 = vpop.f32.mrb[0].mxu0
  %2489 = vdwg.mxu0
  %vm2490 = vcmask 64512
  %v2491 = vsel %vm2490, %v2487, -inf
  %2492 = vmax.xlane.f32.xlu0 %v2491
  %v2493 = vpop.xlane.xlu0 %2492
  %v2494 = vsub.f32 %v2487, %v2493
  %v2495 = vmul.f32 %v2494, 1.442695
  %v2496 = vpow.pop %v2495
  %v2497 = vsel %vm2490, %v2496, 0.0
  %2498 = vadd.xlane.f32.xlu0 %v2497
  %v2499 = vpop.xlane.xlu0 %2498
  %v2500 = vrcp.pop %v2499
  %v2501 = vmul.f32 %v2496, %v2500
  %2503 = vset.pattern.permute.xlu0 0
  %2504 = vperm.xlu0 %2503, %v2501
  %v2505 = vpop.permute.xlu0 %2504
  %v2507 = vmul.f32 %v568, %v2505
  %2508 = vset.pattern.permute.xlu0 1
  %2509 = vperm.xlu0 %2508, %v2501
  %v2510 = vpop.permute.xlu0 %2509
  %v2512 = vmul.f32 %v838, %v2510
  %2513 = vset.pattern.permute.xlu0 2
  %2514 = vperm.xlu0 %2513, %v2501
  %v2515 = vpop.permute.xlu0 %2514
  %v2517 = vmul.f32 %v1108, %v2515
  %2518 = vset.pattern.permute.xlu0 3
  %2519 = vperm.xlu0 %2518, %v2501
  %v2520 = vpop.permute.xlu0 %2519
  %v2522 = vmul.f32 %v1378, %v2520
  %2523 = vset.pattern.permute.xlu0 4
  %2524 = vperm.xlu0 %2523, %v2501
  %v2525 = vpop.permute.xlu0 %2524
  %v2527 = vmul.f32 %v1648, %v2525
  %2528 = vset.pattern.permute.xlu0 5
  %2529 = vperm.xlu0 %2528, %v2501
  %v2530 = vpop.permute.xlu0 %2529
  %v2532 = vmul.f32 %v1918, %v2530
  %2533 = vset.pattern.permute.xlu0 6
  %2534 = vperm.xlu0 %2533, %v2501
  %v2535 = vpop.permute.xlu0 %2534
  %v2537 = vmul.f32 %v2188, %v2535
  %2538 = vset.pattern.permute.xlu0 7
  %2539 = vperm.xlu0 %2538, %v2501
  %v2540 = vpop.permute.xlu0 %2539
  %v2542 = vmul.f32 %v2363, %v2540
  %v2543 = vadd.f32 %v2507, %v2512
  %v2544 = vadd.f32 %v2517, %v2522
  %v2545 = vadd.f32 %v2527, %v2532
  %v2546 = vadd.f32 %v2537, %v2542
  %v2547 = vadd.f32 %v2543, %v2544
  %v2548 = vadd.f32 %v2545, %v2546
  %v2549 = vadd.f32 %v2547, %v2548
  %v2550 = vld [vmem:[%s9] sm:$0xff]
  %v2551 = vld [vmem:[%s9 + $0x8] sm:$0xff]
  %v2552 = vld [vmem:[%s9 + $0x10] sm:$0xff]
  %v2553 = vld [vmem:[%s9 + $0x18] sm:$0xff]
  %v2554 = vld [vmem:[%s10] sm:$0x1]
  %v2556 = vlaneseq
  %v2557 = vshrl.u32 %v2556, 7
  %v2558 = vsub.s32 0, %v2557
  %v2559 = vrot.slane %v2554, %v2558
  %2562 = vrot.lane.b32.xlu0 %v2549, 32
  %v2563 = vpop.permute.xlu0 %2562
  %v2564 = vsel %vm199, %v2563, 0
  %2566 = vmatprep.subr.mxu0 0.0
  %2567 = vmatpush1.msra.mxu0 %v2550
  %2568 = vmatprep.subr.mxu0 0.0
  %2569 = vmatpush1.msra.mxu0 %v2551
  %2570 = vmatprep.subr.mxu0 0.0
  %2571 = vmatpush1.msra.mxu0 %v2552
  %2572 = vmatprep.subr.mxu0 0.0
  %2573 = vmatpush1.msra.mxu0 %v2553
  %2574 = vmatprep.subr.mxu0 0.0
  %2575 = vmatpush1.msra.mxu0 0.0
  %2576 = vmatprep.subr.mxu0 0.0
  %2577 = vmatpush1.msra.mxu0 0.0
  %2578 = vmatprep.subr.mxu0 0.0
  %2579 = vmatpush1.msra.mxu0 0.0
  %2580 = vmatprep.subr.mxu0 0.0
  %2581 = vmatpush1.msra.mxu0 0.0
  %2582 = vmatprep.subr.mxu0 0.0
  %2583 = vmatpush1.msra.mxu0 0.0
  %2584 = vmatprep.subr.mxu0 0.0
  %2585 = vmatpush1.msra.mxu0 0.0
  %2586 = vmatprep.subr.mxu0 0.0
  %2587 = vmatpush1.msra.mxu0 0.0
  %2588 = vmatprep.subr.mxu0 0.0
  %2589 = vmatpush1.msra.mxu0 0.0
  %2590 = vmatprep.subr.mxu0 0.0
  %2591 = vmatpush1.msra.mxu0 0.0
  %2592 = vmatprep.subr.mxu0 0.0
  %2593 = vmatpush1.msra.mxu0 0.0
  %2594 = vmatprep.subr.mxu0 0.0
  %2595 = vmatpush1.msra.mxu0 0.0
  %2596 = vmatprep.subr.mxu0 0.0
  %2597 = vmatpush1.msra.mxu0 0.0
  %2598 = vmatprep.subr.mxu0 0.0
  %2599 = vmatpush1.msra.mxu0 0.0
  %2600 = vmatprep.subr.mxu0 0.0
  %2601 = vmatpush1.msra.mxu0 0.0
  %2602 = vmatprep.subr.mxu0 0.0
  %2603 = vmatpush1.msra.mxu0 0.0
  %2604 = vmatprep.subr.mxu0 0.0
  %2605 = vmatpush1.msra.mxu0 0.0
  %2606 = vmatprep.subr.mxu0 0.0
  %2607 = vmatpush1.msra.mxu0 0.0
  %2608 = vmatprep.subr.mxu0 0.0
  %2609 = vmatpush1.msra.mxu0 0.0
  %2610 = vmatprep.subr.mxu0 0.0
  %2611 = vmatpush1.msra.mxu0 0.0
  %2612 = vmatprep.subr.mxu0 0.0
  %2613 = vmatpush1.msra.mxu0 0.0
  %2614 = vmatprep.subr.mxu0 0.0
  %2615 = vmatpush1.msra.mxu0 0.0
  %2616 = vmatprep.subr.mxu0 0.0
  %2617 = vmatpush1.msra.mxu0 0.0
  %2618 = vmatprep.subr.mxu0 0.0
  %2619 = vmatpush1.msra.mxu0 0.0
  %2620 = vmatprep.subr.mxu0 0.0
  %2621 = vmatpush1.msra.mxu0 0.0
  %2622 = vmatprep.subr.mxu0 0.0
  %2623 = vmatpush1.msra.mxu0 0.0
  %2624 = vmatprep.subr.mxu0 0.0
  %2625 = vmatpush1.msra.mxu0 0.0
  %2626 = vmatprep.subr.mxu0 0.0
  %2627 = vmatpush1.msra.mxu0 0.0
  %2628 = vmatprep.subr.mxu0 0.0
  %2629 = vmatpush1.msra.mxu0 0.0
  %2630 = vmatprep.mubr.f32.mxu0 0.0
  %2631 = vmatmul.mubr.f32.gmra.mrb[0].mxu0 %v2564
  %v2632 = vpop.f32.mrb[0].mxu0
  %v2633 = vadd.f32 %v2559, %v2632
  %v2634 = vpop.f32.mrb[0].mxu0
  %2635 = vdwg.mxu0
  %vm2636 = vcmask 31744
  %2637 = vst.msk [vmem:[%s11] sm:$0xff] %vm2636, %v2633
  // Predicated region
  $region46: #{lstm_attention_model.1} parent=0 // pred_check
    _
  $region47: #{lstm_attention_model.1} parent=0 // pred_check_branch
    %2639 = sbr.rel (0) target = $region49
  $region48: #{lstm_attention_model.1} parent=0 // pred_region
    _
  $region49: #{lstm_attention_model.1} parent=0 // pred_fallthru
    _
  // Predicated region
  $region50: #{lstm_attention_model.1} parent=0 // pred_check
    _
  $region51: #{lstm_attention_model.1} parent=0 // pred_check_branch
    %2641 = sbr.rel (0) target = $region53
  $region52: #{lstm_attention_model.1} parent=0 // pred_region
    _
  $region53: #{lstm_attention_model.1} parent=0 // pred_fallthru
    _

</llo_original>
